<compile_context>
chip_gen: v7x
topology: tpu7x:2x2x1
jax: 0.10.0
libtpu: 0.0.40
codegen_flags: <defaults>
</compile_context>

<pallas_src>
import functools

import jax
import jax.numpy as jnp
import numpy as np
from jax.experimental import pallas as pl
from jax.experimental.pallas import tpu as pltpu

NEG_INF = -1e9


# ----------------------------------------------------------------------------
# Pallas kernel: one grid step == (one batch image, TBW windows).
# ----------------------------------------------------------------------------
def _window_attn_kernel(x_ref, wqkv_ref, bqkv_ref, rb_ref, mask_ref,
                        wproj_ref, bproj_ref, o_ref, *, num_heads):
    x = x_ref[0]                                   # (TBW, Np, C), compute dtype
    TBW, Np, C = x.shape
    M = TBW * Np
    hd = C // num_heads
    dt = x.dtype

    # ---- fused qkv projection over all TBW windows (full MXU width 3C) ----
    x2 = x.reshape(M, C)
    qkv = jnp.dot(x2, wqkv_ref[...], preferred_element_type=jnp.float32)
    qkv = qkv + bqkv_ref[...].astype(jnp.float32)  # (M, 3C), f32 accumulator

    # ---- head split: lanes -> batch, using only 2-D / last-two-dim transposes
    #   (M, 3C) -T-> (3C, M) -reshape-> (3nH, hd, M) -swap(-2,-1)-> (3nH, M, hd)
    qkv_t = qkv.T                                  # 2-D transpose (XLU)
    qkv_t = qkv_t.reshape(3 * num_heads, hd, M)    # sublane-aligned split
    qkv_t = jnp.swapaxes(qkv_t, 1, 2)              # batched last-two transpose
    qkv_t = qkv_t.reshape(3, num_heads * TBW, Np, hd)

    q = qkv_t[0].astype(dt)                        # scale folded into Wq / bq
    k = qkv_t[1].astype(dt)
    v = qkv_t[2].astype(dt)

    # ---- attention scores for all (head, window) pairs (flash-style einsum) --
    s = jnp.einsum("bnd,bmd->bnm", q, k,
                   preferred_element_type=jnp.float32)     # (nH*TBW, Np, Np)
    s = s.reshape(num_heads, TBW, Np, Np)
    s = s + rb_ref[...][:, None].astype(jnp.float32)       # rel-pos bias (nH,1,Np,Np)
    s = s + mask_ref[...][None].astype(jnp.float32)        # window mask  (1,Wm,Np,Np)
    s = s.reshape(num_heads * TBW, Np, Np)

    # ---- softmax over keys (f32); padded key columns carry -1e9 via the bias --
    s = s - jnp.max(s, axis=-1, keepdims=True)
    p = jnp.exp(s)
    p = p * pl.reciprocal(jnp.sum(p, axis=-1, keepdims=True), approx=True)

    ctx = jnp.einsum("bnm,bmd->bnd", p.astype(dt), v,
                     preferred_element_type=jnp.float32)   # (nH*TBW, Np, hd)
    ctx = ctx.astype(dt).reshape(num_heads, M, hd)

    # ---- head-batched output projection; heads merged by summation ----------
    out = jnp.einsum("hmd,hdc->hmc", ctx, wproj_ref[...],
                     preferred_element_type=jnp.float32)   # (nH, M, C)
    out = jnp.sum(out, axis=0) + bproj_ref[...].astype(jnp.float32)
    o_ref[0] = out.reshape(TBW, Np, C).astype(o_ref.dtype)


# ----------------------------------------------------------------------------
# Helpers
# ----------------------------------------------------------------------------
def _vmem_capacity_bytes():
    """Best-effort VMEM capacity query; conservative (v7x-sized) fallback."""
    try:
        info = pltpu.get_tpu_info()
        for name in ("vmem_capacity_bytes", "vmem_bytes", "vmem_size_bytes"):
            v = getattr(info, name, None)
            if v:
                return int(v)
    except Exception:
        pass
    return 64 * 1024 * 1024


def _choose_tbw(g0, g1, num_heads, Np, C, cdt_size):
    """Windows per grid step: VMEM-budgeted, MXU-row targeted, megacore aware."""
    vmem_cap = _vmem_capacity_bytes()
    budget = max(8 << 20, min(int(vmem_cap * 0.35), 48 << 20))
    # window-count independent VMEM (weights / biases / rel-bias, double buffered)
    fixed = 2 * cdt_size * (3 * C * C + C * C + 4 * C + num_heads * Np * Np)
    avail = max(budget - fixed, 1 << 20)
    # per-window footprint (f32 in-kernel intermediates dominate)
    per_window = (
        4 * Np * 3 * C * 3                 # qkv accumulator + head-split copies
        + 4 * num_heads * Np * Np * 3      # scores / exp / probabilities
        + 4 * num_heads * Np * C           # per-head output partial products
        + 4 * Np * C * 2                   # ctx + projected output
        + 2 * 2 * cdt_size * Np * C        # double-buffered x / out blocks
        + 2 * cdt_size * Np * Np)          # streamed mask block
    cap = max(1, avail // per_window)
    # MXU-friendly target: >= ~256 projection rows per grid step.
    tbw = int(min(max((256 + Np - 1) // Np, 1), cap, g1))
    # keep >= 4 grid steps so the "parallel" axes have work to shard per core
    while tbw > 1 and g0 * (-(-g1 // tbw)) < 4:
        tbw -= 1
    # prefer a nearby TBW with less window padding (exact divisor if possible)
    best, best_pad = tbw, (-(-g1 // tbw)) * tbw - g1
    for t in range(tbw - 1, max(1, tbw // 2) - 1, -1):
        pad = (-(-g1 // t)) * t - g1
        if pad < best_pad:
            best, best_pad = t, pad
            if pad == 0:
                break
    return best


# ----------------------------------------------------------------------------
# Wrapper
# ----------------------------------------------------------------------------
def window_attention(x, params, window_size, num_heads, mask=None, qk_scale=None):
    """x: (B_, N, C); mask: (nW, N, N) or None. Returns ((B_, N, C), rel_bias)."""
    B_, N, C = x.shape
    Wh, Ww = window_size
    assert N == Wh * Ww
    hd = C // num_heads
    scale = qk_scale if qk_scale is not None else hd ** (-0.5)
    cdt = x.dtype
    Np = ((N + 7) // 8) * 8               # pad token axis to a sublane multiple

    # ---- relative position bias (glue: gather from table, done once) ----
    coords = np.stack(np.meshgrid(np.arange(Wh), np.arange(Ww), indexing="ij"))
    coords_flat = coords.reshape(2, -1)                              # (2, N)
    rel = coords_flat[:, :, None] - coords_flat[:, None, :]          # (2, N, N)
    rel = rel.transpose(1, 2, 0).astype(np.int32)                    # (N, N, 2)
    rel[:, :, 0] += Wh - 1
    rel[:, :, 1] += Ww - 1
    rel[:, :, 0] *= 2 * Ww - 1
    rel_index = rel.sum(-1)                                          # (N, N)

    table = params["rel_pos_bias_table"].astype(jnp.float32)         # ((2Wh-1)(2Ww-1), nH)
    rel_bias = table[rel_index.reshape(-1)].reshape(N, N, num_heads)
    rel_bias = jnp.transpose(rel_bias, (2, 0, 1))                    # (nH, N, N) f32

    # pad: query rows -> 0, key columns -> -1e9 (masked out of the softmax)
    rb = jnp.pad(rel_bias, ((0, 0), (0, Np - N), (0, 0)))
    rb = jnp.pad(rb, ((0, 0), (0, 0), (0, Np - N)), constant_values=NEG_INF)
    rb = rb.astype(cdt)

    # ---- fold 1/sqrt(hd) into the q columns of the qkv projection -----------
    col_scale = jnp.concatenate(
        [jnp.full((C,), scale, jnp.float32), jnp.ones((2 * C,), jnp.float32)])
    w_qkv = (params["w_qkv"].astype(jnp.float32) * col_scale[None, :]).astype(cdt)
    b_qkv = (params["b_qkv"].astype(jnp.float32) * col_scale
             ).reshape(1, 3 * C).astype(cdt)
    w_proj = params["w_proj"].astype(cdt).reshape(num_heads, hd, C)  # per-head
    b_proj = params["b_proj"].reshape(1, C).astype(cdt)

    if mask is None:
        G0, G1 = 1, B_
    else:
        nW = mask.shape[0]
        assert B_ % nW == 0
        G0, G1 = B_ // nW, nW

    TBW = _choose_tbw(G0, G1, num_heads, Np, C, cdt.itemsize)
    G1p = (-(-G1 // TBW)) * TBW           # pad window axis so TBW always works

    if mask is None:
        mask_p = jnp.zeros((1, Np, Np), cdt)
        Wm = 1
        mask_map = lambda b, w: (0, 0, 0)
    else:
        mask_p = jnp.pad(mask.astype(jnp.float32),
                         ((0, G1p - G1), (0, Np - N), (0, Np - N))).astype(cdt)
        Wm = TBW
        mask_map = lambda b, w: (w, 0, 0)

    xp = jnp.pad(x, ((0, 0), (0, Np - N), (0, 0))).reshape(G0, G1, Np, C)
    if G1p != G1:
        xp = jnp.pad(xp, ((0, 0), (0, G1p - G1), (0, 0), (0, 0)))

    kernel = functools.partial(_window_attn_kernel, num_heads=num_heads)

    vmem_cap = _vmem_capacity_bytes()
    vmem_limit = max(32 * 1024 * 1024,
                     min(int(vmem_cap * 3 // 4), 96 * 1024 * 1024))

    out_p = pl.pallas_call(
        kernel,
        out_shape=jax.ShapeDtypeStruct((G0, G1p, Np, C), x.dtype),
        grid_spec=pltpu.PrefetchScalarGridSpec(
            num_scalar_prefetch=0,
            grid=(G0, G1p // TBW),
            in_specs=[
                pl.BlockSpec((1, TBW, Np, C), lambda b, w: (b, w, 0, 0)),    # x
                pl.BlockSpec((C, 3 * C), lambda b, w: (0, 0)),               # w_qkv (scale folded)
                pl.BlockSpec((1, 3 * C), lambda b, w: (0, 0)),               # b_qkv
                pl.BlockSpec((num_heads, Np, Np), lambda b, w: (0, 0, 0)),   # rel-pos bias
                pl.BlockSpec((Wm, Np, Np), mask_map),                        # window mask
                pl.BlockSpec((num_heads, hd, C), lambda b, w: (0, 0, 0)),    # w_proj (per head)
                pl.BlockSpec((1, C), lambda b, w: (0, 0)),                   # b_proj
            ],
            out_specs=pl.BlockSpec((1, TBW, Np, C), lambda b, w: (b, w, 0, 0)),
        ),
        compiler_params=pltpu.CompilerParams(
            dimension_semantics=("parallel", "parallel"),
            vmem_limit_bytes=vmem_limit),
    )(xp, w_qkv, b_qkv, rb, mask_p, w_proj, b_proj)

    out = out_p[:, :G1, :N, :].reshape(B_, N, C)
    return out, rel_bias  # rel_bias returned for the reference check


# ----------------------------------------------------------------------------
# Pure-JAX reference (mirrors the PyTorch forward), for verification.
# ----------------------------------------------------------------------------
def window_attention_ref(x, params, rel_bias, num_heads, mask=None):
    B_, N, C = x.shape
    hd = C // num_heads
    scale = hd ** (-0.5)
    qkv = x @ params["w_qkv"] + params["b_qkv"]               # (B_, N, 3C)
    qkv = qkv.reshape(B_, N, 3, num_heads, hd).transpose(2, 0, 3, 1, 4)
    q, k, v = qkv[0], qkv[1], qkv[2]                          # (B_, nH, N, hd)
    q = q * scale
    attn = jnp.einsum("bhnd,bhmd->bhnm", q, k)                # (B_, nH, N, N)
    attn = attn + rel_bias[None]
    if mask is not None:
        nW = mask.shape[0]
        attn = attn.reshape(B_ // nW, nW, num_heads, N, N) + mask[None, :, None]
        attn = attn.reshape(B_, num_heads, N, N)
    attn = jax.nn.softmax(attn, axis=-1)
    out = jnp.einsum("bhnm,bhmd->bhnd", attn, v)              # (B_, nH, N, hd)
    out = out.transpose(0, 2, 1, 3).reshape(B_, N, C)
    return out @ params["w_proj"] + params["b_proj"]


# ----------------------------------------------------------------------------
if __name__ == "__main__":
    # Small Swin-like configuration.
    dim = 32
    num_heads = 4
    window_size = (7, 7)
    Wh, Ww = window_size
    N = Wh * Ww
    batch, nW = 2, 4                 # e.g. 14x14 feature map with 7x7 windows
    B_ = batch * nW

    key = jax.random.PRNGKey(0)
    k_x, k_t, k_wq, k_bq, k_wp, k_bp, k_m = jax.random.split(key, 7)

    params = {
        # relative_position_bias_table: ((2Wh-1)*(2Ww-1), num_heads)
        "rel_pos_bias_table": 0.02 * jax.random.truncated_normal(
            k_t, -2.0, 2.0, ((2 * Wh - 1) * (2 * Ww - 1), num_heads), jnp.float32),
        # qkv Linear(dim, 3*dim) -- stored as (in, out) so kernel does x @ W + b
        "w_qkv": 0.1 * jax.random.normal(k_wq, (dim, 3 * dim), jnp.float32),
        "b_qkv": 0.1 * jax.random.normal(k_bq, (3 * dim,), jnp.float32),
        # proj Linear(dim, dim)
        "w_proj": 0.1 * jax.random.normal(k_wp, (dim, dim), jnp.float32),
        "b_proj": 0.1 * jax.random.normal(k_bp, (dim,), jnp.float32),
    }
    # TODO(synk): attn_drop / proj_drop are p=0.0 (inference) -> identity; omitted.

    x = jax.random.normal(k_x, (B_, N, dim), jnp.float32)
    # Shifted-window style 0 / -inf mask.
    mask = jnp.where(jax.random.bernoulli(k_m, 0.2, (nW, N, N)),
                     jnp.float32(-1e9), jnp.float32(0.0))

    # f32, masked (shifted-window) path
    out, rel_bias = window_attention(x, params, window_size, num_heads, mask=mask)
    out = jax.block_until_ready(out)
    ref = window_attention_ref(x, params, rel_bias, num_heads, mask=mask)
    np.testing.assert_allclose(np.asarray(out), np.asarray(ref),
                               rtol=2e-3, atol=2e-3)

    # f32, mask=None path
    out2, _ = window_attention(x, params, window_size, num_heads, mask=None)
    ref2 = window_attention_ref(x, params, rel_bias, num_heads, mask=None)
    np.testing.assert_allclose(np.asarray(jax.block_until_ready(out2)),
                               np.asarray(ref2), rtol=2e-3, atol=2e-3)

    # bf16 operand path (bf16 MXU inputs, f32 accumulation) -- smoke check with
    # a tolerance that covers bf16 operand rounding.
    def _rt(a):
        return a.astype(jnp.bfloat16).astype(jnp.float32)

    out_b, _ = window_attention(x.astype(jnp.bfloat16), params, window_size,
                                num_heads, mask=mask)
    out_b = jax.block_until_ready(out_b)
    params_rt = {kk: _rt(vv) for kk, vv in params.items()}
    ref_b = window_attention_ref(_rt(x), params_rt, _rt(rel_bias), num_heads,
                                 mask=mask)
    np.testing.assert_allclose(np.asarray(out_b.astype(jnp.float32)),
                               np.asarray(ref_b), rtol=1e-1, atol=1e-1)

    print("KERNEL_OK")
</pallas_src>

<mosaic_0001>
module attributes {stable_mosaic.version = 11 : i64} {
  func.func @_window_attn_kernel(%arg0: i32, %arg1: i32, %arg2: memref<1x2x56x32xf32, #tpu.memory_space<vmem>>, %arg3: memref<32x96xf32, #tpu.memory_space<vmem>>, %arg4: memref<1x96xf32, #tpu.memory_space<vmem>>, %arg5: memref<4x56x56xf32, #tpu.memory_space<vmem>>, %arg6: memref<2x56x56xf32, #tpu.memory_space<vmem>>, %arg7: memref<4x8x32xf32, #tpu.memory_space<vmem>>, %arg8: memref<1x32xf32, #tpu.memory_space<vmem>>, %arg9: memref<1x2x56x32xf32, #tpu.memory_space<vmem>>) attributes {dimension_semantics = [#tpu.dimension_semantics<parallel>, #tpu.dimension_semantics<parallel>], iteration_bounds = array<i64: 2, 2>, scalar_prefetch = 0 : i64, scratch_operands = 0 : i64, tpu.core_type = #tpu.core_type<tc>, window_params = [{transform_indices = @transform_0, window_bounds = array<i64: 1, 2, 56, 32>}, {pipeline_mode = #tpu.pipeline_mode<synchronous>, transform_indices = @transform_1, window_bounds = array<i64: 32, 96>}, {pipeline_mode = #tpu.pipeline_mode<synchronous>, transform_indices = @transform_2, window_bounds = array<i64: 1, 96>}, {pipeline_mode = #tpu.pipeline_mode<synchronous>, transform_indices = @transform_3, window_bounds = array<i64: 4, 56, 56>}, {transform_indices = @transform_4, window_bounds = array<i64: 2, 56, 56>}, {pipeline_mode = #tpu.pipeline_mode<synchronous>, transform_indices = @transform_5, window_bounds = array<i64: 4, 8, 32>}, {pipeline_mode = #tpu.pipeline_mode<synchronous>, transform_indices = @transform_6, window_bounds = array<i64: 1, 32>}, {transform_indices = @transform_7, window_bounds = array<i64: 1, 2, 56, 32>}]} {
    %c0 = arith.constant 0 : index
    %c0_0 = arith.constant 0 : index
    %c0_1 = arith.constant 0 : index
    %c0_2 = arith.constant 0 : index
    %0 = vector.load %arg2[%c0, %c0_0, %c0_1, %c0_2] : memref<1x2x56x32xf32, #tpu.memory_space<vmem>>, vector<1x2x56x32xf32>
    %1 = vector.shape_cast %0 : vector<1x2x56x32xf32> to vector<2x56x32xf32>
    %2 = vector.shape_cast %1 : vector<2x56x32xf32> to vector<112x32xf32>
    %c0_3 = arith.constant 0 : index
    %c0_4 = arith.constant 0 : index
    %3 = vector.load %arg3[%c0_3, %c0_4] : memref<32x96xf32, #tpu.memory_space<vmem>>, vector<32x96xf32>
    %cst = arith.constant dense<0.000000e+00> : vector<112x96xf32>
    %4 = tpu.matmul %2, %3, %cst {dimension_numbers = #tpu.dot_dimension_numbers<[1], [0], [0], [1], [0, 0, 1, 1], [], []>} : vector<112x32xf32>, vector<32x96xf32>, vector<112x96xf32> -> vector<112x96xf32>
    %c0_5 = arith.constant 0 : index
    %c0_6 = arith.constant 0 : index
    %5 = vector.load %arg4[%c0_5, %c0_6] : memref<1x96xf32, #tpu.memory_space<vmem>>, vector<1x96xf32>
    %6 = vector.broadcast %5 : vector<1x96xf32> to vector<112x96xf32>
    %7 = arith.addf %4, %6 : vector<112x96xf32>
    %8 = tpu.transpose %7, [1, 0] : vector<112x96xf32> -> vector<96x112xf32>
    %9 = vector.shape_cast %8 : vector<96x112xf32> to vector<12x8x112xf32>
    %10 = tpu.transpose %9, [0, 2, 1] : vector<12x8x112xf32> -> vector<12x112x8xf32>
    %11 = vector.shape_cast %10 : vector<12x112x8xf32> to vector<3x8x56x8xf32>
    %12 = vector.extract_strided_slice %11 {offsets = [0, 0, 0, 0], sizes = [1, 8, 56, 8], strides = [1, 1, 1, 1]} : vector<3x8x56x8xf32> to vector<1x8x56x8xf32>
    %13 = vector.shape_cast %12 : vector<1x8x56x8xf32> to vector<8x56x8xf32>
    %14 = vector.extract_strided_slice %11 {offsets = [1, 0, 0, 0], sizes = [1, 8, 56, 8], strides = [1, 1, 1, 1]} : vector<3x8x56x8xf32> to vector<1x8x56x8xf32>
    %15 = vector.shape_cast %14 : vector<1x8x56x8xf32> to vector<8x56x8xf32>
    %16 = vector.extract_strided_slice %11 {offsets = [2, 0, 0, 0], sizes = [1, 8, 56, 8], strides = [1, 1, 1, 1]} : vector<3x8x56x8xf32> to vector<1x8x56x8xf32>
    %17 = vector.shape_cast %16 : vector<1x8x56x8xf32> to vector<8x56x8xf32>
    "tpu.trace_start"() <{level = 10 : i32, message = "bnd,bmd->bnm"}> : () -> ()
    %cst_7 = arith.constant dense<0.000000e+00> : vector<8x56x56xf32>
    %18 = tpu.matmul %13, %15, %cst_7 {dimension_numbers = #tpu.dot_dimension_numbers<[2], [2], [1], [1], [0, 0, 0, 1, 1, 1], [0], [0]>} : vector<8x56x8xf32>, vector<8x56x8xf32>, vector<8x56x56xf32> -> vector<8x56x56xf32>
    "tpu.trace_stop"() : () -> ()
    %19 = vector.shape_cast %18 : vector<8x56x56xf32> to vector<4x2x56x56xf32>
    %c0_8 = arith.constant 0 : index
    %c0_9 = arith.constant 0 : index
    %c0_10 = arith.constant 0 : index
    %20 = vector.load %arg5[%c0_8, %c0_9, %c0_10] : memref<4x56x56xf32, #tpu.memory_space<vmem>>, vector<4x56x56xf32>
    %21 = vector.shape_cast %20 : vector<4x56x56xf32> to vector<4x1x56x56xf32>
    %22 = vector.broadcast %21 : vector<4x1x56x56xf32> to vector<4x2x56x56xf32>
    %23 = arith.addf %19, %22 : vector<4x2x56x56xf32>
    %c0_11 = arith.constant 0 : index
    %c0_12 = arith.constant 0 : index
    %c0_13 = arith.constant 0 : index
    %24 = vector.load %arg6[%c0_11, %c0_12, %c0_13] : memref<2x56x56xf32, #tpu.memory_space<vmem>>, vector<2x56x56xf32>
    %25 = vector.shape_cast %24 : vector<2x56x56xf32> to vector<1x2x56x56xf32>
    %26 = vector.broadcast %25 : vector<1x2x56x56xf32> to vector<4x2x56x56xf32>
    %27 = arith.addf %23, %26 : vector<4x2x56x56xf32>
    %28 = vector.shape_cast %27 : vector<4x2x56x56xf32> to vector<8x56x56xf32>
    %cst_14 = arith.constant dense<0xFF800000> : vector<8x56xf32>
    %29 = vector.multi_reduction <maximumf>, %28, %cst_14 [2] : vector<8x56x56xf32> to vector<8x56xf32>
    %30 = vector.shape_cast %29 : vector<8x56xf32> to vector<8x56x1xf32>
    %31 = vector.broadcast %30 : vector<8x56x1xf32> to vector<8x56x56xf32>
    %32 = arith.subf %28, %31 : vector<8x56x56xf32>
    %33 = math.exp %32 : vector<8x56x56xf32>
    %cst_15 = arith.constant dense<0.000000e+00> : vector<8x56xf32>
    %34 = vector.multi_reduction <add>, %33, %cst_15 [2] : vector<8x56x56xf32> to vector<8x56xf32>
    %35 = vector.shape_cast %34 : vector<8x56xf32> to vector<8x56x1xf32>
    %36 = tpu.reciprocal %35 {approx = true} : vector<8x56x1xf32> -> vector<8x56x1xf32>
    %37 = vector.broadcast %36 : vector<8x56x1xf32> to vector<8x56x56xf32>
    %38 = arith.mulf %33, %37 : vector<8x56x56xf32>
    "tpu.trace_start"() <{level = 10 : i32, message = "bnm,bmd->bnd"}> : () -> ()
    %cst_16 = arith.constant dense<0.000000e+00> : vector<8x56x8xf32>
    %39 = tpu.matmul %38, %17, %cst_16 {dimension_numbers = #tpu.dot_dimension_numbers<[2], [1], [1], [2], [0, 0, 0, 1, 1, 2], [0], [0]>} : vector<8x56x56xf32>, vector<8x56x8xf32>, vector<8x56x8xf32> -> vector<8x56x8xf32>
    "tpu.trace_stop"() : () -> ()
    %40 = vector.shape_cast %39 : vector<8x56x8xf32> to vector<4x112x8xf32>
    %c0_17 = arith.constant 0 : index
    %c0_18 = arith.constant 0 : index
    %c0_19 = arith.constant 0 : index
    %41 = vector.load %arg7[%c0_17, %c0_18, %c0_19] : memref<4x8x32xf32, #tpu.memory_space<vmem>>, vector<4x8x32xf32>
    "tpu.trace_start"() <{level = 10 : i32, message = "hmd,hdc->hmc"}> : () -> ()
    %cst_20 = arith.constant dense<0.000000e+00> : vector<4x112x32xf32>
    %42 = tpu.matmul %40, %41, %cst_20 {dimension_numbers = #tpu.dot_dimension_numbers<[2], [1], [1], [2], [0, 0, 0, 1, 1, 2], [0], [0]>} : vector<4x112x8xf32>, vector<4x8x32xf32>, vector<4x112x32xf32> -> vector<4x112x32xf32>
    "tpu.trace_stop"() : () -> ()
    %cst_21 = arith.constant dense<0.000000e+00> : vector<112x32xf32>
    %43 = vector.multi_reduction <add>, %42, %cst_21 [0] : vector<4x112x32xf32> to vector<112x32xf32>
    %c0_22 = arith.constant 0 : index
    %c0_23 = arith.constant 0 : index
    %44 = vector.load %arg8[%c0_22, %c0_23] : memref<1x32xf32, #tpu.memory_space<vmem>>, vector<1x32xf32>
    %45 = vector.broadcast %44 : vector<1x32xf32> to vector<112x32xf32>
    %46 = arith.addf %43, %45 : vector<112x32xf32>
    %47 = vector.shape_cast %46 : vector<112x32xf32> to vector<2x56x32xf32>
    %c0_24 = arith.constant 0 : index
    %c0_25 = arith.constant 0 : index
    %c0_26 = arith.constant 0 : index
    %c0_27 = arith.constant 0 : index
    %48 = vector.load %arg9[%c0_24, %c0_25, %c0_26, %c0_27] : memref<1x2x56x32xf32, #tpu.memory_space<vmem>>, vector<1x2x56x32xf32>
    %49 = vector.shape_cast %48 : vector<1x2x56x32xf32> to vector<2x56x32xf32>
    %50 = vector.shape_cast %47 : vector<2x56x32xf32> to vector<1x2x56x32xf32>
    tpu.vector_store %arg9[%c0_24, %c0_25, %c0_26, %c0_27], %50 {strides = array<i32>} : memref<1x2x56x32xf32, #tpu.memory_space<vmem>>, vector<1x2x56x32xf32>,
    return
  }
  func.func @transform_0(%arg0: i32, %arg1: i32) -> (i32, i32, i32, i32) {
    %c0_i32 = arith.constant 0 : i32
    %c0_i32_0 = arith.constant 0 : i32
    %c0_i32_1 = arith.constant 0 : i32
    return %arg0, %arg1, %c0_i32, %c0_i32_0 : i32, i32, i32, i32
  }
  func.func @transform_1(%arg0: i32, %arg1: i32) -> (i32, i32) {
    %c0_i32 = arith.constant 0 : i32
    %c0_i32_0 = arith.constant 0 : i32
    %c0_i32_1 = arith.constant 0 : i32
    return %c0_i32, %c0_i32_0 : i32, i32
  }
  func.func @transform_2(%arg0: i32, %arg1: i32) -> (i32, i32) {
    %c0_i32 = arith.constant 0 : i32
    %c0_i32_0 = arith.constant 0 : i32
    %c0_i32_1 = arith.constant 0 : i32
    return %c0_i32, %c0_i32_0 : i32, i32
  }
  func.func @transform_3(%arg0: i32, %arg1: i32) -> (i32, i32, i32) {
    %c0_i32 = arith.constant 0 : i32
    %c0_i32_0 = arith.constant 0 : i32
    %c0_i32_1 = arith.constant 0 : i32
    %c0_i32_2 = arith.constant 0 : i32
    return %c0_i32, %c0_i32_0, %c0_i32_1 : i32, i32, i32
  }
  func.func @transform_4(%arg0: i32, %arg1: i32) -> (i32, i32, i32) {
    %c0_i32 = arith.constant 0 : i32
    %c0_i32_0 = arith.constant 0 : i32
    %c0_i32_1 = arith.constant 0 : i32
    return %arg1, %c0_i32, %c0_i32_0 : i32, i32, i32
  }
  func.func @transform_5(%arg0: i32, %arg1: i32) -> (i32, i32, i32) {
    %c0_i32 = arith.constant 0 : i32
    %c0_i32_0 = arith.constant 0 : i32
    %c0_i32_1 = arith.constant 0 : i32
    %c0_i32_2 = arith.constant 0 : i32
    return %c0_i32, %c0_i32_0, %c0_i32_1 : i32, i32, i32
  }
  func.func @transform_6(%arg0: i32, %arg1: i32) -> (i32, i32) {
    %c0_i32 = arith.constant 0 : i32
    %c0_i32_0 = arith.constant 0 : i32
    %c0_i32_1 = arith.constant 0 : i32
    return %c0_i32, %c0_i32_0 : i32, i32
  }
  func.func @transform_7(%arg0: i32, %arg1: i32) -> (i32, i32, i32, i32) {
    %c0_i32 = arith.constant 0 : i32
    %c0_i32_0 = arith.constant 0 : i32
    %c0_i32_1 = arith.constant 0 : i32
    return %arg0, %arg1, %c0_i32, %c0_i32_0 : i32, i32, i32, i32
  }
}

</mosaic_0001>

<llo_original>
// kernel: tpu_custom_call.1
$region0: #{tpu_custom_call.1}
  #allocation0 [shape = 'u32[]', space=smem, size = 0x4, offset = 0x4, fixed_abs, tag = 'smem constant byte address 0x4 - core index']
  #allocation1 [shape = 'u32[144,128]{1,0:T(1,128)}', space=vmem, size = 0x12000, scoped, tag = 'internal scratch']
  %s0 = inlined_call_operand.vmem [shape: f32[2,4,56,32], index: 0, kind: input, shape index: {}]
  %s1 = inlined_call_operand.vmem [shape: f32[32,96], index: 1, kind: input, shape index: {}]
  %s2 = inlined_call_operand.vmem [shape: f32[1,96], index: 2, kind: input, shape index: {}]
  %s3 = inlined_call_operand.vmem [shape: f32[4,56,56], index: 3, kind: input, shape index: {}]
  %s4 = inlined_call_operand.vmem [shape: f32[4,56,56], index: 4, kind: input, shape index: {}]
  %s5 = inlined_call_operand.vmem [shape: f32[4,8,32], index: 5, kind: input, shape index: {}]
  %s6 = inlined_call_operand.vmem [shape: f32[1,32], index: 6, kind: input, shape index: {}]
  %s7 = inlined_call_operand.vmem [shape: f32[2,4,56,32], index: 7, kind: output, shape index: {}]
  %s8 = sld [smem:[#allocation0]]
  $region61: #{tpu_custom_call.1} parent=0
    _
  %s10 = ssub.s32 1, %s8
  %s11 = scalar_select 0, %s10, %s8
  loop: start=0, step=1, limit=6
  $region2: #{tpu_custom_call.1} parent=0 // loop_pre_header
    _
  $region3: #{tpu_custom_call.1} parent=0 // loop_header
    %s13 = sphi 0, %s17
    %p14 = scmp.ge.s32.totalorder %s13, 6
    %s20 = sphi 0, %s32
    %s21 = sphi 0, %s28
    %s22 = sphi 0, %s20
    %s23 = sphi 0, %s21
    %s24 = sphi 0, %s22
    %s25 = sphi 0, %s23
    %s37 = sphi 0, %s39
    %s40 = sphi 0, %s37
    %s41 = sphi 0, %s40
    %s57 = sphi 0, %s41
    %s61 = sphi 0, %s61
    %s63 = sphi 0, %s61
    %s64 = sphi 0, %s63
    %s78 = sphi 0, %s64
    %s82 = sphi 0, %s82
    %s84 = sphi 0, %s82
    %s85 = sphi 0, %s84
    %s99 = sphi 0, %s85
    %s103 = sphi 0, %s103
    %s105 = sphi 0, %s103
    %s106 = sphi 0, %s105
    %s120 = sphi 0, %s106
    %s126 = sphi 0, %s128
    %s129 = sphi 0, %s126
    %s130 = sphi 0, %s129
    %s146 = sphi 0, %s130
    %s150 = sphi 0, %s150
    %s152 = sphi 0, %s150
    %s153 = sphi 0, %s152
    %s167 = sphi 0, %s153
    %s171 = sphi 0, %s171
    %s173 = sphi 0, %s171
    %s174 = sphi 0, %s173
    %s188 = sphi 0, %s174
    %s196 = sphi 0, %s198
    %s199 = sphi 0, %s196
    %s200 = sphi 0, %s199
    %s216 = sphi 0, %s200
  $region4: #{tpu_custom_call.1} parent=0 // loop_header_branch
    %16 = sbr.rel (%p14) target = $region8
  $region5: #{tpu_custom_call.1} parent=0 // loop_body
    %s18 = ssub.s32 %s13, 1
    %s19 = ssub.s32 %s13, 2
    %s26 = sadd.s32 1, %s21
    %p27 = scmp.ge.s32.totalorder %s26, 2
    %s28 = scalar_select %p27, 0, %s26
    %s29 = sadd.s32 1, %s20
    %s30 = scalar_select %p27, %s29, %s20
    %p31 = scmp.ge.s32.totalorder %s30, 2
    %s32 = scalar_select %p31, 0, %s30
    %s33 = ssub.s32 %s20, %s32
    %s34 = ssub.s32 %s21, %s28
    %s35 = sor.u32 %s33, %s34
    %p36 = scmp.eq.s32.totalorder %s35, 0
    %s38 = sadd.s32 %s37, 1
    %s39 = scalar_select %p36, %s37, %s38
    %p42 = pneg %p36
    %p43 = scmp.eq.s32.totalorder %s13, 3
    %p44 = por %p42, %p43
    %p45 = scmp.ne.s32.totalorder %s37, %s40
    %p46 = scmp.eq.s32.totalorder %s13, 0
    %p47 = por %p45, %p46
    %p48 = scmp.ne.s32.totalorder %s37, %s40
    %p49 = scmp.eq.s32.totalorder %s18, 3
    %p50 = por %p48, %p49
    %p51 = scmp.ne.s32.totalorder %s40, %s41
    %p52 = scmp.eq.s32.totalorder %s18, 0
    %p53 = por %p51, %p52
    %p54 = scmp.ne.s32.totalorder %s40, %s41
    %p55 = scmp.eq.s32.totalorder %s19, 3
    %p56 = por %p54, %p55
    %p58 = scmp.ne.s32.totalorder %s41, %s57
    %p59 = scmp.eq.s32.totalorder %s19, 0
    %p60 = por %p58, %p59
    %s62 = sadd.s32 %s61, 1
    %p65 = scmp.eq.s32.totalorder %s13, 3
    %p66 = scmp.ne.s32.totalorder %s61, %s63
    %p67 = scmp.eq.s32.totalorder %s13, 0
    %p68 = por %p66, %p67
    %p69 = scmp.ne.s32.totalorder %s61, %s63
    %p70 = scmp.eq.s32.totalorder %s18, 3
    %p71 = por %p69, %p70
    %p72 = scmp.ne.s32.totalorder %s63, %s64
    %p73 = scmp.eq.s32.totalorder %s18, 0
    %p74 = por %p72, %p73
    %p75 = scmp.ne.s32.totalorder %s63, %s64
    %p76 = scmp.eq.s32.totalorder %s19, 3
    %p77 = por %p75, %p76
    %p79 = scmp.ne.s32.totalorder %s64, %s78
    %p80 = scmp.eq.s32.totalorder %s19, 0
    %p81 = por %p79, %p80
    %s83 = sadd.s32 %s82, 1
    %p86 = scmp.eq.s32.totalorder %s13, 3
    %p87 = scmp.ne.s32.totalorder %s82, %s84
    %p88 = scmp.eq.s32.totalorder %s13, 0
    %p89 = por %p87, %p88
    %p90 = scmp.ne.s32.totalorder %s82, %s84
    %p91 = scmp.eq.s32.totalorder %s18, 3
    %p92 = por %p90, %p91
    %p93 = scmp.ne.s32.totalorder %s84, %s85
    %p94 = scmp.eq.s32.totalorder %s18, 0
    %p95 = por %p93, %p94
    %p96 = scmp.ne.s32.totalorder %s84, %s85
    %p97 = scmp.eq.s32.totalorder %s19, 3
    %p98 = por %p96, %p97
    %p100 = scmp.ne.s32.totalorder %s85, %s99
    %p101 = scmp.eq.s32.totalorder %s19, 0
    %p102 = por %p100, %p101
    %s104 = sadd.s32 %s103, 1
    %p107 = scmp.eq.s32.totalorder %s13, 3
    %p108 = scmp.ne.s32.totalorder %s103, %s105
    %p109 = scmp.eq.s32.totalorder %s13, 0
    %p110 = por %p108, %p109
    %p111 = scmp.ne.s32.totalorder %s103, %s105
    %p112 = scmp.eq.s32.totalorder %s18, 3
    %p113 = por %p111, %p112
    %p114 = scmp.ne.s32.totalorder %s105, %s106
    %p115 = scmp.eq.s32.totalorder %s18, 0
    %p116 = por %p114, %p115
    %p117 = scmp.ne.s32.totalorder %s105, %s106
    %p118 = scmp.eq.s32.totalorder %s19, 3
    %p119 = por %p117, %p118
    %p121 = scmp.ne.s32.totalorder %s106, %s120
    %p122 = scmp.eq.s32.totalorder %s19, 0
    %p123 = por %p121, %p122
    %s124 = ssub.s32 %s21, %s28
    %p125 = scmp.eq.s32.totalorder %s124, 0
    %s127 = sadd.s32 %s126, 1
    %s128 = scalar_select %p125, %s126, %s127
    %p131 = pneg %p125
    %p132 = scmp.eq.s32.totalorder %s13, 3
    %p133 = por %p131, %p132
    %p134 = scmp.ne.s32.totalorder %s126, %s129
    %p135 = scmp.eq.s32.totalorder %s13, 0
    %p136 = por %p134, %p135
    %p137 = scmp.ne.s32.totalorder %s126, %s129
    %p138 = scmp.eq.s32.totalorder %s18, 3
    %p139 = por %p137, %p138
    %p140 = scmp.ne.s32.totalorder %s129, %s130
    %p141 = scmp.eq.s32.totalorder %s18, 0
    %p142 = por %p140, %p141
    %p143 = scmp.ne.s32.totalorder %s129, %s130
    %p144 = scmp.eq.s32.totalorder %s19, 3
    %p145 = por %p143, %p144
    %p147 = scmp.ne.s32.totalorder %s130, %s146
    %p148 = scmp.eq.s32.totalorder %s19, 0
    %p149 = por %p147, %p148
    %s151 = sadd.s32 %s150, 1
    %p154 = scmp.eq.s32.totalorder %s13, 3
    %p155 = scmp.ne.s32.totalorder %s150, %s152
    %p156 = scmp.eq.s32.totalorder %s13, 0
    %p157 = por %p155, %p156
    %p158 = scmp.ne.s32.totalorder %s150, %s152
    %p159 = scmp.eq.s32.totalorder %s18, 3
    %p160 = por %p158, %p159
    %p161 = scmp.ne.s32.totalorder %s152, %s153
    %p162 = scmp.eq.s32.totalorder %s18, 0
    %p163 = por %p161, %p162
    %p164 = scmp.ne.s32.totalorder %s152, %s153
    %p165 = scmp.eq.s32.totalorder %s19, 3
    %p166 = por %p164, %p165
    %p168 = scmp.ne.s32.totalorder %s153, %s167
    %p169 = scmp.eq.s32.totalorder %s19, 0
    %p170 = por %p168, %p169
    %s172 = sadd.s32 %s171, 1
    %p175 = scmp.eq.s32.totalorder %s13, 3
    %p176 = scmp.ne.s32.totalorder %s171, %s173
    %p177 = scmp.eq.s32.totalorder %s13, 0
    %p178 = por %p176, %p177
    %p179 = scmp.ne.s32.totalorder %s171, %s173
    %p180 = scmp.eq.s32.totalorder %s18, 3
    %p181 = por %p179, %p180
    %p182 = scmp.ne.s32.totalorder %s173, %s174
    %p183 = scmp.eq.s32.totalorder %s18, 0
    %p184 = por %p182, %p183
    %p185 = scmp.ne.s32.totalorder %s173, %s174
    %p186 = scmp.eq.s32.totalorder %s19, 3
    %p187 = por %p185, %p186
    %p189 = scmp.ne.s32.totalorder %s174, %s188
    %p190 = scmp.eq.s32.totalorder %s19, 0
    %p191 = por %p189, %p190
    %s192 = ssub.s32 %s20, %s32
    %s193 = ssub.s32 %s21, %s28
    %s194 = sor.u32 %s192, %s193
    %p195 = scmp.eq.s32.totalorder %s194, 0
    %s197 = sadd.s32 %s196, 1
    %s198 = scalar_select %p195, %s196, %s197
    %p201 = pneg %p195
    %p202 = scmp.eq.s32.totalorder %s13, 3
    %p203 = por %p201, %p202
    %p204 = scmp.ne.s32.totalorder %s196, %s199
    %p205 = scmp.eq.s32.totalorder %s13, 0
    %p206 = por %p204, %p205
    %p207 = scmp.ne.s32.totalorder %s196, %s199
    %p208 = scmp.eq.s32.totalorder %s18, 3
    %p209 = por %p207, %p208
    %p210 = scmp.ne.s32.totalorder %s199, %s200
    %p211 = scmp.eq.s32.totalorder %s18, 0
    %p212 = por %p210, %p211
    %p213 = scmp.ne.s32.totalorder %s199, %s200
    %p214 = scmp.eq.s32.totalorder %s19, 3
    %p215 = por %p213, %p214
    %p217 = scmp.ne.s32.totalorder %s200, %s216
    %p218 = scmp.eq.s32.totalorder %s19, 0
    %p219 = por %p217, %p218
    %p220 = scmp.le.s32.totalorder 1, %s13
    %p221 = scmp.lt.s32.totalorder %s13, 5
    %p222 = pnand %p220, %p221
    %p223 = pneg %p222
    // Predicated region
    $region9: #{tpu_custom_call.1} parent=5 // pred_check
      _
    $region10: #{tpu_custom_call.1} parent=5 // pred_check_branch
      %225 = sbr.rel (%p222) target = $region12
    $region11: #{tpu_custom_call.1} parent=5 // pred_region
      %s226 = ssub.s32 %s13, 1
      // Predicated region
      $region13: #{tpu_custom_call.1} parent=11 // pred_check
        %p227 = pneg %p74
      $region14: #{tpu_custom_call.1} parent=11 // pred_check_branch
        %229 = sbr.rel (%p227) target = $region16
      $region15: #{tpu_custom_call.1} parent=11 // pred_region
        _
      $region16: #{tpu_custom_call.1} parent=11 // pred_fallthru
        _
      // Predicated region
      $region17: #{tpu_custom_call.1} parent=11 // pred_check
        %p230 = pneg %p95
      $region18: #{tpu_custom_call.1} parent=11 // pred_check_branch
        %232 = sbr.rel (%p230) target = $region20
      $region19: #{tpu_custom_call.1} parent=11 // pred_region
        _
      $region20: #{tpu_custom_call.1} parent=11 // pred_fallthru
        _
      // Predicated region
      $region21: #{tpu_custom_call.1} parent=11 // pred_check
        %p233 = pneg %p116
      $region22: #{tpu_custom_call.1} parent=11 // pred_check_branch
        %235 = sbr.rel (%p233) target = $region24
      $region23: #{tpu_custom_call.1} parent=11 // pred_region
        _
      $region24: #{tpu_custom_call.1} parent=11 // pred_fallthru
        _
      // Predicated region
      $region25: #{tpu_custom_call.1} parent=11 // pred_check
        %p236 = pneg %p163
      $region26: #{tpu_custom_call.1} parent=11 // pred_check_branch
        %238 = sbr.rel (%p236) target = $region28
      $region27: #{tpu_custom_call.1} parent=11 // pred_region
        _
      $region28: #{tpu_custom_call.1} parent=11 // pred_fallthru
        _
      // Predicated region
      $region29: #{tpu_custom_call.1} parent=11 // pred_check
        %p239 = pneg %p184
      $region30: #{tpu_custom_call.1} parent=11 // pred_check_branch
        %241 = sbr.rel (%p239) target = $region32
      $region31: #{tpu_custom_call.1} parent=11 // pred_region
        _
      $region32: #{tpu_custom_call.1} parent=11 // pred_fallthru
        _
    $region12: #{tpu_custom_call.1} parent=5 // pred_fallthru
      _
    %p242 = scmp.lt.s32.totalorder %s13, 4
    // Predicated region
    $region33: #{tpu_custom_call.1} parent=5 // pred_check
      %p243 = pneg %p242
    $region34: #{tpu_custom_call.1} parent=5 // pred_check_branch
      %245 = sbr.rel (%p243) target = $region36
    $region35: #{tpu_custom_call.1} parent=5 // pred_region
      // Predicated region
      $region37: #{tpu_custom_call.1} parent=35 // pred_check
        %p246 = pneg %p47
      $region38: #{tpu_custom_call.1} parent=35 // pred_check_branch
        %248 = sbr.rel (%p246) target = $region40
      $region39: #{tpu_custom_call.1} parent=35 // pred_region
        %s249 = smul.u32 2, %s21
        %p250 = scmp.lt.s32.totalorder %s20, 1
        %s251 = scalar_select %p250, %s20, 1
        %p252 = scmp.lt.s32.totalorder %s249, 3
        %s253 = scalar_select %p252, %s249, 3
        %s254 = smul.addr %s253, 7
        %s255 = smul.addr %s251, 28
        %s256 = sadd.s32 %s254, %s255
        %s257 = smul.addr %s256, 8
        %s258 = scalar_lea.vmem %s0, %s257
        %s259 = smul.u32 2, %s21
      $region40: #{tpu_custom_call.1} parent=35 // pred_fallthru
        _
      // Predicated region
      $region41: #{tpu_custom_call.1} parent=35 // pred_check
        %p260 = pneg %p136
      $region42: #{tpu_custom_call.1} parent=35 // pred_check_branch
        %262 = sbr.rel (%p260) target = $region44
      $region43: #{tpu_custom_call.1} parent=35 // pred_region
        %s263 = smul.u32 2, %s21
        %p264 = scmp.lt.s32.totalorder %s263, 3
        %s265 = scalar_select %p264, %s263, 3
        %s266 = smul.addr %s265, 7
        %s267 = smul.addr %s266, 8
        %s268 = scalar_lea.vmem %s4, %s267
        %s269 = smul.u32 2, %s21
      $region44: #{tpu_custom_call.1} parent=35 // pred_fallthru
        _
    $region36: #{tpu_custom_call.1} parent=5 // pred_fallthru
      _
    %p270 = scmp.le.s32.totalorder 1, %s13
    %p271 = scmp.lt.s32.totalorder %s13, 5
    %p272 = pnand %p270, %p271
    %p273 = pneg %p272
    // Predicated region
    $region45: #{tpu_custom_call.1} parent=5 // pred_check
      _
    $region46: #{tpu_custom_call.1} parent=5 // pred_check_branch
      %275 = sbr.rel (%p272) target = $region48
    $region47: #{tpu_custom_call.1} parent=5 // pred_region
      %s276 = ssub.s32 %s13, 1
      %s277 = smul.u32 2, %s23
      %p278 = scmp.lt.s32.totalorder %s22, 1
      %s279 = scalar_select %p278, %s22, 1
      %p280 = scmp.lt.s32.totalorder %s277, 3
      %s281 = scalar_select %p280, %s277, 3
      %s282 = smul.addr %s281, 7
      %s283 = smul.addr %s279, 28
      %s284 = sadd.s32 %s282, %s283
      %s285 = smul.addr %s284, 8
      %s286 = scalar_lea.vmem %s0, %s285
      %p287 = pneg %p53
      %p288 = pneg %p50
      %p289 = pneg %p74
      %p290 = pneg %p71
      %p291 = pneg %p95
      %p292 = pneg %p92
      %p293 = pneg %p116
      %p294 = pneg %p113
      %s295 = smul.u32 2, %s23
      %p296 = scmp.lt.s32.totalorder %s295, 3
      %s297 = scalar_select %p296, %s295, 3
      %s298 = smul.addr %s297, 7
      %s299 = smul.addr %s298, 8
      %s300 = scalar_lea.vmem %s4, %s299
      %p301 = pneg %p142
      %p302 = pneg %p139
      %p303 = pneg %p163
      %p304 = pneg %p160
      %p305 = pneg %p184
      %p306 = pneg %p181
      %p307 = pneg %p212
      %p308 = pneg %p209
      %s309 = smul.u32 2, %s23
      %p310 = scmp.lt.s32.totalorder %s22, 1
      %s311 = scalar_select %p310, %s22, 1
      %p312 = scmp.lt.s32.totalorder %s309, 3
      %s313 = scalar_select %p312, %s309, 3
      %s314 = smul.addr %s313, 7
      %s315 = smul.addr %s311, 28
      %s316 = sadd.s32 %s314, %s315
      %s317 = smul.addr %s316, 8
      %s318 = scalar_lea.vmem %s7, %s317
      %s319 = smul.u32 2, %s23
      %p320 = scmp.lt.s32.totalorder %s22, 1
      %s321 = scalar_select %p320, %s22, 1
      %p322 = scmp.lt.s32.totalorder %s319, 3
      %s323 = scalar_select %p322, %s319, 3
      %s324 = smul.addr %s323, 7
      %s325 = smul.addr %s321, 28
      %s326 = sadd.s32 %s324, %s325
      %s327 = smul.addr %s326, 8
      %s328 = scalar_lea.vmem %s0, %s327
      %s329 = smul.u32 2, %s23
      %s330 = smul.u32 2, %s23
      %p331 = scmp.lt.s32.totalorder %s330, 3
      %s332 = scalar_select %p331, %s330, 3
      %s333 = smul.addr %s332, 7
      %s334 = smul.addr %s333, 8
      %s335 = scalar_lea.vmem %s4, %s334
      %s336 = smul.u32 2, %s23
      %s337 = smul.u32 2, %s23
      %p338 = scmp.lt.s32.totalorder %s22, 1
      %s339 = scalar_select %p338, %s22, 1
      %p340 = scmp.lt.s32.totalorder %s337, 3
      %s341 = scalar_select %p340, %s337, 3
      %s342 = smul.addr %s341, 7
      %s343 = smul.addr %s339, 28
      %s344 = sadd.s32 %s342, %s343
      %s345 = smul.addr %s344, 8
      %s346 = scalar_lea.vmem %s7, %s345
      %s347 = smul.u32 2, %s23
      %v348 = vld [vmem:[%s328] sm:$0xff]
      %v349 = vld [vmem:[%s328 + $0x8] sm:$0xff]
      %v350 = vld [vmem:[%s328 + $0x10] sm:$0xff]
      %v351 = vld [vmem:[%s328 + $0x18] sm:$0xff]
      %v352 = vld [vmem:[%s328 + $0x20] sm:$0xff]
      %v353 = vld [vmem:[%s328 + $0x28] sm:$0xff]
      %v354 = vld [vmem:[%s328 + $0x30] sm:$0xff]
      %v355 = vld [vmem:[%s328 + $0x38] sm:$0xff]
      %v356 = vld [vmem:[%s328 + $0x40] sm:$0xff]
      %v357 = vld [vmem:[%s328 + $0x48] sm:$0xff]
      %v358 = vld [vmem:[%s328 + $0x50] sm:$0xff]
      %v359 = vld [vmem:[%s328 + $0x58] sm:$0xff]
      %v360 = vld [vmem:[%s328 + $0x60] sm:$0xff]
      %v361 = vld [vmem:[%s328 + $0x68] sm:$0xff]
      %v362 = vld [vmem:[%s1] sm:$0xff]
      %v363 = vld [vmem:[%s1 + $0x8] sm:$0xff]
      %v364 = vld [vmem:[%s1 + $0x10] sm:$0xff]
      %v365 = vld [vmem:[%s1 + $0x18] sm:$0xff]
      %v366 = vld [vmem:[%s2] sm:$0x1]
      %v368 = vlaneseq
      %v369 = vshrl.u32 %v368, 7
      %v370 = vsub.s32 0, %v369
      %v371 = vrot.slane %v366, %v370
      %vm373 = vcmask 261120
      %v375 = vsel %vm373, %v348, 0
      %v378 = vsel %vm373, %v349, 0
      %v381 = vsel %vm373, %v350, 0
      %v384 = vsel %vm373, %v351, 0
      %v387 = vsel %vm373, %v352, 0
      %v390 = vsel %vm373, %v353, 0
      %v393 = vsel %vm373, %v354, 0
      %v396 = vsel %vm373, %v355, 0
      %v399 = vsel %vm373, %v356, 0
      %v402 = vsel %vm373, %v357, 0
      %v405 = vsel %vm373, %v358, 0
      %v408 = vsel %vm373, %v359, 0
      %v411 = vsel %vm373, %v360, 0
      %v414 = vsel %vm373, %v361, 0
      %416 = vmatprep.subr.mxu0 0.0
      %417 = vmatpush1.msra.mxu0 %v362
      %418 = vmatprep.subr.mxu0 0.0
      %419 = vmatpush1.msra.mxu0 %v363
      %420 = vmatprep.subr.mxu0 0.0
      %421 = vmatpush1.msra.mxu0 %v364
      %422 = vmatprep.subr.mxu0 0.0
      %423 = vmatpush1.msra.mxu0 %v365
      %424 = vmatprep.subr.mxu0 0.0
      %425 = vmatpush1.msra.mxu0 0.0
      %426 = vmatprep.subr.mxu0 0.0
      %427 = vmatpush1.msra.mxu0 0.0
      %428 = vmatprep.subr.mxu0 0.0
      %429 = vmatpush1.msra.mxu0 0.0
      %430 = vmatprep.subr.mxu0 0.0
      %431 = vmatpush1.msra.mxu0 0.0
      %432 = vmatprep.subr.mxu0 0.0
      %433 = vmatpush1.msra.mxu0 0.0
      %434 = vmatprep.subr.mxu0 0.0
      %435 = vmatpush1.msra.mxu0 0.0
      %436 = vmatprep.subr.mxu0 0.0
      %437 = vmatpush1.msra.mxu0 0.0
      %438 = vmatprep.subr.mxu0 0.0
      %439 = vmatpush1.msra.mxu0 0.0
      %440 = vmatprep.subr.mxu0 0.0
      %441 = vmatpush1.msra.mxu0 0.0
      %442 = vmatprep.subr.mxu0 0.0
      %443 = vmatpush1.msra.mxu0 0.0
      %444 = vmatprep.subr.mxu0 0.0
      %445 = vmatpush1.msra.mxu0 0.0
      %446 = vmatprep.subr.mxu0 0.0
      %447 = vmatpush1.msra.mxu0 0.0
      %448 = vmatprep.subr.mxu0 0.0
      %449 = vmatpush1.msra.mxu0 0.0
      %450 = vmatprep.subr.mxu0 0.0
      %451 = vmatpush1.msra.mxu0 0.0
      %452 = vmatprep.subr.mxu0 0.0
      %453 = vmatpush1.msra.mxu0 0.0
      %454 = vmatprep.subr.mxu0 0.0
      %455 = vmatpush1.msra.mxu0 0.0
      %456 = vmatprep.subr.mxu0 0.0
      %457 = vmatpush1.msra.mxu0 0.0
      %458 = vmatprep.subr.mxu0 0.0
      %459 = vmatpush1.msra.mxu0 0.0
      %460 = vmatprep.subr.mxu0 0.0
      %461 = vmatpush1.msra.mxu0 0.0
      %462 = vmatprep.subr.mxu0 0.0
      %463 = vmatpush1.msra.mxu0 0.0
      %464 = vmatprep.subr.mxu0 0.0
      %465 = vmatpush1.msra.mxu0 0.0
      %466 = vmatprep.subr.mxu0 0.0
      %467 = vmatpush1.msra.mxu0 0.0
      %468 = vmatprep.subr.mxu0 0.0
      %469 = vmatpush1.msra.mxu0 0.0
      %470 = vmatprep.subr.mxu0 0.0
      %471 = vmatpush1.msra.mxu0 0.0
      %472 = vmatprep.subr.mxu0 0.0
      %473 = vmatpush1.msra.mxu0 0.0
      %474 = vmatprep.subr.mxu0 0.0
      %475 = vmatpush1.msra.mxu0 0.0
      %476 = vmatprep.subr.mxu0 0.0
      %477 = vmatpush1.msra.mxu0 0.0
      %478 = vmatprep.subr.mxu0 0.0
      %479 = vmatpush1.msra.mxu0 0.0
      %480 = vmatprep.mubr.f32.mxu0 0.0
      %481 = vmatmul.mubr.f32.gmra.mrb[0].mxu0 %v375
      %v482 = vpop.f32.mrb[0].mxu0
      %v483 = vadd.f32 %v371, %v482
      %v484 = vpop.f32.mrb[0].mxu0
      %485 = vmatprep.mubr.f32.mxu0 0.0
      %486 = vmatmul.mubr.f32.gmra.mrb[0].mxu0 %v378
      %v487 = vpop.f32.mrb[0].mxu0
      %v488 = vadd.f32 %v371, %v487
      %v489 = vpop.f32.mrb[0].mxu0
      %490 = vmatprep.mubr.f32.mxu0 0.0
      %491 = vmatmul.mubr.f32.gmra.mrb[0].mxu0 %v381
      %v492 = vpop.f32.mrb[0].mxu0
      %v493 = vadd.f32 %v371, %v492
      %v494 = vpop.f32.mrb[0].mxu0
      %495 = vmatprep.mubr.f32.mxu0 0.0
      %496 = vmatmul.mubr.f32.gmra.mrb[0].mxu0 %v384
      %v497 = vpop.f32.mrb[0].mxu0
      %v498 = vadd.f32 %v371, %v497
      %v499 = vpop.f32.mrb[0].mxu0
      %500 = vmatprep.mubr.f32.mxu0 0.0
      %501 = vmatmul.mubr.f32.gmra.mrb[0].mxu0 %v387
      %v502 = vpop.f32.mrb[0].mxu0
      %v503 = vadd.f32 %v371, %v502
      %v504 = vpop.f32.mrb[0].mxu0
      %505 = vmatprep.mubr.f32.mxu0 0.0
      %506 = vmatmul.mubr.f32.gmra.mrb[0].mxu0 %v390
      %v507 = vpop.f32.mrb[0].mxu0
      %v508 = vadd.f32 %v371, %v507
      %v509 = vpop.f32.mrb[0].mxu0
      %510 = vmatprep.mubr.f32.mxu0 0.0
      %511 = vmatmul.mubr.f32.gmra.mrb[0].mxu0 %v393
      %v512 = vpop.f32.mrb[0].mxu0
      %v513 = vadd.f32 %v371, %v512
      %v514 = vpop.f32.mrb[0].mxu0
      %515 = vmatprep.mubr.f32.mxu0 0.0
      %516 = vmatmul.mubr.f32.gmra.mrb[0].mxu0 %v396
      %v517 = vpop.f32.mrb[0].mxu0
      %v518 = vadd.f32 %v371, %v517
      %v519 = vpop.f32.mrb[0].mxu0
      %520 = vmatprep.mubr.f32.mxu0 0.0
      %521 = vmatmul.mubr.f32.gmra.mrb[0].mxu0 %v399
      %v522 = vpop.f32.mrb[0].mxu0
      %v523 = vadd.f32 %v371, %v522
      %v524 = vpop.f32.mrb[0].mxu0
      %525 = vmatprep.mubr.f32.mxu0 0.0
      %526 = vmatmul.mubr.f32.gmra.mrb[0].mxu0 %v402
      %v527 = vpop.f32.mrb[0].mxu0
      %v528 = vadd.f32 %v371, %v527
      %v529 = vpop.f32.mrb[0].mxu0
      %530 = vmatprep.mubr.f32.mxu0 0.0
      %531 = vmatmul.mubr.f32.gmra.mrb[0].mxu0 %v405
      %v532 = vpop.f32.mrb[0].mxu0
      %v533 = vadd.f32 %v371, %v532
      %v534 = vpop.f32.mrb[0].mxu0
      %535 = vmatprep.mubr.f32.mxu0 0.0
      %536 = vmatmul.mubr.f32.gmra.mrb[0].mxu0 %v408
      %v537 = vpop.f32.mrb[0].mxu0
      %v538 = vadd.f32 %v371, %v537
      %v539 = vpop.f32.mrb[0].mxu0
      %540 = vmatprep.mubr.f32.mxu0 0.0
      %541 = vmatmul.mubr.f32.gmra.mrb[0].mxu0 %v411
      %v542 = vpop.f32.mrb[0].mxu0
      %v543 = vadd.f32 %v371, %v542
      %v544 = vpop.f32.mrb[0].mxu0
      %545 = vmatprep.mubr.f32.mxu0 0.0
      %546 = vmatmul.mubr.f32.gmra.mrb[0].mxu0 %v414
      %v547 = vpop.f32.mrb[0].mxu0
      %v548 = vadd.f32 %v371, %v547
      %v549 = vpop.f32.mrb[0].mxu0
      %550 = vdwg.mxu0
      %551 = vxpose.xlu0.b32.start [1/16] %v483, 128
      %552 = vxpose.xlu0.b32.cont [2/16] %v488, 128
      %553 = vxpose.xlu0.b32.cont [3/16] %v493, 128
      %554 = vxpose.xlu0.b32.cont [4/16] %v498, 128
      %555 = vxpose.xlu0.b32.cont [5/16] %v503, 128
      %556 = vxpose.xlu0.b32.cont [6/16] %v508, 128
      %557 = vxpose.xlu0.b32.cont [7/16] %v513, 128
      %558 = vxpose.xlu0.b32.cont [8/16] %v518, 128
      %559 = vxpose.xlu0.b32.cont [9/16] %v523, 128
      %560 = vxpose.xlu0.b32.cont [10/16] %v528, 128
      %561 = vxpose.xlu0.b32.cont [11/16] %v533, 128
      %562 = vxpose.xlu0.b32.cont [12/16] %v538, 128
      %563 = vxpose.xlu0.b32.cont [13/16] %v543, 128
      %564 = vxpose.xlu0.b32.cont [14/16] %v548, 128
      %565 = vxpose.xlu0.b32.cont [15/16] 0.0, 128
      %566 = vxpose.xlu0.b32.end [16/16] 0.0, 128
      %v567 = vpop.trf.xlu0
      %v568 = vpop.trf.xlu0
      %v569 = vpop.trf.xlu0
      %v570 = vpop.trf.xlu0
      %v571 = vpop.trf.xlu0
      %v572 = vpop.trf.xlu0
      %v573 = vpop.trf.xlu0
      %v574 = vpop.trf.xlu0
      %v575 = vpop.trf.xlu0
      %v576 = vpop.trf.xlu0
      %v577 = vpop.trf.xlu0
      %v578 = vpop.trf.xlu0
      %v579 = vpop.trf.xlu0
      %v580 = vpop.trf.xlu0
      %v581 = vpop.trf.xlu0
      %v582 = vpop.trf.xlu0
      %583 = vxpose.xlu0.b32.start [1/16] %v567, 128
      %584 = vxpose.xlu0.b32.cont [2/16] 0.0, 128
      %585 = vxpose.xlu0.b32.cont [3/16] 0.0, 128
      %586 = vxpose.xlu0.b32.cont [4/16] 0.0, 128
      %587 = vxpose.xlu0.b32.cont [5/16] 0.0, 128
      %588 = vxpose.xlu0.b32.cont [6/16] 0.0, 128
      %589 = vxpose.xlu0.b32.cont [7/16] 0.0, 128
      %590 = vxpose.xlu0.b32.cont [8/16] 0.0, 128
      %591 = vxpose.xlu0.b32.cont [9/16] 0.0, 128
      %592 = vxpose.xlu0.b32.cont [10/16] 0.0, 128
      %593 = vxpose.xlu0.b32.cont [11/16] 0.0, 128
      %594 = vxpose.xlu0.b32.cont [12/16] 0.0, 128
      %595 = vxpose.xlu0.b32.cont [13/16] 0.0, 128
      %596 = vxpose.xlu0.b32.cont [14/16] 0.0, 128
      %597 = vxpose.xlu0.b32.cont [15/16] 0.0, 128
      %598 = vxpose.xlu0.b32.end [16/16] 0.0, 128
      %v599 = vpop.trf.xlu0
      %v600 = vpop.trf.xlu0
      %v601 = vpop.trf.xlu0
      %v602 = vpop.trf.xlu0
      %v603 = vpop.trf.xlu0
      %v604 = vpop.trf.xlu0
      %v605 = vpop.trf.xlu0
      %v606 = vpop.trf.xlu0
      %v607 = vpop.trf.xlu0
      %v608 = vpop.trf.xlu0
      %v609 = vpop.trf.xlu0
      %v610 = vpop.trf.xlu0
      %v611 = vpop.trf.xlu0
      %v612 = vpop.trf.xlu0
      %v613 = vpop.trf.xlu0
      %v614 = vpop.trf.xlu0
      %615 = vxpose.xlu0.b32.start [1/16] %v568, 128
      %616 = vxpose.xlu0.b32.cont [2/16] 0.0, 128
      %617 = vxpose.xlu0.b32.cont [3/16] 0.0, 128
      %618 = vxpose.xlu0.b32.cont [4/16] 0.0, 128
      %619 = vxpose.xlu0.b32.cont [5/16] 0.0, 128
      %620 = vxpose.xlu0.b32.cont [6/16] 0.0, 128
      %621 = vxpose.xlu0.b32.cont [7/16] 0.0, 128
      %622 = vxpose.xlu0.b32.cont [8/16] 0.0, 128
      %623 = vxpose.xlu0.b32.cont [9/16] 0.0, 128
      %624 = vxpose.xlu0.b32.cont [10/16] 0.0, 128
      %625 = vxpose.xlu0.b32.cont [11/16] 0.0, 128
      %626 = vxpose.xlu0.b32.cont [12/16] 0.0, 128
      %627 = vxpose.xlu0.b32.cont [13/16] 0.0, 128
      %628 = vxpose.xlu0.b32.cont [14/16] 0.0, 128
      %629 = vxpose.xlu0.b32.cont [15/16] 0.0, 128
      %630 = vxpose.xlu0.b32.end [16/16] 0.0, 128
      %v631 = vpop.trf.xlu0
      %v632 = vpop.trf.xlu0
      %v633 = vpop.trf.xlu0
      %v634 = vpop.trf.xlu0
      %v635 = vpop.trf.xlu0
      %v636 = vpop.trf.xlu0
      %v637 = vpop.trf.xlu0
      %v638 = vpop.trf.xlu0
      %v639 = vpop.trf.xlu0
      %v640 = vpop.trf.xlu0
      %v641 = vpop.trf.xlu0
      %v642 = vpop.trf.xlu0
      %v643 = vpop.trf.xlu0
      %v644 = vpop.trf.xlu0
      %v645 = vpop.trf.xlu0
      %v646 = vpop.trf.xlu0
      %647 = vxpose.xlu0.b32.start [1/16] %v569, 128
      %648 = vxpose.xlu0.b32.cont [2/16] 0.0, 128
      %649 = vxpose.xlu0.b32.cont [3/16] 0.0, 128
      %650 = vxpose.xlu0.b32.cont [4/16] 0.0, 128
      %651 = vxpose.xlu0.b32.cont [5/16] 0.0, 128
      %652 = vxpose.xlu0.b32.cont [6/16] 0.0, 128
      %653 = vxpose.xlu0.b32.cont [7/16] 0.0, 128
      %654 = vxpose.xlu0.b32.cont [8/16] 0.0, 128
      %655 = vxpose.xlu0.b32.cont [9/16] 0.0, 128
      %656 = vxpose.xlu0.b32.cont [10/16] 0.0, 128
      %657 = vxpose.xlu0.b32.cont [11/16] 0.0, 128
      %658 = vxpose.xlu0.b32.cont [12/16] 0.0, 128
      %659 = vxpose.xlu0.b32.cont [13/16] 0.0, 128
      %660 = vxpose.xlu0.b32.cont [14/16] 0.0, 128
      %661 = vxpose.xlu0.b32.cont [15/16] 0.0, 128
      %662 = vxpose.xlu0.b32.end [16/16] 0.0, 128
      %v663 = vpop.trf.xlu0
      %v664 = vpop.trf.xlu0
      %v665 = vpop.trf.xlu0
      %v666 = vpop.trf.xlu0
      %v667 = vpop.trf.xlu0
      %v668 = vpop.trf.xlu0
      %v669 = vpop.trf.xlu0
      %v670 = vpop.trf.xlu0
      %v671 = vpop.trf.xlu0
      %v672 = vpop.trf.xlu0
      %v673 = vpop.trf.xlu0
      %v674 = vpop.trf.xlu0
      %v675 = vpop.trf.xlu0
      %v676 = vpop.trf.xlu0
      %v677 = vpop.trf.xlu0
      %v678 = vpop.trf.xlu0
      %679 = vxpose.xlu0.b32.start [1/16] %v570, 128
      %680 = vxpose.xlu0.b32.cont [2/16] 0.0, 128
      %681 = vxpose.xlu0.b32.cont [3/16] 0.0, 128
      %682 = vxpose.xlu0.b32.cont [4/16] 0.0, 128
      %683 = vxpose.xlu0.b32.cont [5/16] 0.0, 128
      %684 = vxpose.xlu0.b32.cont [6/16] 0.0, 128
      %685 = vxpose.xlu0.b32.cont [7/16] 0.0, 128
      %686 = vxpose.xlu0.b32.cont [8/16] 0.0, 128
      %687 = vxpose.xlu0.b32.cont [9/16] 0.0, 128
      %688 = vxpose.xlu0.b32.cont [10/16] 0.0, 128
      %689 = vxpose.xlu0.b32.cont [11/16] 0.0, 128
      %690 = vxpose.xlu0.b32.cont [12/16] 0.0, 128
      %691 = vxpose.xlu0.b32.cont [13/16] 0.0, 128
      %692 = vxpose.xlu0.b32.cont [14/16] 0.0, 128
      %693 = vxpose.xlu0.b32.cont [15/16] 0.0, 128
      %694 = vxpose.xlu0.b32.end [16/16] 0.0, 128
      %v695 = vpop.trf.xlu0
      %v696 = vpop.trf.xlu0
      %v697 = vpop.trf.xlu0
      %v698 = vpop.trf.xlu0
      %v699 = vpop.trf.xlu0
      %v700 = vpop.trf.xlu0
      %v701 = vpop.trf.xlu0
      %v702 = vpop.trf.xlu0
      %v703 = vpop.trf.xlu0
      %v704 = vpop.trf.xlu0
      %v705 = vpop.trf.xlu0
      %v706 = vpop.trf.xlu0
      %v707 = vpop.trf.xlu0
      %v708 = vpop.trf.xlu0
      %v709 = vpop.trf.xlu0
      %v710 = vpop.trf.xlu0
      %711 = vxpose.xlu0.b32.start [1/16] %v571, 128
      %712 = vxpose.xlu0.b32.cont [2/16] 0.0, 128
      %713 = vxpose.xlu0.b32.cont [3/16] 0.0, 128
      %714 = vxpose.xlu0.b32.cont [4/16] 0.0, 128
      %715 = vxpose.xlu0.b32.cont [5/16] 0.0, 128
      %716 = vxpose.xlu0.b32.cont [6/16] 0.0, 128
      %717 = vxpose.xlu0.b32.cont [7/16] 0.0, 128
      %718 = vxpose.xlu0.b32.cont [8/16] 0.0, 128
      %719 = vxpose.xlu0.b32.cont [9/16] 0.0, 128
      %720 = vxpose.xlu0.b32.cont [10/16] 0.0, 128
      %721 = vxpose.xlu0.b32.cont [11/16] 0.0, 128
      %722 = vxpose.xlu0.b32.cont [12/16] 0.0, 128
      %723 = vxpose.xlu0.b32.cont [13/16] 0.0, 128
      %724 = vxpose.xlu0.b32.cont [14/16] 0.0, 128
      %725 = vxpose.xlu0.b32.cont [15/16] 0.0, 128
      %726 = vxpose.xlu0.b32.end [16/16] 0.0, 128
      %v727 = vpop.trf.xlu0
      %v728 = vpop.trf.xlu0
      %v729 = vpop.trf.xlu0
      %v730 = vpop.trf.xlu0
      %v731 = vpop.trf.xlu0
      %v732 = vpop.trf.xlu0
      %v733 = vpop.trf.xlu0
      %v734 = vpop.trf.xlu0
      %v735 = vpop.trf.xlu0
      %v736 = vpop.trf.xlu0
      %v737 = vpop.trf.xlu0
      %v738 = vpop.trf.xlu0
      %v739 = vpop.trf.xlu0
      %v740 = vpop.trf.xlu0
      %v741 = vpop.trf.xlu0
      %v742 = vpop.trf.xlu0
      %743 = vxpose.xlu0.b32.start [1/16] %v572, 128
      %744 = vxpose.xlu0.b32.cont [2/16] 0.0, 128
      %745 = vxpose.xlu0.b32.cont [3/16] 0.0, 128
      %746 = vxpose.xlu0.b32.cont [4/16] 0.0, 128
      %747 = vxpose.xlu0.b32.cont [5/16] 0.0, 128
      %748 = vxpose.xlu0.b32.cont [6/16] 0.0, 128
      %749 = vxpose.xlu0.b32.cont [7/16] 0.0, 128
      %750 = vxpose.xlu0.b32.cont [8/16] 0.0, 128
      %751 = vxpose.xlu0.b32.cont [9/16] 0.0, 128
      %752 = vxpose.xlu0.b32.cont [10/16] 0.0, 128
      %753 = vxpose.xlu0.b32.cont [11/16] 0.0, 128
      %754 = vxpose.xlu0.b32.cont [12/16] 0.0, 128
      %755 = vxpose.xlu0.b32.cont [13/16] 0.0, 128
      %756 = vxpose.xlu0.b32.cont [14/16] 0.0, 128
      %757 = vxpose.xlu0.b32.cont [15/16] 0.0, 128
      %758 = vxpose.xlu0.b32.end [16/16] 0.0, 128
      %v759 = vpop.trf.xlu0
      %v760 = vpop.trf.xlu0
      %v761 = vpop.trf.xlu0
      %v762 = vpop.trf.xlu0
      %v763 = vpop.trf.xlu0
      %v764 = vpop.trf.xlu0
      %v765 = vpop.trf.xlu0
      %v766 = vpop.trf.xlu0
      %v767 = vpop.trf.xlu0
      %v768 = vpop.trf.xlu0
      %v769 = vpop.trf.xlu0
      %v770 = vpop.trf.xlu0
      %v771 = vpop.trf.xlu0
      %v772 = vpop.trf.xlu0
      %v773 = vpop.trf.xlu0
      %v774 = vpop.trf.xlu0
      %775 = vxpose.xlu0.b32.start [1/16] %v573, 128
      %776 = vxpose.xlu0.b32.cont [2/16] 0.0, 128
      %777 = vxpose.xlu0.b32.cont [3/16] 0.0, 128
      %778 = vxpose.xlu0.b32.cont [4/16] 0.0, 128
      %779 = vxpose.xlu0.b32.cont [5/16] 0.0, 128
      %780 = vxpose.xlu0.b32.cont [6/16] 0.0, 128
      %781 = vxpose.xlu0.b32.cont [7/16] 0.0, 128
      %782 = vxpose.xlu0.b32.cont [8/16] 0.0, 128
      %783 = vxpose.xlu0.b32.cont [9/16] 0.0, 128
      %784 = vxpose.xlu0.b32.cont [10/16] 0.0, 128
      %785 = vxpose.xlu0.b32.cont [11/16] 0.0, 128
      %786 = vxpose.xlu0.b32.cont [12/16] 0.0, 128
      %787 = vxpose.xlu0.b32.cont [13/16] 0.0, 128
      %788 = vxpose.xlu0.b32.cont [14/16] 0.0, 128
      %789 = vxpose.xlu0.b32.cont [15/16] 0.0, 128
      %790 = vxpose.xlu0.b32.end [16/16] 0.0, 128
      %v791 = vpop.trf.xlu0
      %v792 = vpop.trf.xlu0
      %v793 = vpop.trf.xlu0
      %v794 = vpop.trf.xlu0
      %v795 = vpop.trf.xlu0
      %v796 = vpop.trf.xlu0
      %v797 = vpop.trf.xlu0
      %v798 = vpop.trf.xlu0
      %v799 = vpop.trf.xlu0
      %v800 = vpop.trf.xlu0
      %v801 = vpop.trf.xlu0
      %v802 = vpop.trf.xlu0
      %v803 = vpop.trf.xlu0
      %v804 = vpop.trf.xlu0
      %v805 = vpop.trf.xlu0
      %v806 = vpop.trf.xlu0
      %807 = vxpose.xlu0.b32.start [1/16] %v574, 128
      %808 = vxpose.xlu0.b32.cont [2/16] 0.0, 128
      %809 = vxpose.xlu0.b32.cont [3/16] 0.0, 128
      %810 = vxpose.xlu0.b32.cont [4/16] 0.0, 128
      %811 = vxpose.xlu0.b32.cont [5/16] 0.0, 128
      %812 = vxpose.xlu0.b32.cont [6/16] 0.0, 128
      %813 = vxpose.xlu0.b32.cont [7/16] 0.0, 128
      %814 = vxpose.xlu0.b32.cont [8/16] 0.0, 128
      %815 = vxpose.xlu0.b32.cont [9/16] 0.0, 128
      %816 = vxpose.xlu0.b32.cont [10/16] 0.0, 128
      %817 = vxpose.xlu0.b32.cont [11/16] 0.0, 128
      %818 = vxpose.xlu0.b32.cont [12/16] 0.0, 128
      %819 = vxpose.xlu0.b32.cont [13/16] 0.0, 128
      %820 = vxpose.xlu0.b32.cont [14/16] 0.0, 128
      %821 = vxpose.xlu0.b32.cont [15/16] 0.0, 128
      %822 = vxpose.xlu0.b32.end [16/16] 0.0, 128
      %v823 = vpop.trf.xlu0
      %v824 = vpop.trf.xlu0
      %v825 = vpop.trf.xlu0
      %v826 = vpop.trf.xlu0
      %v827 = vpop.trf.xlu0
      %v828 = vpop.trf.xlu0
      %v829 = vpop.trf.xlu0
      %v830 = vpop.trf.xlu0
      %v831 = vpop.trf.xlu0
      %v832 = vpop.trf.xlu0
      %v833 = vpop.trf.xlu0
      %v834 = vpop.trf.xlu0
      %v835 = vpop.trf.xlu0
      %v836 = vpop.trf.xlu0
      %v837 = vpop.trf.xlu0
      %v838 = vpop.trf.xlu0
      %839 = vxpose.xlu0.b32.start [1/16] %v575, 128
      %840 = vxpose.xlu0.b32.cont [2/16] 0.0, 128
      %841 = vxpose.xlu0.b32.cont [3/16] 0.0, 128
      %842 = vxpose.xlu0.b32.cont [4/16] 0.0, 128
      %843 = vxpose.xlu0.b32.cont [5/16] 0.0, 128
      %844 = vxpose.xlu0.b32.cont [6/16] 0.0, 128
      %845 = vxpose.xlu0.b32.cont [7/16] 0.0, 128
      %846 = vxpose.xlu0.b32.cont [8/16] 0.0, 128
      %847 = vxpose.xlu0.b32.cont [9/16] 0.0, 128
      %848 = vxpose.xlu0.b32.cont [10/16] 0.0, 128
      %849 = vxpose.xlu0.b32.cont [11/16] 0.0, 128
      %850 = vxpose.xlu0.b32.cont [12/16] 0.0, 128
      %851 = vxpose.xlu0.b32.cont [13/16] 0.0, 128
      %852 = vxpose.xlu0.b32.cont [14/16] 0.0, 128
      %853 = vxpose.xlu0.b32.cont [15/16] 0.0, 128
      %854 = vxpose.xlu0.b32.end [16/16] 0.0, 128
      %v855 = vpop.trf.xlu0
      %v856 = vpop.trf.xlu0
      %v857 = vpop.trf.xlu0
      %v858 = vpop.trf.xlu0
      %v859 = vpop.trf.xlu0
      %v860 = vpop.trf.xlu0
      %v861 = vpop.trf.xlu0
      %v862 = vpop.trf.xlu0
      %v863 = vpop.trf.xlu0
      %v864 = vpop.trf.xlu0
      %v865 = vpop.trf.xlu0
      %v866 = vpop.trf.xlu0
      %v867 = vpop.trf.xlu0
      %v868 = vpop.trf.xlu0
      %v869 = vpop.trf.xlu0
      %v870 = vpop.trf.xlu0
      %871 = vxpose.xlu0.b32.start [1/16] %v576, 128
      %872 = vxpose.xlu0.b32.cont [2/16] 0.0, 128
      %873 = vxpose.xlu0.b32.cont [3/16] 0.0, 128
      %874 = vxpose.xlu0.b32.cont [4/16] 0.0, 128
      %875 = vxpose.xlu0.b32.cont [5/16] 0.0, 128
      %876 = vxpose.xlu0.b32.cont [6/16] 0.0, 128
      %877 = vxpose.xlu0.b32.cont [7/16] 0.0, 128
      %878 = vxpose.xlu0.b32.cont [8/16] 0.0, 128
      %879 = vxpose.xlu0.b32.cont [9/16] 0.0, 128
      %880 = vxpose.xlu0.b32.cont [10/16] 0.0, 128
      %881 = vxpose.xlu0.b32.cont [11/16] 0.0, 128
      %882 = vxpose.xlu0.b32.cont [12/16] 0.0, 128
      %883 = vxpose.xlu0.b32.cont [13/16] 0.0, 128
      %884 = vxpose.xlu0.b32.cont [14/16] 0.0, 128
      %885 = vxpose.xlu0.b32.cont [15/16] 0.0, 128
      %886 = vxpose.xlu0.b32.end [16/16] 0.0, 128
      %v887 = vpop.trf.xlu0
      %v888 = vpop.trf.xlu0
      %v889 = vpop.trf.xlu0
      %v890 = vpop.trf.xlu0
      %v891 = vpop.trf.xlu0
      %v892 = vpop.trf.xlu0
      %v893 = vpop.trf.xlu0
      %v894 = vpop.trf.xlu0
      %v895 = vpop.trf.xlu0
      %v896 = vpop.trf.xlu0
      %v897 = vpop.trf.xlu0
      %v898 = vpop.trf.xlu0
      %v899 = vpop.trf.xlu0
      %v900 = vpop.trf.xlu0
      %v901 = vpop.trf.xlu0
      %v902 = vpop.trf.xlu0
      %903 = vxpose.xlu0.b32.start [1/16] %v577, 128
      %904 = vxpose.xlu0.b32.cont [2/16] 0.0, 128
      %905 = vxpose.xlu0.b32.cont [3/16] 0.0, 128
      %906 = vxpose.xlu0.b32.cont [4/16] 0.0, 128
      %907 = vxpose.xlu0.b32.cont [5/16] 0.0, 128
      %908 = vxpose.xlu0.b32.cont [6/16] 0.0, 128
      %909 = vxpose.xlu0.b32.cont [7/16] 0.0, 128
      %910 = vxpose.xlu0.b32.cont [8/16] 0.0, 128
      %911 = vxpose.xlu0.b32.cont [9/16] 0.0, 128
      %912 = vxpose.xlu0.b32.cont [10/16] 0.0, 128
      %913 = vxpose.xlu0.b32.cont [11/16] 0.0, 128
      %914 = vxpose.xlu0.b32.cont [12/16] 0.0, 128
      %915 = vxpose.xlu0.b32.cont [13/16] 0.0, 128
      %916 = vxpose.xlu0.b32.cont [14/16] 0.0, 128
      %917 = vxpose.xlu0.b32.cont [15/16] 0.0, 128
      %918 = vxpose.xlu0.b32.end [16/16] 0.0, 128
      %v919 = vpop.trf.xlu0
      %v920 = vpop.trf.xlu0
      %v921 = vpop.trf.xlu0
      %v922 = vpop.trf.xlu0
      %v923 = vpop.trf.xlu0
      %v924 = vpop.trf.xlu0
      %v925 = vpop.trf.xlu0
      %v926 = vpop.trf.xlu0
      %v927 = vpop.trf.xlu0
      %v928 = vpop.trf.xlu0
      %v929 = vpop.trf.xlu0
      %v930 = vpop.trf.xlu0
      %v931 = vpop.trf.xlu0
      %v932 = vpop.trf.xlu0
      %v933 = vpop.trf.xlu0
      %v934 = vpop.trf.xlu0
      %935 = vxpose.xlu0.b32.start [1/16] %v578, 128
      %936 = vxpose.xlu0.b32.cont [2/16] 0.0, 128
      %937 = vxpose.xlu0.b32.cont [3/16] 0.0, 128
      %938 = vxpose.xlu0.b32.cont [4/16] 0.0, 128
      %939 = vxpose.xlu0.b32.cont [5/16] 0.0, 128
      %940 = vxpose.xlu0.b32.cont [6/16] 0.0, 128
      %941 = vxpose.xlu0.b32.cont [7/16] 0.0, 128
      %942 = vxpose.xlu0.b32.cont [8/16] 0.0, 128
      %943 = vxpose.xlu0.b32.cont [9/16] 0.0, 128
      %944 = vxpose.xlu0.b32.cont [10/16] 0.0, 128
      %945 = vxpose.xlu0.b32.cont [11/16] 0.0, 128
      %946 = vxpose.xlu0.b32.cont [12/16] 0.0, 128
      %947 = vxpose.xlu0.b32.cont [13/16] 0.0, 128
      %948 = vxpose.xlu0.b32.cont [14/16] 0.0, 128
      %949 = vxpose.xlu0.b32.cont [15/16] 0.0, 128
      %950 = vxpose.xlu0.b32.end [16/16] 0.0, 128
      %v951 = vpop.trf.xlu0
      %v952 = vpop.trf.xlu0
      %v953 = vpop.trf.xlu0
      %v954 = vpop.trf.xlu0
      %v955 = vpop.trf.xlu0
      %v956 = vpop.trf.xlu0
      %v957 = vpop.trf.xlu0
      %v958 = vpop.trf.xlu0
      %v959 = vpop.trf.xlu0
      %v960 = vpop.trf.xlu0
      %v961 = vpop.trf.xlu0
      %v962 = vpop.trf.xlu0
      %v963 = vpop.trf.xlu0
      %v964 = vpop.trf.xlu0
      %v965 = vpop.trf.xlu0
      %v966 = vpop.trf.xlu0
      %vm967 = vcmask 64512
      %v969 = vsel %vm967, %v599, 0
      %v972 = vsel %vm967, %v600, 0
      %v975 = vsel %vm967, %v601, 0
      %v978 = vsel %vm967, %v602, 0
      %v981 = vsel %vm967, %v603, 0
      %v984 = vsel %vm967, %v604, 0
      %v987 = vsel %vm967, %v605, 0
      %v990 = vsel %vm967, %v727, 0
      %v993 = vsel %vm967, %v728, 0
      %v996 = vsel %vm967, %v729, 0
      %v999 = vsel %vm967, %v730, 0
      %v1002 = vsel %vm967, %v731, 0
      %v1005 = vsel %vm967, %v732, 0
      %v1008 = vsel %vm967, %v733, 0
      %1010 = vmatprep.subr.mxu0 0.0
      %1011 = vmatpush1.xpose.msra.mxu0 %v990
      %1012 = vmatprep.subr.mxu0 0.0
      %1013 = vmatpush1.xpose.msra.mxu0 %v993
      %1014 = vmatprep.subr.mxu0 0.0
      %1015 = vmatpush1.xpose.msra.mxu0 %v996
      %1016 = vmatprep.subr.mxu0 0.0
      %1017 = vmatpush1.xpose.msra.mxu0 %v999
      %1018 = vmatprep.subr.mxu0 0.0
      %1019 = vmatpush1.xpose.msra.mxu0 %v1002
      %1020 = vmatprep.subr.mxu0 0.0
      %1021 = vmatpush1.xpose.msra.mxu0 %v1005
      %1022 = vmatprep.subr.mxu0 0.0
      %1023 = vmatpush1.xpose.msra.mxu0 %v1008
      %1024 = vmatprep.subr.mxu0 0.0
      %1025 = vmatpush1.xpose.msra.mxu0 0.0
      %1026 = vmatprep.subr.mxu0 0.0
      %1027 = vmatpush1.xpose.msra.mxu0 0.0
      %1028 = vmatprep.subr.mxu0 0.0
      %1029 = vmatpush1.xpose.msra.mxu0 0.0
      %1030 = vmatprep.subr.mxu0 0.0
      %1031 = vmatpush1.xpose.msra.mxu0 0.0
      %1032 = vmatprep.subr.mxu0 0.0
      %1033 = vmatpush1.xpose.msra.mxu0 0.0
      %1034 = vmatprep.subr.mxu0 0.0
      %1035 = vmatpush1.xpose.msra.mxu0 0.0
      %1036 = vmatprep.subr.mxu0 0.0
      %1037 = vmatpush1.xpose.msra.mxu0 0.0
      %1038 = vmatprep.subr.mxu0 0.0
      %1039 = vmatpush1.xpose.msra.mxu0 0.0
      %1040 = vmatprep.subr.mxu0 0.0
      %1041 = vmatpush1.xpose.msra.mxu0 0.0
      %1042 = vmatprep.subr.mxu0 0.0
      %1043 = vmatpush1.xpose.msra.mxu0 0.0
      %1044 = vmatprep.subr.mxu0 0.0
      %1045 = vmatpush1.xpose.msra.mxu0 0.0
      %1046 = vmatprep.subr.mxu0 0.0
      %1047 = vmatpush1.xpose.msra.mxu0 0.0
      %1048 = vmatprep.subr.mxu0 0.0
      %1049 = vmatpush1.xpose.msra.mxu0 0.0
      %1050 = vmatprep.subr.mxu0 0.0
      %1051 = vmatpush1.xpose.msra.mxu0 0.0
      %1052 = vmatprep.subr.mxu0 0.0
      %1053 = vmatpush1.xpose.msra.mxu0 0.0
      %1054 = vmatprep.subr.mxu0 0.0
      %1055 = vmatpush1.xpose.msra.mxu0 0.0
      %1056 = vmatprep.subr.mxu0 0.0
      %1057 = vmatpush1.xpose.msra.mxu0 0.0
      %1058 = vmatprep.subr.mxu0 0.0
      %1059 = vmatpush1.xpose.msra.mxu0 0.0
      %1060 = vmatprep.subr.mxu0 0.0
      %1061 = vmatpush1.xpose.msra.mxu0 0.0
      %1062 = vmatprep.subr.mxu0 0.0
      %1063 = vmatpush1.xpose.msra.mxu0 0.0
      %1064 = vmatprep.subr.mxu0 0.0
      %1065 = vmatpush1.xpose.msra.mxu0 0.0
      %1066 = vmatprep.subr.mxu0 0.0
      %1067 = vmatpush1.xpose.msra.mxu0 0.0
      %1068 = vmatprep.subr.mxu0 0.0
      %1069 = vmatpush1.xpose.msra.mxu0 0.0
      %1070 = vmatprep.subr.mxu0 0.0
      %1071 = vmatpush1.xpose.msra.mxu0 0.0
      %1072 = vmatprep.subr.mxu0 0.0
      %1073 = vmatpush1.xpose.msra.mxu0 0.0
      %1074 = vmatprep.mubr.f32.mxu0 0.0
      %1075 = vmatmul.mubr.f32.gmra.mrb[0].mxu0 %v969
      %v1076 = vpop.f32.mrb[0].mxu0
      %v1077 = vadd.f32 0.0, %v1076
      %v1078 = vpop.f32.mrb[0].mxu0
      %1079 = vmatprep.mubr.f32.mxu0 0.0
      %1080 = vmatmul.mubr.f32.gmra.mrb[0].mxu0 %v972
      %v1081 = vpop.f32.mrb[0].mxu0
      %v1082 = vadd.f32 0.0, %v1081
      %v1083 = vpop.f32.mrb[0].mxu0
      %1084 = vmatprep.mubr.f32.mxu0 0.0
      %1085 = vmatmul.mubr.f32.gmra.mrb[0].mxu0 %v975
      %v1086 = vpop.f32.mrb[0].mxu0
      %v1087 = vadd.f32 0.0, %v1086
      %v1088 = vpop.f32.mrb[0].mxu0
      %1089 = vmatprep.mubr.f32.mxu0 0.0
      %1090 = vmatmul.mubr.f32.gmra.mrb[0].mxu0 %v978
      %v1091 = vpop.f32.mrb[0].mxu0
      %v1092 = vadd.f32 0.0, %v1091
      %v1093 = vpop.f32.mrb[0].mxu0
      %1094 = vmatprep.mubr.f32.mxu0 0.0
      %1095 = vmatmul.mubr.f32.gmra.mrb[0].mxu0 %v981
      %v1096 = vpop.f32.mrb[0].mxu0
      %v1097 = vadd.f32 0.0, %v1096
      %v1098 = vpop.f32.mrb[0].mxu0
      %1099 = vmatprep.mubr.f32.mxu0 0.0
      %1100 = vmatmul.mubr.f32.gmra.mrb[0].mxu0 %v984
      %v1101 = vpop.f32.mrb[0].mxu0
      %v1102 = vadd.f32 0.0, %v1101
      %v1103 = vpop.f32.mrb[0].mxu0
      %1104 = vmatprep.mubr.f32.mxu0 0.0
      %1105 = vmatmul.mubr.f32.gmra.mrb[0].mxu0 %v987
      %v1106 = vpop.f32.mrb[0].mxu0
      %v1107 = vadd.f32 0.0, %v1106
      %v1108 = vpop.f32.mrb[0].mxu0
      %1109 = vdwg.mxu0
      %v1111 = vsel %vm967, %v606, 0
      %v1114 = vsel %vm967, %v607, 0
      %v1117 = vsel %vm967, %v608, 0
      %v1120 = vsel %vm967, %v609, 0
      %v1123 = vsel %vm967, %v610, 0
      %v1126 = vsel %vm967, %v611, 0
      %v1129 = vsel %vm967, %v612, 0
      %v1132 = vsel %vm967, %v734, 0
      %v1135 = vsel %vm967, %v735, 0
      %v1138 = vsel %vm967, %v736, 0
      %v1141 = vsel %vm967, %v737, 0
      %v1144 = vsel %vm967, %v738, 0
      %v1147 = vsel %vm967, %v739, 0
      %v1150 = vsel %vm967, %v740, 0
      %1152 = vmatprep.subr.mxu0 0.0
      %1153 = vmatpush1.xpose.msra.mxu0 %v1132
      %1154 = vmatprep.subr.mxu0 0.0
      %1155 = vmatpush1.xpose.msra.mxu0 %v1135
      %1156 = vmatprep.subr.mxu0 0.0
      %1157 = vmatpush1.xpose.msra.mxu0 %v1138
      %1158 = vmatprep.subr.mxu0 0.0
      %1159 = vmatpush1.xpose.msra.mxu0 %v1141
      %1160 = vmatprep.subr.mxu0 0.0
      %1161 = vmatpush1.xpose.msra.mxu0 %v1144
      %1162 = vmatprep.subr.mxu0 0.0
      %1163 = vmatpush1.xpose.msra.mxu0 %v1147
      %1164 = vmatprep.subr.mxu0 0.0
      %1165 = vmatpush1.xpose.msra.mxu0 %v1150
      %1166 = vmatprep.subr.mxu0 0.0
      %1167 = vmatpush1.xpose.msra.mxu0 0.0
      %1168 = vmatprep.subr.mxu0 0.0
      %1169 = vmatpush1.xpose.msra.mxu0 0.0
      %1170 = vmatprep.subr.mxu0 0.0
      %1171 = vmatpush1.xpose.msra.mxu0 0.0
      %1172 = vmatprep.subr.mxu0 0.0
      %1173 = vmatpush1.xpose.msra.mxu0 0.0
      %1174 = vmatprep.subr.mxu0 0.0
      %1175 = vmatpush1.xpose.msra.mxu0 0.0
      %1176 = vmatprep.subr.mxu0 0.0
      %1177 = vmatpush1.xpose.msra.mxu0 0.0
      %1178 = vmatprep.subr.mxu0 0.0
      %1179 = vmatpush1.xpose.msra.mxu0 0.0
      %1180 = vmatprep.subr.mxu0 0.0
      %1181 = vmatpush1.xpose.msra.mxu0 0.0
      %1182 = vmatprep.subr.mxu0 0.0
      %1183 = vmatpush1.xpose.msra.mxu0 0.0
      %1184 = vmatprep.subr.mxu0 0.0
      %1185 = vmatpush1.xpose.msra.mxu0 0.0
      %1186 = vmatprep.subr.mxu0 0.0
      %1187 = vmatpush1.xpose.msra.mxu0 0.0
      %1188 = vmatprep.subr.mxu0 0.0
      %1189 = vmatpush1.xpose.msra.mxu0 0.0
      %1190 = vmatprep.subr.mxu0 0.0
      %1191 = vmatpush1.xpose.msra.mxu0 0.0
      %1192 = vmatprep.subr.mxu0 0.0
      %1193 = vmatpush1.xpose.msra.mxu0 0.0
      %1194 = vmatprep.subr.mxu0 0.0
      %1195 = vmatpush1.xpose.msra.mxu0 0.0
      %1196 = vmatprep.subr.mxu0 0.0
      %1197 = vmatpush1.xpose.msra.mxu0 0.0
      %1198 = vmatprep.subr.mxu0 0.0
      %1199 = vmatpush1.xpose.msra.mxu0 0.0
      %1200 = vmatprep.subr.mxu0 0.0
      %1201 = vmatpush1.xpose.msra.mxu0 0.0
      %1202 = vmatprep.subr.mxu0 0.0
      %1203 = vmatpush1.xpose.msra.mxu0 0.0
      %1204 = vmatprep.subr.mxu0 0.0
      %1205 = vmatpush1.xpose.msra.mxu0 0.0
      %1206 = vmatprep.subr.mxu0 0.0
      %1207 = vmatpush1.xpose.msra.mxu0 0.0
      %1208 = vmatprep.subr.mxu0 0.0
      %1209 = vmatpush1.xpose.msra.mxu0 0.0
      %1210 = vmatprep.subr.mxu0 0.0
      %1211 = vmatpush1.xpose.msra.mxu0 0.0
      %1212 = vmatprep.subr.mxu0 0.0
      %1213 = vmatpush1.xpose.msra.mxu0 0.0
      %1214 = vmatprep.subr.mxu0 0.0
      %1215 = vmatpush1.xpose.msra.mxu0 0.0
      %1216 = vmatprep.mubr.f32.mxu0 0.0
      %1217 = vmatmul.mubr.f32.gmra.mrb[0].mxu0 %v1111
      %v1218 = vpop.f32.mrb[0].mxu0
      %v1219 = vadd.f32 0.0, %v1218
      %v1220 = vpop.f32.mrb[0].mxu0
      %1221 = vmatprep.mubr.f32.mxu0 0.0
      %1222 = vmatmul.mubr.f32.gmra.mrb[0].mxu0 %v1114
      %v1223 = vpop.f32.mrb[0].mxu0
      %v1224 = vadd.f32 0.0, %v1223
      %v1225 = vpop.f32.mrb[0].mxu0
      %1226 = vmatprep.mubr.f32.mxu0 0.0
      %1227 = vmatmul.mubr.f32.gmra.mrb[0].mxu0 %v1117
      %v1228 = vpop.f32.mrb[0].mxu0
      %v1229 = vadd.f32 0.0, %v1228
      %v1230 = vpop.f32.mrb[0].mxu0
      %1231 = vmatprep.mubr.f32.mxu0 0.0
      %1232 = vmatmul.mubr.f32.gmra.mrb[0].mxu0 %v1120
      %v1233 = vpop.f32.mrb[0].mxu0
      %v1234 = vadd.f32 0.0, %v1233
      %v1235 = vpop.f32.mrb[0].mxu0
      %1236 = vmatprep.mubr.f32.mxu0 0.0
      %1237 = vmatmul.mubr.f32.gmra.mrb[0].mxu0 %v1123
      %v1238 = vpop.f32.mrb[0].mxu0
      %v1239 = vadd.f32 0.0, %v1238
      %v1240 = vpop.f32.mrb[0].mxu0
      %1241 = vmatprep.mubr.f32.mxu0 0.0
      %1242 = vmatmul.mubr.f32.gmra.mrb[0].mxu0 %v1126
      %v1243 = vpop.f32.mrb[0].mxu0
      %v1244 = vadd.f32 0.0, %v1243
      %v1245 = vpop.f32.mrb[0].mxu0
      %1246 = vmatprep.mubr.f32.mxu0 0.0
      %1247 = vmatmul.mubr.f32.gmra.mrb[0].mxu0 %v1129
      %v1248 = vpop.f32.mrb[0].mxu0
      %v1249 = vadd.f32 0.0, %v1248
      %v1250 = vpop.f32.mrb[0].mxu0
      %1251 = vdwg.mxu0
      %v1253 = vsel %vm967, %v631, 0
      %v1256 = vsel %vm967, %v632, 0
      %v1259 = vsel %vm967, %v633, 0
      %v1262 = vsel %vm967, %v634, 0
      %v1265 = vsel %vm967, %v635, 0
      %v1268 = vsel %vm967, %v636, 0
      %v1271 = vsel %vm967, %v637, 0
      %v1274 = vsel %vm967, %v759, 0
      %v1277 = vsel %vm967, %v760, 0
      %v1280 = vsel %vm967, %v761, 0
      %v1283 = vsel %vm967, %v762, 0
      %v1286 = vsel %vm967, %v763, 0
      %v1289 = vsel %vm967, %v764, 0
      %v1292 = vsel %vm967, %v765, 0
      %1294 = vmatprep.subr.mxu0 0.0
      %1295 = vmatpush1.xpose.msra.mxu0 %v1274
      %1296 = vmatprep.subr.mxu0 0.0
      %1297 = vmatpush1.xpose.msra.mxu0 %v1277
      %1298 = vmatprep.subr.mxu0 0.0
      %1299 = vmatpush1.xpose.msra.mxu0 %v1280
      %1300 = vmatprep.subr.mxu0 0.0
      %1301 = vmatpush1.xpose.msra.mxu0 %v1283
      %1302 = vmatprep.subr.mxu0 0.0
      %1303 = vmatpush1.xpose.msra.mxu0 %v1286
      %1304 = vmatprep.subr.mxu0 0.0
      %1305 = vmatpush1.xpose.msra.mxu0 %v1289
      %1306 = vmatprep.subr.mxu0 0.0
      %1307 = vmatpush1.xpose.msra.mxu0 %v1292
      %1308 = vmatprep.subr.mxu0 0.0
      %1309 = vmatpush1.xpose.msra.mxu0 0.0
      %1310 = vmatprep.subr.mxu0 0.0
      %1311 = vmatpush1.xpose.msra.mxu0 0.0
      %1312 = vmatprep.subr.mxu0 0.0
      %1313 = vmatpush1.xpose.msra.mxu0 0.0
      %1314 = vmatprep.subr.mxu0 0.0
      %1315 = vmatpush1.xpose.msra.mxu0 0.0
      %1316 = vmatprep.subr.mxu0 0.0
      %1317 = vmatpush1.xpose.msra.mxu0 0.0
      %1318 = vmatprep.subr.mxu0 0.0
      %1319 = vmatpush1.xpose.msra.mxu0 0.0
      %1320 = vmatprep.subr.mxu0 0.0
      %1321 = vmatpush1.xpose.msra.mxu0 0.0
      %1322 = vmatprep.subr.mxu0 0.0
      %1323 = vmatpush1.xpose.msra.mxu0 0.0
      %1324 = vmatprep.subr.mxu0 0.0
      %1325 = vmatpush1.xpose.msra.mxu0 0.0
      %1326 = vmatprep.subr.mxu0 0.0
      %1327 = vmatpush1.xpose.msra.mxu0 0.0
      %1328 = vmatprep.subr.mxu0 0.0
      %1329 = vmatpush1.xpose.msra.mxu0 0.0
      %1330 = vmatprep.subr.mxu0 0.0
      %1331 = vmatpush1.xpose.msra.mxu0 0.0
      %1332 = vmatprep.subr.mxu0 0.0
      %1333 = vmatpush1.xpose.msra.mxu0 0.0
      %1334 = vmatprep.subr.mxu0 0.0
      %1335 = vmatpush1.xpose.msra.mxu0 0.0
      %1336 = vmatprep.subr.mxu0 0.0
      %1337 = vmatpush1.xpose.msra.mxu0 0.0
      %1338 = vmatprep.subr.mxu0 0.0
      %1339 = vmatpush1.xpose.msra.mxu0 0.0
      %1340 = vmatprep.subr.mxu0 0.0
      %1341 = vmatpush1.xpose.msra.mxu0 0.0
      %1342 = vmatprep.subr.mxu0 0.0
      %1343 = vmatpush1.xpose.msra.mxu0 0.0
      %1344 = vmatprep.subr.mxu0 0.0
      %1345 = vmatpush1.xpose.msra.mxu0 0.0
      %1346 = vmatprep.subr.mxu0 0.0
      %1347 = vmatpush1.xpose.msra.mxu0 0.0
      %1348 = vmatprep.subr.mxu0 0.0
      %1349 = vmatpush1.xpose.msra.mxu0 0.0
      %1350 = vmatprep.subr.mxu0 0.0
      %1351 = vmatpush1.xpose.msra.mxu0 0.0
      %1352 = vmatprep.subr.mxu0 0.0
      %1353 = vmatpush1.xpose.msra.mxu0 0.0
      %1354 = vmatprep.subr.mxu0 0.0
      %1355 = vmatpush1.xpose.msra.mxu0 0.0
      %1356 = vmatprep.subr.mxu0 0.0
      %1357 = vmatpush1.xpose.msra.mxu0 0.0
      %1358 = vmatprep.mubr.f32.mxu0 0.0
      %1359 = vmatmul.mubr.f32.gmra.mrb[0].mxu0 %v1253
      %v1360 = vpop.f32.mrb[0].mxu0
      %v1361 = vadd.f32 0.0, %v1360
      %v1362 = vpop.f32.mrb[0].mxu0
      %1363 = vmatprep.mubr.f32.mxu0 0.0
      %1364 = vmatmul.mubr.f32.gmra.mrb[0].mxu0 %v1256
      %v1365 = vpop.f32.mrb[0].mxu0
      %v1366 = vadd.f32 0.0, %v1365
      %v1367 = vpop.f32.mrb[0].mxu0
      %1368 = vmatprep.mubr.f32.mxu0 0.0
      %1369 = vmatmul.mubr.f32.gmra.mrb[0].mxu0 %v1259
      %v1370 = vpop.f32.mrb[0].mxu0
      %v1371 = vadd.f32 0.0, %v1370
      %v1372 = vpop.f32.mrb[0].mxu0
      %1373 = vmatprep.mubr.f32.mxu0 0.0
      %1374 = vmatmul.mubr.f32.gmra.mrb[0].mxu0 %v1262
      %v1375 = vpop.f32.mrb[0].mxu0
      %v1376 = vadd.f32 0.0, %v1375
      %v1377 = vpop.f32.mrb[0].mxu0
      %1378 = vmatprep.mubr.f32.mxu0 0.0
      %1379 = vmatmul.mubr.f32.gmra.mrb[0].mxu0 %v1265
      %v1380 = vpop.f32.mrb[0].mxu0
      %v1381 = vadd.f32 0.0, %v1380
      %v1382 = vpop.f32.mrb[0].mxu0
      %1383 = vmatprep.mubr.f32.mxu0 0.0
      %1384 = vmatmul.mubr.f32.gmra.mrb[0].mxu0 %v1268
      %v1385 = vpop.f32.mrb[0].mxu0
      %v1386 = vadd.f32 0.0, %v1385
      %v1387 = vpop.f32.mrb[0].mxu0
      %1388 = vmatprep.mubr.f32.mxu0 0.0
      %1389 = vmatmul.mubr.f32.gmra.mrb[0].mxu0 %v1271
      %v1390 = vpop.f32.mrb[0].mxu0
      %v1391 = vadd.f32 0.0, %v1390
      %v1392 = vpop.f32.mrb[0].mxu0
      %1393 = vdwg.mxu0
      %v1395 = vsel %vm967, %v638, 0
      %v1398 = vsel %vm967, %v639, 0
      %v1401 = vsel %vm967, %v640, 0
      %v1404 = vsel %vm967, %v641, 0
      %v1407 = vsel %vm967, %v642, 0
      %v1410 = vsel %vm967, %v643, 0
      %v1413 = vsel %vm967, %v644, 0
      %v1416 = vsel %vm967, %v766, 0
      %v1419 = vsel %vm967, %v767, 0
      %v1422 = vsel %vm967, %v768, 0
      %v1425 = vsel %vm967, %v769, 0
      %v1428 = vsel %vm967, %v770, 0
      %v1431 = vsel %vm967, %v771, 0
      %v1434 = vsel %vm967, %v772, 0
      %1436 = vmatprep.subr.mxu0 0.0
      %1437 = vmatpush1.xpose.msra.mxu0 %v1416
      %1438 = vmatprep.subr.mxu0 0.0
      %1439 = vmatpush1.xpose.msra.mxu0 %v1419
      %1440 = vmatprep.subr.mxu0 0.0
      %1441 = vmatpush1.xpose.msra.mxu0 %v1422
      %1442 = vmatprep.subr.mxu0 0.0
      %1443 = vmatpush1.xpose.msra.mxu0 %v1425
      %1444 = vmatprep.subr.mxu0 0.0
      %1445 = vmatpush1.xpose.msra.mxu0 %v1428
      %1446 = vmatprep.subr.mxu0 0.0
      %1447 = vmatpush1.xpose.msra.mxu0 %v1431
      %1448 = vmatprep.subr.mxu0 0.0
      %1449 = vmatpush1.xpose.msra.mxu0 %v1434
      %1450 = vmatprep.subr.mxu0 0.0
      %1451 = vmatpush1.xpose.msra.mxu0 0.0
      %1452 = vmatprep.subr.mxu0 0.0
      %1453 = vmatpush1.xpose.msra.mxu0 0.0
      %1454 = vmatprep.subr.mxu0 0.0
      %1455 = vmatpush1.xpose.msra.mxu0 0.0
      %1456 = vmatprep.subr.mxu0 0.0
      %1457 = vmatpush1.xpose.msra.mxu0 0.0
      %1458 = vmatprep.subr.mxu0 0.0
      %1459 = vmatpush1.xpose.msra.mxu0 0.0
      %1460 = vmatprep.subr.mxu0 0.0
      %1461 = vmatpush1.xpose.msra.mxu0 0.0
      %1462 = vmatprep.subr.mxu0 0.0
      %1463 = vmatpush1.xpose.msra.mxu0 0.0
      %1464 = vmatprep.subr.mxu0 0.0
      %1465 = vmatpush1.xpose.msra.mxu0 0.0
      %1466 = vmatprep.subr.mxu0 0.0
      %1467 = vmatpush1.xpose.msra.mxu0 0.0
      %1468 = vmatprep.subr.mxu0 0.0
      %1469 = vmatpush1.xpose.msra.mxu0 0.0
      %1470 = vmatprep.subr.mxu0 0.0
      %1471 = vmatpush1.xpose.msra.mxu0 0.0
      %1472 = vmatprep.subr.mxu0 0.0
      %1473 = vmatpush1.xpose.msra.mxu0 0.0
      %1474 = vmatprep.subr.mxu0 0.0
      %1475 = vmatpush1.xpose.msra.mxu0 0.0
      %1476 = vmatprep.subr.mxu0 0.0
      %1477 = vmatpush1.xpose.msra.mxu0 0.0
      %1478 = vmatprep.subr.mxu0 0.0
      %1479 = vmatpush1.xpose.msra.mxu0 0.0
      %1480 = vmatprep.subr.mxu0 0.0
      %1481 = vmatpush1.xpose.msra.mxu0 0.0
      %1482 = vmatprep.subr.mxu0 0.0
      %1483 = vmatpush1.xpose.msra.mxu0 0.0
      %1484 = vmatprep.subr.mxu0 0.0
      %1485 = vmatpush1.xpose.msra.mxu0 0.0
      %1486 = vmatprep.subr.mxu0 0.0
      %1487 = vmatpush1.xpose.msra.mxu0 0.0
      %1488 = vmatprep.subr.mxu0 0.0
      %1489 = vmatpush1.xpose.msra.mxu0 0.0
      %1490 = vmatprep.subr.mxu0 0.0
      %1491 = vmatpush1.xpose.msra.mxu0 0.0
      %1492 = vmatprep.subr.mxu0 0.0
      %1493 = vmatpush1.xpose.msra.mxu0 0.0
      %1494 = vmatprep.subr.mxu0 0.0
      %1495 = vmatpush1.xpose.msra.mxu0 0.0
      %1496 = vmatprep.subr.mxu0 0.0
      %1497 = vmatpush1.xpose.msra.mxu0 0.0
      %1498 = vmatprep.subr.mxu0 0.0
      %1499 = vmatpush1.xpose.msra.mxu0 0.0
      %1500 = vmatprep.mubr.f32.mxu0 0.0
      %1501 = vmatmul.mubr.f32.gmra.mrb[0].mxu0 %v1395
      %v1502 = vpop.f32.mrb[0].mxu0
      %v1503 = vadd.f32 0.0, %v1502
      %v1504 = vpop.f32.mrb[0].mxu0
      %1505 = vmatprep.mubr.f32.mxu0 0.0
      %1506 = vmatmul.mubr.f32.gmra.mrb[0].mxu0 %v1398
      %v1507 = vpop.f32.mrb[0].mxu0
      %v1508 = vadd.f32 0.0, %v1507
      %v1509 = vpop.f32.mrb[0].mxu0
      %1510 = vmatprep.mubr.f32.mxu0 0.0
      %1511 = vmatmul.mubr.f32.gmra.mrb[0].mxu0 %v1401
      %v1512 = vpop.f32.mrb[0].mxu0
      %v1513 = vadd.f32 0.0, %v1512
      %v1514 = vpop.f32.mrb[0].mxu0
      %1515 = vmatprep.mubr.f32.mxu0 0.0
      %1516 = vmatmul.mubr.f32.gmra.mrb[0].mxu0 %v1404
      %v1517 = vpop.f32.mrb[0].mxu0
      %v1518 = vadd.f32 0.0, %v1517
      %v1519 = vpop.f32.mrb[0].mxu0
      %1520 = vmatprep.mubr.f32.mxu0 0.0
      %1521 = vmatmul.mubr.f32.gmra.mrb[0].mxu0 %v1407
      %v1522 = vpop.f32.mrb[0].mxu0
      %v1523 = vadd.f32 0.0, %v1522
      %v1524 = vpop.f32.mrb[0].mxu0
      %1525 = vmatprep.mubr.f32.mxu0 0.0
      %1526 = vmatmul.mubr.f32.gmra.mrb[0].mxu0 %v1410
      %v1527 = vpop.f32.mrb[0].mxu0
      %v1528 = vadd.f32 0.0, %v1527
      %v1529 = vpop.f32.mrb[0].mxu0
      %1530 = vmatprep.mubr.f32.mxu0 0.0
      %1531 = vmatmul.mubr.f32.gmra.mrb[0].mxu0 %v1413
      %v1532 = vpop.f32.mrb[0].mxu0
      %v1533 = vadd.f32 0.0, %v1532
      %v1534 = vpop.f32.mrb[0].mxu0
      %1535 = vdwg.mxu0
      %v1537 = vsel %vm967, %v663, 0
      %v1540 = vsel %vm967, %v664, 0
      %v1543 = vsel %vm967, %v665, 0
      %v1546 = vsel %vm967, %v666, 0
      %v1549 = vsel %vm967, %v667, 0
      %v1552 = vsel %vm967, %v668, 0
      %v1555 = vsel %vm967, %v669, 0
      %v1558 = vsel %vm967, %v791, 0
      %v1561 = vsel %vm967, %v792, 0
      %v1564 = vsel %vm967, %v793, 0
      %v1567 = vsel %vm967, %v794, 0
      %v1570 = vsel %vm967, %v795, 0
      %v1573 = vsel %vm967, %v796, 0
      %v1576 = vsel %vm967, %v797, 0
      %1578 = vmatprep.subr.mxu0 0.0
      %1579 = vmatpush1.xpose.msra.mxu0 %v1558
      %1580 = vmatprep.subr.mxu0 0.0
      %1581 = vmatpush1.xpose.msra.mxu0 %v1561
      %1582 = vmatprep.subr.mxu0 0.0
      %1583 = vmatpush1.xpose.msra.mxu0 %v1564
      %1584 = vmatprep.subr.mxu0 0.0
      %1585 = vmatpush1.xpose.msra.mxu0 %v1567
      %1586 = vmatprep.subr.mxu0 0.0
      %1587 = vmatpush1.xpose.msra.mxu0 %v1570
      %1588 = vmatprep.subr.mxu0 0.0
      %1589 = vmatpush1.xpose.msra.mxu0 %v1573
      %1590 = vmatprep.subr.mxu0 0.0
      %1591 = vmatpush1.xpose.msra.mxu0 %v1576
      %1592 = vmatprep.subr.mxu0 0.0
      %1593 = vmatpush1.xpose.msra.mxu0 0.0
      %1594 = vmatprep.subr.mxu0 0.0
      %1595 = vmatpush1.xpose.msra.mxu0 0.0
      %1596 = vmatprep.subr.mxu0 0.0
      %1597 = vmatpush1.xpose.msra.mxu0 0.0
      %1598 = vmatprep.subr.mxu0 0.0
      %1599 = vmatpush1.xpose.msra.mxu0 0.0
      %1600 = vmatprep.subr.mxu0 0.0
      %1601 = vmatpush1.xpose.msra.mxu0 0.0
      %1602 = vmatprep.subr.mxu0 0.0
      %1603 = vmatpush1.xpose.msra.mxu0 0.0
      %1604 = vmatprep.subr.mxu0 0.0
      %1605 = vmatpush1.xpose.msra.mxu0 0.0
      %1606 = vmatprep.subr.mxu0 0.0
      %1607 = vmatpush1.xpose.msra.mxu0 0.0
      %1608 = vmatprep.subr.mxu0 0.0
      %1609 = vmatpush1.xpose.msra.mxu0 0.0
      %1610 = vmatprep.subr.mxu0 0.0
      %1611 = vmatpush1.xpose.msra.mxu0 0.0
      %1612 = vmatprep.subr.mxu0 0.0
      %1613 = vmatpush1.xpose.msra.mxu0 0.0
      %1614 = vmatprep.subr.mxu0 0.0
      %1615 = vmatpush1.xpose.msra.mxu0 0.0
      %1616 = vmatprep.subr.mxu0 0.0
      %1617 = vmatpush1.xpose.msra.mxu0 0.0
      %1618 = vmatprep.subr.mxu0 0.0
      %1619 = vmatpush1.xpose.msra.mxu0 0.0
      %1620 = vmatprep.subr.mxu0 0.0
      %1621 = vmatpush1.xpose.msra.mxu0 0.0
      %1622 = vmatprep.subr.mxu0 0.0
      %1623 = vmatpush1.xpose.msra.mxu0 0.0
      %1624 = vmatprep.subr.mxu0 0.0
      %1625 = vmatpush1.xpose.msra.mxu0 0.0
      %1626 = vmatprep.subr.mxu0 0.0
      %1627 = vmatpush1.xpose.msra.mxu0 0.0
      %1628 = vmatprep.subr.mxu0 0.0
      %1629 = vmatpush1.xpose.msra.mxu0 0.0
      %1630 = vmatprep.subr.mxu0 0.0
      %1631 = vmatpush1.xpose.msra.mxu0 0.0
      %1632 = vmatprep.subr.mxu0 0.0
      %1633 = vmatpush1.xpose.msra.mxu0 0.0
      %1634 = vmatprep.subr.mxu0 0.0
      %1635 = vmatpush1.xpose.msra.mxu0 0.0
      %1636 = vmatprep.subr.mxu0 0.0
      %1637 = vmatpush1.xpose.msra.mxu0 0.0
      %1638 = vmatprep.subr.mxu0 0.0
      %1639 = vmatpush1.xpose.msra.mxu0 0.0
      %1640 = vmatprep.subr.mxu0 0.0
      %1641 = vmatpush1.xpose.msra.mxu0 0.0
      %1642 = vmatprep.mubr.f32.mxu0 0.0
      %1643 = vmatmul.mubr.f32.gmra.mrb[0].mxu0 %v1537
      %v1644 = vpop.f32.mrb[0].mxu0
      %v1645 = vadd.f32 0.0, %v1644
      %v1646 = vpop.f32.mrb[0].mxu0
      %1647 = vmatprep.mubr.f32.mxu0 0.0
      %1648 = vmatmul.mubr.f32.gmra.mrb[0].mxu0 %v1540
      %v1649 = vpop.f32.mrb[0].mxu0
      %v1650 = vadd.f32 0.0, %v1649
      %v1651 = vpop.f32.mrb[0].mxu0
      %1652 = vmatprep.mubr.f32.mxu0 0.0
      %1653 = vmatmul.mubr.f32.gmra.mrb[0].mxu0 %v1543
      %v1654 = vpop.f32.mrb[0].mxu0
      %v1655 = vadd.f32 0.0, %v1654
      %v1656 = vpop.f32.mrb[0].mxu0
      %1657 = vmatprep.mubr.f32.mxu0 0.0
      %1658 = vmatmul.mubr.f32.gmra.mrb[0].mxu0 %v1546
      %v1659 = vpop.f32.mrb[0].mxu0
      %v1660 = vadd.f32 0.0, %v1659
      %v1661 = vpop.f32.mrb[0].mxu0
      %1662 = vmatprep.mubr.f32.mxu0 0.0
      %1663 = vmatmul.mubr.f32.gmra.mrb[0].mxu0 %v1549
      %v1664 = vpop.f32.mrb[0].mxu0
      %v1665 = vadd.f32 0.0, %v1664
      %v1666 = vpop.f32.mrb[0].mxu0
      %1667 = vmatprep.mubr.f32.mxu0 0.0
      %1668 = vmatmul.mubr.f32.gmra.mrb[0].mxu0 %v1552
      %v1669 = vpop.f32.mrb[0].mxu0
      %v1670 = vadd.f32 0.0, %v1669
      %v1671 = vpop.f32.mrb[0].mxu0
      %1672 = vmatprep.mubr.f32.mxu0 0.0
      %1673 = vmatmul.mubr.f32.gmra.mrb[0].mxu0 %v1555
      %v1674 = vpop.f32.mrb[0].mxu0
      %v1675 = vadd.f32 0.0, %v1674
      %v1676 = vpop.f32.mrb[0].mxu0
      %1677 = vdwg.mxu0
      %v1679 = vsel %vm967, %v670, 0
      %v1682 = vsel %vm967, %v671, 0
      %v1685 = vsel %vm967, %v672, 0
      %v1688 = vsel %vm967, %v673, 0
      %v1691 = vsel %vm967, %v674, 0
      %v1694 = vsel %vm967, %v675, 0
      %v1697 = vsel %vm967, %v676, 0
      %v1700 = vsel %vm967, %v798, 0
      %v1703 = vsel %vm967, %v799, 0
      %v1706 = vsel %vm967, %v800, 0
      %v1709 = vsel %vm967, %v801, 0
      %v1712 = vsel %vm967, %v802, 0
      %v1715 = vsel %vm967, %v803, 0
      %v1718 = vsel %vm967, %v804, 0
      %1720 = vmatprep.subr.mxu0 0.0
      %1721 = vmatpush1.xpose.msra.mxu0 %v1700
      %1722 = vmatprep.subr.mxu0 0.0
      %1723 = vmatpush1.xpose.msra.mxu0 %v1703
      %1724 = vmatprep.subr.mxu0 0.0
      %1725 = vmatpush1.xpose.msra.mxu0 %v1706
      %1726 = vmatprep.subr.mxu0 0.0
      %1727 = vmatpush1.xpose.msra.mxu0 %v1709
      %1728 = vmatprep.subr.mxu0 0.0
      %1729 = vmatpush1.xpose.msra.mxu0 %v1712
      %1730 = vmatprep.subr.mxu0 0.0
      %1731 = vmatpush1.xpose.msra.mxu0 %v1715
      %1732 = vmatprep.subr.mxu0 0.0
      %1733 = vmatpush1.xpose.msra.mxu0 %v1718
      %1734 = vmatprep.subr.mxu0 0.0
      %1735 = vmatpush1.xpose.msra.mxu0 0.0
      %1736 = vmatprep.subr.mxu0 0.0
      %1737 = vmatpush1.xpose.msra.mxu0 0.0
      %1738 = vmatprep.subr.mxu0 0.0
      %1739 = vmatpush1.xpose.msra.mxu0 0.0
      %1740 = vmatprep.subr.mxu0 0.0
      %1741 = vmatpush1.xpose.msra.mxu0 0.0
      %1742 = vmatprep.subr.mxu0 0.0
      %1743 = vmatpush1.xpose.msra.mxu0 0.0
      %1744 = vmatprep.subr.mxu0 0.0
      %1745 = vmatpush1.xpose.msra.mxu0 0.0
      %1746 = vmatprep.subr.mxu0 0.0
      %1747 = vmatpush1.xpose.msra.mxu0 0.0
      %1748 = vmatprep.subr.mxu0 0.0
      %1749 = vmatpush1.xpose.msra.mxu0 0.0
      %1750 = vmatprep.subr.mxu0 0.0
      %1751 = vmatpush1.xpose.msra.mxu0 0.0
      %1752 = vmatprep.subr.mxu0 0.0
      %1753 = vmatpush1.xpose.msra.mxu0 0.0
      %1754 = vmatprep.subr.mxu0 0.0
      %1755 = vmatpush1.xpose.msra.mxu0 0.0
      %1756 = vmatprep.subr.mxu0 0.0
      %1757 = vmatpush1.xpose.msra.mxu0 0.0
      %1758 = vmatprep.subr.mxu0 0.0
      %1759 = vmatpush1.xpose.msra.mxu0 0.0
      %1760 = vmatprep.subr.mxu0 0.0
      %1761 = vmatpush1.xpose.msra.mxu0 0.0
      %1762 = vmatprep.subr.mxu0 0.0
      %1763 = vmatpush1.xpose.msra.mxu0 0.0
      %1764 = vmatprep.subr.mxu0 0.0
      %1765 = vmatpush1.xpose.msra.mxu0 0.0
      %1766 = vmatprep.subr.mxu0 0.0
      %1767 = vmatpush1.xpose.msra.mxu0 0.0
      %1768 = vmatprep.subr.mxu0 0.0
      %1769 = vmatpush1.xpose.msra.mxu0 0.0
      %1770 = vmatprep.subr.mxu0 0.0
      %1771 = vmatpush1.xpose.msra.mxu0 0.0
      %1772 = vmatprep.subr.mxu0 0.0
      %1773 = vmatpush1.xpose.msra.mxu0 0.0
      %1774 = vmatprep.subr.mxu0 0.0
      %1775 = vmatpush1.xpose.msra.mxu0 0.0
      %1776 = vmatprep.subr.mxu0 0.0
      %1777 = vmatpush1.xpose.msra.mxu0 0.0
      %1778 = vmatprep.subr.mxu0 0.0
      %1779 = vmatpush1.xpose.msra.mxu0 0.0
      %1780 = vmatprep.subr.mxu0 0.0
      %1781 = vmatpush1.xpose.msra.mxu0 0.0
      %1782 = vmatprep.subr.mxu0 0.0
      %1783 = vmatpush1.xpose.msra.mxu0 0.0
      %1784 = vmatprep.mubr.f32.mxu0 0.0
      %1785 = vmatmul.mubr.f32.gmra.mrb[0].mxu0 %v1679
      %v1786 = vpop.f32.mrb[0].mxu0
      %v1787 = vadd.f32 0.0, %v1786
      %v1788 = vpop.f32.mrb[0].mxu0
      %1789 = vmatprep.mubr.f32.mxu0 0.0
      %1790 = vmatmul.mubr.f32.gmra.mrb[0].mxu0 %v1682
      %v1791 = vpop.f32.mrb[0].mxu0
      %v1792 = vadd.f32 0.0, %v1791
      %v1793 = vpop.f32.mrb[0].mxu0
      %1794 = vmatprep.mubr.f32.mxu0 0.0
      %1795 = vmatmul.mubr.f32.gmra.mrb[0].mxu0 %v1685
      %v1796 = vpop.f32.mrb[0].mxu0
      %v1797 = vadd.f32 0.0, %v1796
      %v1798 = vpop.f32.mrb[0].mxu0
      %1799 = vmatprep.mubr.f32.mxu0 0.0
      %1800 = vmatmul.mubr.f32.gmra.mrb[0].mxu0 %v1688
      %v1801 = vpop.f32.mrb[0].mxu0
      %v1802 = vadd.f32 0.0, %v1801
      %v1803 = vpop.f32.mrb[0].mxu0
      %1804 = vmatprep.mubr.f32.mxu0 0.0
      %1805 = vmatmul.mubr.f32.gmra.mrb[0].mxu0 %v1691
      %v1806 = vpop.f32.mrb[0].mxu0
      %v1807 = vadd.f32 0.0, %v1806
      %v1808 = vpop.f32.mrb[0].mxu0
      %1809 = vmatprep.mubr.f32.mxu0 0.0
      %1810 = vmatmul.mubr.f32.gmra.mrb[0].mxu0 %v1694
      %v1811 = vpop.f32.mrb[0].mxu0
      %v1812 = vadd.f32 0.0, %v1811
      %v1813 = vpop.f32.mrb[0].mxu0
      %1814 = vmatprep.mubr.f32.mxu0 0.0
      %1815 = vmatmul.mubr.f32.gmra.mrb[0].mxu0 %v1697
      %v1816 = vpop.f32.mrb[0].mxu0
      %v1817 = vadd.f32 0.0, %v1816
      %v1818 = vpop.f32.mrb[0].mxu0
      %1819 = vdwg.mxu0
      %v1821 = vsel %vm967, %v695, 0
      %v1824 = vsel %vm967, %v696, 0
      %v1827 = vsel %vm967, %v697, 0
      %v1830 = vsel %vm967, %v698, 0
      %v1833 = vsel %vm967, %v699, 0
      %v1836 = vsel %vm967, %v700, 0
      %v1839 = vsel %vm967, %v701, 0
      %v1842 = vsel %vm967, %v823, 0
      %v1845 = vsel %vm967, %v824, 0
      %v1848 = vsel %vm967, %v825, 0
      %v1851 = vsel %vm967, %v826, 0
      %v1854 = vsel %vm967, %v827, 0
      %v1857 = vsel %vm967, %v828, 0
      %v1860 = vsel %vm967, %v829, 0
      %1862 = vmatprep.subr.mxu0 0.0
      %1863 = vmatpush1.xpose.msra.mxu0 %v1842
      %1864 = vmatprep.subr.mxu0 0.0
      %1865 = vmatpush1.xpose.msra.mxu0 %v1845
      %1866 = vmatprep.subr.mxu0 0.0
      %1867 = vmatpush1.xpose.msra.mxu0 %v1848
      %1868 = vmatprep.subr.mxu0 0.0
      %1869 = vmatpush1.xpose.msra.mxu0 %v1851
      %1870 = vmatprep.subr.mxu0 0.0
      %1871 = vmatpush1.xpose.msra.mxu0 %v1854
      %1872 = vmatprep.subr.mxu0 0.0
      %1873 = vmatpush1.xpose.msra.mxu0 %v1857
      %1874 = vmatprep.subr.mxu0 0.0
      %1875 = vmatpush1.xpose.msra.mxu0 %v1860
      %1876 = vmatprep.subr.mxu0 0.0
      %1877 = vmatpush1.xpose.msra.mxu0 0.0
      %1878 = vmatprep.subr.mxu0 0.0
      %1879 = vmatpush1.xpose.msra.mxu0 0.0
      %1880 = vmatprep.subr.mxu0 0.0
      %1881 = vmatpush1.xpose.msra.mxu0 0.0
      %1882 = vmatprep.subr.mxu0 0.0
      %1883 = vmatpush1.xpose.msra.mxu0 0.0
      %1884 = vmatprep.subr.mxu0 0.0
      %1885 = vmatpush1.xpose.msra.mxu0 0.0
      %1886 = vmatprep.subr.mxu0 0.0
      %1887 = vmatpush1.xpose.msra.mxu0 0.0
      %1888 = vmatprep.subr.mxu0 0.0
      %1889 = vmatpush1.xpose.msra.mxu0 0.0
      %1890 = vmatprep.subr.mxu0 0.0
      %1891 = vmatpush1.xpose.msra.mxu0 0.0
      %1892 = vmatprep.subr.mxu0 0.0
      %1893 = vmatpush1.xpose.msra.mxu0 0.0
      %1894 = vmatprep.subr.mxu0 0.0
      %1895 = vmatpush1.xpose.msra.mxu0 0.0
      %1896 = vmatprep.subr.mxu0 0.0
      %1897 = vmatpush1.xpose.msra.mxu0 0.0
      %1898 = vmatprep.subr.mxu0 0.0
      %1899 = vmatpush1.xpose.msra.mxu0 0.0
      %1900 = vmatprep.subr.mxu0 0.0
      %1901 = vmatpush1.xpose.msra.mxu0 0.0
      %1902 = vmatprep.subr.mxu0 0.0
      %1903 = vmatpush1.xpose.msra.mxu0 0.0
      %1904 = vmatprep.subr.mxu0 0.0
      %1905 = vmatpush1.xpose.msra.mxu0 0.0
      %1906 = vmatprep.subr.mxu0 0.0
      %1907 = vmatpush1.xpose.msra.mxu0 0.0
      %1908 = vmatprep.subr.mxu0 0.0
      %1909 = vmatpush1.xpose.msra.mxu0 0.0
      %1910 = vmatprep.subr.mxu0 0.0
      %1911 = vmatpush1.xpose.msra.mxu0 0.0
      %1912 = vmatprep.subr.mxu0 0.0
      %1913 = vmatpush1.xpose.msra.mxu0 0.0
      %1914 = vmatprep.subr.mxu0 0.0
      %1915 = vmatpush1.xpose.msra.mxu0 0.0
      %1916 = vmatprep.subr.mxu0 0.0
      %1917 = vmatpush1.xpose.msra.mxu0 0.0
      %1918 = vmatprep.subr.mxu0 0.0
      %1919 = vmatpush1.xpose.msra.mxu0 0.0
      %1920 = vmatprep.subr.mxu0 0.0
      %1921 = vmatpush1.xpose.msra.mxu0 0.0
      %1922 = vmatprep.subr.mxu0 0.0
      %1923 = vmatpush1.xpose.msra.mxu0 0.0
      %1924 = vmatprep.subr.mxu0 0.0
      %1925 = vmatpush1.xpose.msra.mxu0 0.0
      %1926 = vmatprep.mubr.f32.mxu0 0.0
      %1927 = vmatmul.mubr.f32.gmra.mrb[0].mxu0 %v1821
      %v1928 = vpop.f32.mrb[0].mxu0
      %v1929 = vadd.f32 0.0, %v1928
      %v1930 = vpop.f32.mrb[0].mxu0
      %1931 = vmatprep.mubr.f32.mxu0 0.0
      %1932 = vmatmul.mubr.f32.gmra.mrb[0].mxu0 %v1824
      %v1933 = vpop.f32.mrb[0].mxu0
      %v1934 = vadd.f32 0.0, %v1933
      %v1935 = vpop.f32.mrb[0].mxu0
      %1936 = vmatprep.mubr.f32.mxu0 0.0
      %1937 = vmatmul.mubr.f32.gmra.mrb[0].mxu0 %v1827
      %v1938 = vpop.f32.mrb[0].mxu0
      %v1939 = vadd.f32 0.0, %v1938
      %v1940 = vpop.f32.mrb[0].mxu0
      %1941 = vmatprep.mubr.f32.mxu0 0.0
      %1942 = vmatmul.mubr.f32.gmra.mrb[0].mxu0 %v1830
      %v1943 = vpop.f32.mrb[0].mxu0
      %v1944 = vadd.f32 0.0, %v1943
      %v1945 = vpop.f32.mrb[0].mxu0
      %1946 = vmatprep.mubr.f32.mxu0 0.0
      %1947 = vmatmul.mubr.f32.gmra.mrb[0].mxu0 %v1833
      %v1948 = vpop.f32.mrb[0].mxu0
      %v1949 = vadd.f32 0.0, %v1948
      %v1950 = vpop.f32.mrb[0].mxu0
      %1951 = vmatprep.mubr.f32.mxu0 0.0
      %1952 = vmatmul.mubr.f32.gmra.mrb[0].mxu0 %v1836
      %v1953 = vpop.f32.mrb[0].mxu0
      %v1954 = vadd.f32 0.0, %v1953
      %v1955 = vpop.f32.mrb[0].mxu0
      %1956 = vmatprep.mubr.f32.mxu0 0.0
      %1957 = vmatmul.mubr.f32.gmra.mrb[0].mxu0 %v1839
      %v1958 = vpop.f32.mrb[0].mxu0
      %v1959 = vadd.f32 0.0, %v1958
      %v1960 = vpop.f32.mrb[0].mxu0
      %1961 = vdwg.mxu0
      %v1963 = vsel %vm967, %v702, 0
      %v1966 = vsel %vm967, %v703, 0
      %v1969 = vsel %vm967, %v704, 0
      %v1972 = vsel %vm967, %v705, 0
      %v1975 = vsel %vm967, %v706, 0
      %v1978 = vsel %vm967, %v707, 0
      %v1981 = vsel %vm967, %v708, 0
      %v1984 = vsel %vm967, %v830, 0
      %v1987 = vsel %vm967, %v831, 0
      %v1990 = vsel %vm967, %v832, 0
      %v1993 = vsel %vm967, %v833, 0
      %v1996 = vsel %vm967, %v834, 0
      %v1999 = vsel %vm967, %v835, 0
      %v2002 = vsel %vm967, %v836, 0
      %2004 = vmatprep.subr.mxu0 0.0
      %2005 = vmatpush1.xpose.msra.mxu0 %v1984
      %2006 = vmatprep.subr.mxu0 0.0
      %2007 = vmatpush1.xpose.msra.mxu0 %v1987
      %2008 = vmatprep.subr.mxu0 0.0
      %2009 = vmatpush1.xpose.msra.mxu0 %v1990
      %2010 = vmatprep.subr.mxu0 0.0
      %2011 = vmatpush1.xpose.msra.mxu0 %v1993
      %2012 = vmatprep.subr.mxu0 0.0
      %2013 = vmatpush1.xpose.msra.mxu0 %v1996
      %2014 = vmatprep.subr.mxu0 0.0
      %2015 = vmatpush1.xpose.msra.mxu0 %v1999
      %2016 = vmatprep.subr.mxu0 0.0
      %2017 = vmatpush1.xpose.msra.mxu0 %v2002
      %2018 = vmatprep.subr.mxu0 0.0
      %2019 = vmatpush1.xpose.msra.mxu0 0.0
      %2020 = vmatprep.subr.mxu0 0.0
      %2021 = vmatpush1.xpose.msra.mxu0 0.0
      %2022 = vmatprep.subr.mxu0 0.0
      %2023 = vmatpush1.xpose.msra.mxu0 0.0
      %2024 = vmatprep.subr.mxu0 0.0
      %2025 = vmatpush1.xpose.msra.mxu0 0.0
      %2026 = vmatprep.subr.mxu0 0.0
      %2027 = vmatpush1.xpose.msra.mxu0 0.0
      %2028 = vmatprep.subr.mxu0 0.0
      %2029 = vmatpush1.xpose.msra.mxu0 0.0
      %2030 = vmatprep.subr.mxu0 0.0
      %2031 = vmatpush1.xpose.msra.mxu0 0.0
      %2032 = vmatprep.subr.mxu0 0.0
      %2033 = vmatpush1.xpose.msra.mxu0 0.0
      %2034 = vmatprep.subr.mxu0 0.0
      %2035 = vmatpush1.xpose.msra.mxu0 0.0
      %2036 = vmatprep.subr.mxu0 0.0
      %2037 = vmatpush1.xpose.msra.mxu0 0.0
      %2038 = vmatprep.subr.mxu0 0.0
      %2039 = vmatpush1.xpose.msra.mxu0 0.0
      %2040 = vmatprep.subr.mxu0 0.0
      %2041 = vmatpush1.xpose.msra.mxu0 0.0
      %2042 = vmatprep.subr.mxu0 0.0
      %2043 = vmatpush1.xpose.msra.mxu0 0.0
      %2044 = vmatprep.subr.mxu0 0.0
      %2045 = vmatpush1.xpose.msra.mxu0 0.0
      %2046 = vmatprep.subr.mxu0 0.0
      %2047 = vmatpush1.xpose.msra.mxu0 0.0
      %2048 = vmatprep.subr.mxu0 0.0
      %2049 = vmatpush1.xpose.msra.mxu0 0.0
      %2050 = vmatprep.subr.mxu0 0.0
      %2051 = vmatpush1.xpose.msra.mxu0 0.0
      %2052 = vmatprep.subr.mxu0 0.0
      %2053 = vmatpush1.xpose.msra.mxu0 0.0
      %2054 = vmatprep.subr.mxu0 0.0
      %2055 = vmatpush1.xpose.msra.mxu0 0.0
      %2056 = vmatprep.subr.mxu0 0.0
      %2057 = vmatpush1.xpose.msra.mxu0 0.0
      %2058 = vmatprep.subr.mxu0 0.0
      %2059 = vmatpush1.xpose.msra.mxu0 0.0
      %2060 = vmatprep.subr.mxu0 0.0
      %2061 = vmatpush1.xpose.msra.mxu0 0.0
      %2062 = vmatprep.subr.mxu0 0.0
      %2063 = vmatpush1.xpose.msra.mxu0 0.0
      %2064 = vmatprep.subr.mxu0 0.0
      %2065 = vmatpush1.xpose.msra.mxu0 0.0
      %2066 = vmatprep.subr.mxu0 0.0
      %2067 = vmatpush1.xpose.msra.mxu0 0.0
      %2068 = vmatprep.mubr.f32.mxu0 0.0
      %2069 = vmatmul.mubr.f32.gmra.mrb[0].mxu0 %v1963
      %v2070 = vpop.f32.mrb[0].mxu0
      %v2071 = vadd.f32 0.0, %v2070
      %v2072 = vpop.f32.mrb[0].mxu0
      %2073 = vmatprep.mubr.f32.mxu0 0.0
      %2074 = vmatmul.mubr.f32.gmra.mrb[0].mxu0 %v1966
      %v2075 = vpop.f32.mrb[0].mxu0
      %v2076 = vadd.f32 0.0, %v2075
      %v2077 = vpop.f32.mrb[0].mxu0
      %2078 = vmatprep.mubr.f32.mxu0 0.0
      %2079 = vmatmul.mubr.f32.gmra.mrb[0].mxu0 %v1969
      %v2080 = vpop.f32.mrb[0].mxu0
      %v2081 = vadd.f32 0.0, %v2080
      %v2082 = vpop.f32.mrb[0].mxu0
      %2083 = vmatprep.mubr.f32.mxu0 0.0
      %2084 = vmatmul.mubr.f32.gmra.mrb[0].mxu0 %v1972
      %v2085 = vpop.f32.mrb[0].mxu0
      %v2086 = vadd.f32 0.0, %v2085
      %v2087 = vpop.f32.mrb[0].mxu0
      %2088 = vmatprep.mubr.f32.mxu0 0.0
      %2089 = vmatmul.mubr.f32.gmra.mrb[0].mxu0 %v1975
      %v2090 = vpop.f32.mrb[0].mxu0
      %v2091 = vadd.f32 0.0, %v2090
      %v2092 = vpop.f32.mrb[0].mxu0
      %2093 = vmatprep.mubr.f32.mxu0 0.0
      %2094 = vmatmul.mubr.f32.gmra.mrb[0].mxu0 %v1978
      %v2095 = vpop.f32.mrb[0].mxu0
      %v2096 = vadd.f32 0.0, %v2095
      %v2097 = vpop.f32.mrb[0].mxu0
      %2098 = vmatprep.mubr.f32.mxu0 0.0
      %2099 = vmatmul.mubr.f32.gmra.mrb[0].mxu0 %v1981
      %v2100 = vpop.f32.mrb[0].mxu0
      %v2101 = vadd.f32 0.0, %v2100
      %v2102 = vpop.f32.mrb[0].mxu0
      %2103 = vdwg.mxu0
      %v2104 = vld [vmem:[%s3] sm:$0xff]
      %v2105 = vld [vmem:[%s3 + $0x8] sm:$0xff]
      %v2106 = vld [vmem:[%s3 + $0x10] sm:$0xff]
      %v2107 = vld [vmem:[%s3 + $0x18] sm:$0xff]
      %v2108 = vld [vmem:[%s3 + $0x20] sm:$0xff]
      %v2109 = vld [vmem:[%s3 + $0x28] sm:$0xff]
      %v2110 = vld [vmem:[%s3 + $0x30] sm:$0xff]
      %v2111 = vld [vmem:[%s3 + $0x38] sm:$0xff]
      %v2112 = vld [vmem:[%s3 + $0x40] sm:$0xff]
      %v2113 = vld [vmem:[%s3 + $0x48] sm:$0xff]
      %v2114 = vld [vmem:[%s3 + $0x50] sm:$0xff]
      %v2115 = vld [vmem:[%s3 + $0x58] sm:$0xff]
      %v2116 = vld [vmem:[%s3 + $0x60] sm:$0xff]
      %v2117 = vld [vmem:[%s3 + $0x68] sm:$0xff]
      %v2118 = vld [vmem:[%s3 + $0x70] sm:$0xff]
      %v2119 = vld [vmem:[%s3 + $0x78] sm:$0xff]
      %v2120 = vld [vmem:[%s3 + $0x80] sm:$0xff]
      %v2121 = vld [vmem:[%s3 + $0x88] sm:$0xff]
      %v2122 = vld [vmem:[%s3 + $0x90] sm:$0xff]
      %v2123 = vld [vmem:[%s3 + $0x98] sm:$0xff]
      %v2124 = vld [vmem:[%s3 + $0xa0] sm:$0xff]
      %v2125 = vld [vmem:[%s3 + $0xa8] sm:$0xff]
      %v2126 = vld [vmem:[%s3 + $0xb0] sm:$0xff]
      %v2127 = vld [vmem:[%s3 + $0xb8] sm:$0xff]
      %v2128 = vld [vmem:[%s3 + $0xc0] sm:$0xff]
      %v2129 = vld [vmem:[%s3 + $0xc8] sm:$0xff]
      %v2130 = vld [vmem:[%s3 + $0xd0] sm:$0xff]
      %v2131 = vld [vmem:[%s3 + $0xd8] sm:$0xff]
      %v2132 = vadd.f32 %v1077, %v2104
      %v2133 = vadd.f32 %v1082, %v2105
      %v2134 = vadd.f32 %v1087, %v2106
      %v2135 = vadd.f32 %v1092, %v2107
      %v2136 = vadd.f32 %v1097, %v2108
      %v2137 = vadd.f32 %v1102, %v2109
      %v2138 = vadd.f32 %v1107, %v2110
      %v2139 = vadd.f32 %v1219, %v2104
      %v2140 = vadd.f32 %v1224, %v2105
      %v2141 = vadd.f32 %v1229, %v2106
      %v2142 = vadd.f32 %v1234, %v2107
      %v2143 = vadd.f32 %v1239, %v2108
      %v2144 = vadd.f32 %v1244, %v2109
      %v2145 = vadd.f32 %v1249, %v2110
      %v2146 = vadd.f32 %v1361, %v2111
      %v2147 = vadd.f32 %v1366, %v2112
      %v2148 = vadd.f32 %v1371, %v2113
      %v2149 = vadd.f32 %v1376, %v2114
      %v2150 = vadd.f32 %v1381, %v2115
      %v2151 = vadd.f32 %v1386, %v2116
      %v2152 = vadd.f32 %v1391, %v2117
      %v2153 = vadd.f32 %v1503, %v2111
      %v2154 = vadd.f32 %v1508, %v2112
      %v2155 = vadd.f32 %v1513, %v2113
      %v2156 = vadd.f32 %v1518, %v2114
      %v2157 = vadd.f32 %v1523, %v2115
      %v2158 = vadd.f32 %v1528, %v2116
      %v2159 = vadd.f32 %v1533, %v2117
      %v2160 = vadd.f32 %v1645, %v2118
      %v2161 = vadd.f32 %v1650, %v2119
      %v2162 = vadd.f32 %v1655, %v2120
      %v2163 = vadd.f32 %v1660, %v2121
      %v2164 = vadd.f32 %v1665, %v2122
      %v2165 = vadd.f32 %v1670, %v2123
      %v2166 = vadd.f32 %v1675, %v2124
      %v2167 = vadd.f32 %v1787, %v2118
      %v2168 = vadd.f32 %v1792, %v2119
      %v2169 = vadd.f32 %v1797, %v2120
      %v2170 = vadd.f32 %v1802, %v2121
      %v2171 = vadd.f32 %v1807, %v2122
      %v2172 = vadd.f32 %v1812, %v2123
      %v2173 = vadd.f32 %v1817, %v2124
      %v2174 = vadd.f32 %v1929, %v2125
      %v2175 = vadd.f32 %v1934, %v2126
      %v2176 = vadd.f32 %v1939, %v2127
      %v2177 = vadd.f32 %v1944, %v2128
      %v2178 = vadd.f32 %v1949, %v2129
      %v2179 = vadd.f32 %v1954, %v2130
      %v2180 = vadd.f32 %v1959, %v2131
      %v2181 = vadd.f32 %v2071, %v2125
      %v2182 = vadd.f32 %v2076, %v2126
      %v2183 = vadd.f32 %v2081, %v2127
      %v2184 = vadd.f32 %v2086, %v2128
      %v2185 = vadd.f32 %v2091, %v2129
      %v2186 = vadd.f32 %v2096, %v2130
      %v2187 = vadd.f32 %v2101, %v2131
      %v2188 = vld [vmem:[%s335] sm:$0xff]
      %v2189 = vld [vmem:[%s335 + $0x8] sm:$0xff]
      %v2190 = vld [vmem:[%s335 + $0x10] sm:$0xff]
      %v2191 = vld [vmem:[%s335 + $0x18] sm:$0xff]
      %v2192 = vld [vmem:[%s335 + $0x20] sm:$0xff]
      %v2193 = vld [vmem:[%s335 + $0x28] sm:$0xff]
      %v2194 = vld [vmem:[%s335 + $0x30] sm:$0xff]
      %v2195 = vld [vmem:[%s335 + $0x38] sm:$0xff]
      %v2196 = vld [vmem:[%s335 + $0x40] sm:$0xff]
      %v2197 = vld [vmem:[%s335 + $0x48] sm:$0xff]
      %v2198 = vld [vmem:[%s335 + $0x50] sm:$0xff]
      %v2199 = vld [vmem:[%s335 + $0x58] sm:$0xff]
      %v2200 = vld [vmem:[%s335 + $0x60] sm:$0xff]
      %v2201 = vld [vmem:[%s335 + $0x68] sm:$0xff]
      %v2202 = vadd.f32 %v2132, %v2188
      %v2203 = vadd.f32 %v2133, %v2189
      %v2204 = vadd.f32 %v2134, %v2190
      %v2205 = vadd.f32 %v2135, %v2191
      %v2206 = vadd.f32 %v2136, %v2192
      %v2207 = vadd.f32 %v2137, %v2193
      %v2208 = vadd.f32 %v2138, %v2194
      %v2209 = vadd.f32 %v2139, %v2195
      %v2210 = vadd.f32 %v2140, %v2196
      %v2211 = vadd.f32 %v2141, %v2197
      %v2212 = vadd.f32 %v2142, %v2198
      %v2213 = vadd.f32 %v2143, %v2199
      %v2214 = vadd.f32 %v2144, %v2200
      %v2215 = vadd.f32 %v2145, %v2201
      %v2216 = vadd.f32 %v2146, %v2188
      %v2217 = vadd.f32 %v2147, %v2189
      %v2218 = vadd.f32 %v2148, %v2190
      %v2219 = vadd.f32 %v2149, %v2191
      %v2220 = vadd.f32 %v2150, %v2192
      %v2221 = vadd.f32 %v2151, %v2193
      %v2222 = vadd.f32 %v2152, %v2194
      %v2223 = vadd.f32 %v2153, %v2195
      %v2224 = vadd.f32 %v2154, %v2196
      %v2225 = vadd.f32 %v2155, %v2197
      %v2226 = vadd.f32 %v2156, %v2198
      %v2227 = vadd.f32 %v2157, %v2199
      %v2228 = vadd.f32 %v2158, %v2200
      %v2229 = vadd.f32 %v2159, %v2201
      %v2230 = vadd.f32 %v2160, %v2188
      %v2231 = vadd.f32 %v2161, %v2189
      %v2232 = vadd.f32 %v2162, %v2190
      %v2233 = vadd.f32 %v2163, %v2191
      %v2234 = vadd.f32 %v2164, %v2192
      %v2235 = vadd.f32 %v2165, %v2193
      %v2236 = vadd.f32 %v2166, %v2194
      %v2237 = vadd.f32 %v2167, %v2195
      %v2238 = vadd.f32 %v2168, %v2196
      %v2239 = vadd.f32 %v2169, %v2197
      %v2240 = vadd.f32 %v2170, %v2198
      %v2241 = vadd.f32 %v2171, %v2199
      %v2242 = vadd.f32 %v2172, %v2200
      %v2243 = vadd.f32 %v2173, %v2201
      %v2244 = vadd.f32 %v2174, %v2188
      %v2245 = vadd.f32 %v2175, %v2189
      %v2246 = vadd.f32 %v2176, %v2190
      %v2247 = vadd.f32 %v2177, %v2191
      %v2248 = vadd.f32 %v2178, %v2192
      %v2249 = vadd.f32 %v2179, %v2193
      %v2250 = vadd.f32 %v2180, %v2194
      %v2251 = vadd.f32 %v2181, %v2195
      %v2252 = vadd.f32 %v2182, %v2196
      %v2253 = vadd.f32 %v2183, %v2197
      %v2254 = vadd.f32 %v2184, %v2198
      %v2255 = vadd.f32 %v2185, %v2199
      %v2256 = vadd.f32 %v2186, %v2200
      %v2257 = vadd.f32 %v2187, %v2201
      %vm2258 = vcmask 457728
      %v2259 = vsel %vm2258, %v2202, -inf
      %2260 = vmax.xlane.f32.xlu0 %v2259
      %v2261 = vpop.xlane.xlu0 %2260
      %v2262 = vsel %vm2258, %v2203, -inf
      %2263 = vmax.xlane.f32.xlu0 %v2262
      %v2264 = vpop.xlane.xlu0 %2263
      %v2265 = vsel %vm2258, %v2204, -inf
      %2266 = vmax.xlane.f32.xlu0 %v2265
      %v2267 = vpop.xlane.xlu0 %2266
      %v2268 = vsel %vm2258, %v2205, -inf
      %2269 = vmax.xlane.f32.xlu0 %v2268
      %v2270 = vpop.xlane.xlu0 %2269
      %v2271 = vsel %vm2258, %v2206, -inf
      %2272 = vmax.xlane.f32.xlu0 %v2271
      %v2273 = vpop.xlane.xlu0 %2272
      %v2274 = vsel %vm2258, %v2207, -inf
      %2275 = vmax.xlane.f32.xlu0 %v2274
      %v2276 = vpop.xlane.xlu0 %2275
      %v2277 = vsel %vm2258, %v2208, -inf
      %2278 = vmax.xlane.f32.xlu0 %v2277
      %v2279 = vpop.xlane.xlu0 %2278
      %v2280 = vsel %vm2258, %v2209, -inf
      %2281 = vmax.xlane.f32.xlu0 %v2280
      %v2282 = vpop.xlane.xlu0 %2281
      %v2283 = vsel %vm2258, %v2210, -inf
      %2284 = vmax.xlane.f32.xlu0 %v2283
      %v2285 = vpop.xlane.xlu0 %2284
      %v2286 = vsel %vm2258, %v2211, -inf
      %2287 = vmax.xlane.f32.xlu0 %v2286
      %v2288 = vpop.xlane.xlu0 %2287
      %v2289 = vsel %vm2258, %v2212, -inf
      %2290 = vmax.xlane.f32.xlu0 %v2289
      %v2291 = vpop.xlane.xlu0 %2290
      %v2292 = vsel %vm2258, %v2213, -inf
      %2293 = vmax.xlane.f32.xlu0 %v2292
      %v2294 = vpop.xlane.xlu0 %2293
      %v2295 = vsel %vm2258, %v2214, -inf
      %2296 = vmax.xlane.f32.xlu0 %v2295
      %v2297 = vpop.xlane.xlu0 %2296
      %v2298 = vsel %vm2258, %v2215, -inf
      %2299 = vmax.xlane.f32.xlu0 %v2298
      %v2300 = vpop.xlane.xlu0 %2299
      %v2301 = vsel %vm2258, %v2216, -inf
      %2302 = vmax.xlane.f32.xlu0 %v2301
      %v2303 = vpop.xlane.xlu0 %2302
      %v2304 = vsel %vm2258, %v2217, -inf
      %2305 = vmax.xlane.f32.xlu0 %v2304
      %v2306 = vpop.xlane.xlu0 %2305
      %v2307 = vsel %vm2258, %v2218, -inf
      %2308 = vmax.xlane.f32.xlu0 %v2307
      %v2309 = vpop.xlane.xlu0 %2308
      %v2310 = vsel %vm2258, %v2219, -inf
      %2311 = vmax.xlane.f32.xlu0 %v2310
      %v2312 = vpop.xlane.xlu0 %2311
      %v2313 = vsel %vm2258, %v2220, -inf
      %2314 = vmax.xlane.f32.xlu0 %v2313
      %v2315 = vpop.xlane.xlu0 %2314
      %v2316 = vsel %vm2258, %v2221, -inf
      %2317 = vmax.xlane.f32.xlu0 %v2316
      %v2318 = vpop.xlane.xlu0 %2317
      %v2319 = vsel %vm2258, %v2222, -inf
      %2320 = vmax.xlane.f32.xlu0 %v2319
      %v2321 = vpop.xlane.xlu0 %2320
      %v2322 = vsel %vm2258, %v2223, -inf
      %2323 = vmax.xlane.f32.xlu0 %v2322
      %v2324 = vpop.xlane.xlu0 %2323
      %v2325 = vsel %vm2258, %v2224, -inf
      %2326 = vmax.xlane.f32.xlu0 %v2325
      %v2327 = vpop.xlane.xlu0 %2326
      %v2328 = vsel %vm2258, %v2225, -inf
      %2329 = vmax.xlane.f32.xlu0 %v2328
      %v2330 = vpop.xlane.xlu0 %2329
      %v2331 = vsel %vm2258, %v2226, -inf
      %2332 = vmax.xlane.f32.xlu0 %v2331
      %v2333 = vpop.xlane.xlu0 %2332
      %v2334 = vsel %vm2258, %v2227, -inf
      %2335 = vmax.xlane.f32.xlu0 %v2334
      %v2336 = vpop.xlane.xlu0 %2335
      %v2337 = vsel %vm2258, %v2228, -inf
      %2338 = vmax.xlane.f32.xlu0 %v2337
      %v2339 = vpop.xlane.xlu0 %2338
      %v2340 = vsel %vm2258, %v2229, -inf
      %2341 = vmax.xlane.f32.xlu0 %v2340
      %v2342 = vpop.xlane.xlu0 %2341
      %v2343 = vsel %vm2258, %v2230, -inf
      %2344 = vmax.xlane.f32.xlu0 %v2343
      %v2345 = vpop.xlane.xlu0 %2344
      %v2346 = vsel %vm2258, %v2231, -inf
      %2347 = vmax.xlane.f32.xlu0 %v2346
      %v2348 = vpop.xlane.xlu0 %2347
      %v2349 = vsel %vm2258, %v2232, -inf
      %2350 = vmax.xlane.f32.xlu0 %v2349
      %v2351 = vpop.xlane.xlu0 %2350
      %v2352 = vsel %vm2258, %v2233, -inf
      %2353 = vmax.xlane.f32.xlu0 %v2352
      %v2354 = vpop.xlane.xlu0 %2353
      %v2355 = vsel %vm2258, %v2234, -inf
      %2356 = vmax.xlane.f32.xlu0 %v2355
      %v2357 = vpop.xlane.xlu0 %2356
      %v2358 = vsel %vm2258, %v2235, -inf
      %2359 = vmax.xlane.f32.xlu0 %v2358
      %v2360 = vpop.xlane.xlu0 %2359
      %v2361 = vsel %vm2258, %v2236, -inf
      %2362 = vmax.xlane.f32.xlu0 %v2361
      %v2363 = vpop.xlane.xlu0 %2362
      %v2364 = vsel %vm2258, %v2237, -inf
      %2365 = vmax.xlane.f32.xlu0 %v2364
      %v2366 = vpop.xlane.xlu0 %2365
      %v2367 = vsel %vm2258, %v2238, -inf
      %2368 = vmax.xlane.f32.xlu0 %v2367
      %v2369 = vpop.xlane.xlu0 %2368
      %v2370 = vsel %vm2258, %v2239, -inf
      %2371 = vmax.xlane.f32.xlu0 %v2370
      %v2372 = vpop.xlane.xlu0 %2371
      %v2373 = vsel %vm2258, %v2240, -inf
      %2374 = vmax.xlane.f32.xlu0 %v2373
      %v2375 = vpop.xlane.xlu0 %2374
      %v2376 = vsel %vm2258, %v2241, -inf
      %2377 = vmax.xlane.f32.xlu0 %v2376
      %v2378 = vpop.xlane.xlu0 %2377
      %v2379 = vsel %vm2258, %v2242, -inf
      %2380 = vmax.xlane.f32.xlu0 %v2379
      %v2381 = vpop.xlane.xlu0 %2380
      %v2382 = vsel %vm2258, %v2243, -inf
      %2383 = vmax.xlane.f32.xlu0 %v2382
      %v2384 = vpop.xlane.xlu0 %2383
      %v2385 = vsel %vm2258, %v2244, -inf
      %2386 = vmax.xlane.f32.xlu0 %v2385
      %v2387 = vpop.xlane.xlu0 %2386
      %v2388 = vsel %vm2258, %v2245, -inf
      %2389 = vmax.xlane.f32.xlu0 %v2388
      %v2390 = vpop.xlane.xlu0 %2389
      %v2391 = vsel %vm2258, %v2246, -inf
      %2392 = vmax.xlane.f32.xlu0 %v2391
      %v2393 = vpop.xlane.xlu0 %2392
      %v2394 = vsel %vm2258, %v2247, -inf
      %2395 = vmax.xlane.f32.xlu0 %v2394
      %v2396 = vpop.xlane.xlu0 %2395
      %v2397 = vsel %vm2258, %v2248, -inf
      %2398 = vmax.xlane.f32.xlu0 %v2397
      %v2399 = vpop.xlane.xlu0 %2398
      %v2400 = vsel %vm2258, %v2249, -inf
      %2401 = vmax.xlane.f32.xlu0 %v2400
      %v2402 = vpop.xlane.xlu0 %2401
      %v2403 = vsel %vm2258, %v2250, -inf
      %2404 = vmax.xlane.f32.xlu0 %v2403
      %v2405 = vpop.xlane.xlu0 %2404
      %v2406 = vsel %vm2258, %v2251, -inf
      %2407 = vmax.xlane.f32.xlu0 %v2406
      %v2408 = vpop.xlane.xlu0 %2407
      %v2409 = vsel %vm2258, %v2252, -inf
      %2410 = vmax.xlane.f32.xlu0 %v2409
      %v2411 = vpop.xlane.xlu0 %2410
      %v2412 = vsel %vm2258, %v2253, -inf
      %2413 = vmax.xlane.f32.xlu0 %v2412
      %v2414 = vpop.xlane.xlu0 %2413
      %v2415 = vsel %vm2258, %v2254, -inf
      %2416 = vmax.xlane.f32.xlu0 %v2415
      %v2417 = vpop.xlane.xlu0 %2416
      %v2418 = vsel %vm2258, %v2255, -inf
      %2419 = vmax.xlane.f32.xlu0 %v2418
      %v2420 = vpop.xlane.xlu0 %2419
      %v2421 = vsel %vm2258, %v2256, -inf
      %2422 = vmax.xlane.f32.xlu0 %v2421
      %v2423 = vpop.xlane.xlu0 %2422
      %v2424 = vsel %vm2258, %v2257, -inf
      %2425 = vmax.xlane.f32.xlu0 %v2424
      %v2426 = vpop.xlane.xlu0 %2425
      %v2427 = vsub.f32 %v2202, %v2261
      %v2428 = vsub.f32 %v2203, %v2264
      %v2429 = vsub.f32 %v2204, %v2267
      %v2430 = vsub.f32 %v2205, %v2270
      %v2431 = vsub.f32 %v2206, %v2273
      %v2432 = vsub.f32 %v2207, %v2276
      %v2433 = vsub.f32 %v2208, %v2279
      %v2434 = vsub.f32 %v2209, %v2282
      %v2435 = vsub.f32 %v2210, %v2285
      %v2436 = vsub.f32 %v2211, %v2288
      %v2437 = vsub.f32 %v2212, %v2291
      %v2438 = vsub.f32 %v2213, %v2294
      %v2439 = vsub.f32 %v2214, %v2297
      %v2440 = vsub.f32 %v2215, %v2300
      %v2441 = vsub.f32 %v2216, %v2303
      %v2442 = vsub.f32 %v2217, %v2306
      %v2443 = vsub.f32 %v2218, %v2309
      %v2444 = vsub.f32 %v2219, %v2312
      %v2445 = vsub.f32 %v2220, %v2315
      %v2446 = vsub.f32 %v2221, %v2318
      %v2447 = vsub.f32 %v2222, %v2321
      %v2448 = vsub.f32 %v2223, %v2324
      %v2449 = vsub.f32 %v2224, %v2327
      %v2450 = vsub.f32 %v2225, %v2330
      %v2451 = vsub.f32 %v2226, %v2333
      %v2452 = vsub.f32 %v2227, %v2336
      %v2453 = vsub.f32 %v2228, %v2339
      %v2454 = vsub.f32 %v2229, %v2342
      %v2455 = vsub.f32 %v2230, %v2345
      %v2456 = vsub.f32 %v2231, %v2348
      %v2457 = vsub.f32 %v2232, %v2351
      %v2458 = vsub.f32 %v2233, %v2354
      %v2459 = vsub.f32 %v2234, %v2357
      %v2460 = vsub.f32 %v2235, %v2360
      %v2461 = vsub.f32 %v2236, %v2363
      %v2462 = vsub.f32 %v2237, %v2366
      %v2463 = vsub.f32 %v2238, %v2369
      %v2464 = vsub.f32 %v2239, %v2372
      %v2465 = vsub.f32 %v2240, %v2375
      %v2466 = vsub.f32 %v2241, %v2378
      %v2467 = vsub.f32 %v2242, %v2381
      %v2468 = vsub.f32 %v2243, %v2384
      %v2469 = vsub.f32 %v2244, %v2387
      %v2470 = vsub.f32 %v2245, %v2390
      %v2471 = vsub.f32 %v2246, %v2393
      %v2472 = vsub.f32 %v2247, %v2396
      %v2473 = vsub.f32 %v2248, %v2399
      %v2474 = vsub.f32 %v2249, %v2402
      %v2475 = vsub.f32 %v2250, %v2405
      %v2476 = vsub.f32 %v2251, %v2408
      %v2477 = vsub.f32 %v2252, %v2411
      %v2478 = vsub.f32 %v2253, %v2414
      %v2479 = vsub.f32 %v2254, %v2417
      %v2480 = vsub.f32 %v2255, %v2420
      %v2481 = vsub.f32 %v2256, %v2423
      %v2482 = vsub.f32 %v2257, %v2426
      %v2483 = vmul.f32 %v2427, 1.442695
      %v2484 = vpow.pop %v2483
      %v2485 = vmul.f32 %v2428, 1.442695
      %v2486 = vpow.pop %v2485
      %v2487 = vmul.f32 %v2429, 1.442695
      %v2488 = vpow.pop %v2487
      %v2489 = vmul.f32 %v2430, 1.442695
      %v2490 = vpow.pop %v2489
      %v2491 = vmul.f32 %v2431, 1.442695
      %v2492 = vpow.pop %v2491
      %v2493 = vmul.f32 %v2432, 1.442695
      %v2494 = vpow.pop %v2493
      %v2495 = vmul.f32 %v2433, 1.442695
      %v2496 = vpow.pop %v2495
      %v2497 = vmul.f32 %v2434, 1.442695
      %v2498 = vpow.pop %v2497
      %v2499 = vmul.f32 %v2435, 1.442695
      %v2500 = vpow.pop %v2499
      %v2501 = vmul.f32 %v2436, 1.442695
      %v2502 = vpow.pop %v2501
      %v2503 = vmul.f32 %v2437, 1.442695
      %v2504 = vpow.pop %v2503
      %v2505 = vmul.f32 %v2438, 1.442695
      %v2506 = vpow.pop %v2505
      %v2507 = vmul.f32 %v2439, 1.442695
      %v2508 = vpow.pop %v2507
      %v2509 = vmul.f32 %v2440, 1.442695
      %v2510 = vpow.pop %v2509
      %v2511 = vmul.f32 %v2441, 1.442695
      %v2512 = vpow.pop %v2511
      %v2513 = vmul.f32 %v2442, 1.442695
      %v2514 = vpow.pop %v2513
      %v2515 = vmul.f32 %v2443, 1.442695
      %v2516 = vpow.pop %v2515
      %v2517 = vmul.f32 %v2444, 1.442695
      %v2518 = vpow.pop %v2517
      %v2519 = vmul.f32 %v2445, 1.442695
      %v2520 = vpow.pop %v2519
      %v2521 = vmul.f32 %v2446, 1.442695
      %v2522 = vpow.pop %v2521
      %v2523 = vmul.f32 %v2447, 1.442695
      %v2524 = vpow.pop %v2523
      %v2525 = vmul.f32 %v2448, 1.442695
      %v2526 = vpow.pop %v2525
      %v2527 = vmul.f32 %v2449, 1.442695
      %v2528 = vpow.pop %v2527
      %v2529 = vmul.f32 %v2450, 1.442695
      %v2530 = vpow.pop %v2529
      %v2531 = vmul.f32 %v2451, 1.442695
      %v2532 = vpow.pop %v2531
      %v2533 = vmul.f32 %v2452, 1.442695
      %v2534 = vpow.pop %v2533
      %v2535 = vmul.f32 %v2453, 1.442695
      %v2536 = vpow.pop %v2535
      %v2537 = vmul.f32 %v2454, 1.442695
      %v2538 = vpow.pop %v2537
      %v2539 = vmul.f32 %v2455, 1.442695
      %v2540 = vpow.pop %v2539
      %v2541 = vmul.f32 %v2456, 1.442695
      %v2542 = vpow.pop %v2541
      %v2543 = vmul.f32 %v2457, 1.442695
      %v2544 = vpow.pop %v2543
      %v2545 = vmul.f32 %v2458, 1.442695
      %v2546 = vpow.pop %v2545
      %v2547 = vmul.f32 %v2459, 1.442695
      %v2548 = vpow.pop %v2547
      %v2549 = vmul.f32 %v2460, 1.442695
      %v2550 = vpow.pop %v2549
      %v2551 = vmul.f32 %v2461, 1.442695
      %v2552 = vpow.pop %v2551
      %v2553 = vmul.f32 %v2462, 1.442695
      %v2554 = vpow.pop %v2553
      %v2555 = vmul.f32 %v2463, 1.442695
      %v2556 = vpow.pop %v2555
      %v2557 = vmul.f32 %v2464, 1.442695
      %v2558 = vpow.pop %v2557
      %v2559 = vmul.f32 %v2465, 1.442695
      %v2560 = vpow.pop %v2559
      %v2561 = vmul.f32 %v2466, 1.442695
      %v2562 = vpow.pop %v2561
      %v2563 = vmul.f32 %v2467, 1.442695
      %v2564 = vpow.pop %v2563
      %v2565 = vmul.f32 %v2468, 1.442695
      %v2566 = vpow.pop %v2565
      %v2567 = vmul.f32 %v2469, 1.442695
      %v2568 = vpow.pop %v2567
      %v2569 = vmul.f32 %v2470, 1.442695
      %v2570 = vpow.pop %v2569
      %v2571 = vmul.f32 %v2471, 1.442695
      %v2572 = vpow.pop %v2571
      %v2573 = vmul.f32 %v2472, 1.442695
      %v2574 = vpow.pop %v2573
      %v2575 = vmul.f32 %v2473, 1.442695
      %v2576 = vpow.pop %v2575
      %v2577 = vmul.f32 %v2474, 1.442695
      %v2578 = vpow.pop %v2577
      %v2579 = vmul.f32 %v2475, 1.442695
      %v2580 = vpow.pop %v2579
      %v2581 = vmul.f32 %v2476, 1.442695
      %v2582 = vpow.pop %v2581
      %v2583 = vmul.f32 %v2477, 1.442695
      %v2584 = vpow.pop %v2583
      %v2585 = vmul.f32 %v2478, 1.442695
      %v2586 = vpow.pop %v2585
      %v2587 = vmul.f32 %v2479, 1.442695
      %v2588 = vpow.pop %v2587
      %v2589 = vmul.f32 %v2480, 1.442695
      %v2590 = vpow.pop %v2589
      %v2591 = vmul.f32 %v2481, 1.442695
      %v2592 = vpow.pop %v2591
      %v2593 = vmul.f32 %v2482, 1.442695
      %v2594 = vpow.pop %v2593
      %v2595 = vsel %vm2258, %v2484, 0.0
      %2596 = vadd.xlane.f32.xlu0 %v2595
      %v2597 = vpop.xlane.xlu0 %2596
      %v2598 = vsel %vm2258, %v2486, 0.0
      %2599 = vadd.xlane.f32.xlu0 %v2598
      %v2600 = vpop.xlane.xlu0 %2599
      %v2601 = vsel %vm2258, %v2488, 0.0
      %2602 = vadd.xlane.f32.xlu0 %v2601
      %v2603 = vpop.xlane.xlu0 %2602
      %v2604 = vsel %vm2258, %v2490, 0.0
      %2605 = vadd.xlane.f32.xlu0 %v2604
      %v2606 = vpop.xlane.xlu0 %2605
      %v2607 = vsel %vm2258, %v2492, 0.0
      %2608 = vadd.xlane.f32.xlu0 %v2607
      %v2609 = vpop.xlane.xlu0 %2608
      %v2610 = vsel %vm2258, %v2494, 0.0
      %2611 = vadd.xlane.f32.xlu0 %v2610
      %v2612 = vpop.xlane.xlu0 %2611
      %v2613 = vsel %vm2258, %v2496, 0.0
      %2614 = vadd.xlane.f32.xlu0 %v2613
      %v2615 = vpop.xlane.xlu0 %2614
      %v2616 = vsel %vm2258, %v2498, 0.0
      %2617 = vadd.xlane.f32.xlu0 %v2616
      %v2618 = vpop.xlane.xlu0 %2617
      %v2619 = vsel %vm2258, %v2500, 0.0
      %2620 = vadd.xlane.f32.xlu0 %v2619
      %v2621 = vpop.xlane.xlu0 %2620
      %v2622 = vsel %vm2258, %v2502, 0.0
      %2623 = vadd.xlane.f32.xlu0 %v2622
      %v2624 = vpop.xlane.xlu0 %2623
      %v2625 = vsel %vm2258, %v2504, 0.0
      %2626 = vadd.xlane.f32.xlu0 %v2625
      %v2627 = vpop.xlane.xlu0 %2626
      %v2628 = vsel %vm2258, %v2506, 0.0
      %2629 = vadd.xlane.f32.xlu0 %v2628
      %v2630 = vpop.xlane.xlu0 %2629
      %v2631 = vsel %vm2258, %v2508, 0.0
      %2632 = vadd.xlane.f32.xlu0 %v2631
      %v2633 = vpop.xlane.xlu0 %2632
      %v2634 = vsel %vm2258, %v2510, 0.0
      %2635 = vadd.xlane.f32.xlu0 %v2634
      %v2636 = vpop.xlane.xlu0 %2635
      %v2637 = vsel %vm2258, %v2512, 0.0
      %2638 = vadd.xlane.f32.xlu0 %v2637
      %v2639 = vpop.xlane.xlu0 %2638
      %v2640 = vsel %vm2258, %v2514, 0.0
      %2641 = vadd.xlane.f32.xlu0 %v2640
      %v2642 = vpop.xlane.xlu0 %2641
      %v2643 = vsel %vm2258, %v2516, 0.0
      %2644 = vadd.xlane.f32.xlu0 %v2643
      %v2645 = vpop.xlane.xlu0 %2644
      %v2646 = vsel %vm2258, %v2518, 0.0
      %2647 = vadd.xlane.f32.xlu0 %v2646
      %v2648 = vpop.xlane.xlu0 %2647
      %v2649 = vsel %vm2258, %v2520, 0.0
      %2650 = vadd.xlane.f32.xlu0 %v2649
      %v2651 = vpop.xlane.xlu0 %2650
      %v2652 = vsel %vm2258, %v2522, 0.0
      %2653 = vadd.xlane.f32.xlu0 %v2652
      %v2654 = vpop.xlane.xlu0 %2653
      %v2655 = vsel %vm2258, %v2524, 0.0
      %2656 = vadd.xlane.f32.xlu0 %v2655
      %v2657 = vpop.xlane.xlu0 %2656
      %v2658 = vsel %vm2258, %v2526, 0.0
      %2659 = vadd.xlane.f32.xlu0 %v2658
      %v2660 = vpop.xlane.xlu0 %2659
      %v2661 = vsel %vm2258, %v2528, 0.0
      %2662 = vadd.xlane.f32.xlu0 %v2661
      %v2663 = vpop.xlane.xlu0 %2662
      %v2664 = vsel %vm2258, %v2530, 0.0
      %2665 = vadd.xlane.f32.xlu0 %v2664
      %v2666 = vpop.xlane.xlu0 %2665
      %v2667 = vsel %vm2258, %v2532, 0.0
      %2668 = vadd.xlane.f32.xlu0 %v2667
      %v2669 = vpop.xlane.xlu0 %2668
      %v2670 = vsel %vm2258, %v2534, 0.0
      %2671 = vadd.xlane.f32.xlu0 %v2670
      %v2672 = vpop.xlane.xlu0 %2671
      %v2673 = vsel %vm2258, %v2536, 0.0
      %2674 = vadd.xlane.f32.xlu0 %v2673
      %v2675 = vpop.xlane.xlu0 %2674
      %v2676 = vsel %vm2258, %v2538, 0.0
      %2677 = vadd.xlane.f32.xlu0 %v2676
      %v2678 = vpop.xlane.xlu0 %2677
      %v2679 = vsel %vm2258, %v2540, 0.0
      %2680 = vadd.xlane.f32.xlu0 %v2679
      %v2681 = vpop.xlane.xlu0 %2680
      %v2682 = vsel %vm2258, %v2542, 0.0
      %2683 = vadd.xlane.f32.xlu0 %v2682
      %v2684 = vpop.xlane.xlu0 %2683
      %v2685 = vsel %vm2258, %v2544, 0.0
      %2686 = vadd.xlane.f32.xlu0 %v2685
      %v2687 = vpop.xlane.xlu0 %2686
      %v2688 = vsel %vm2258, %v2546, 0.0
      %2689 = vadd.xlane.f32.xlu0 %v2688
      %v2690 = vpop.xlane.xlu0 %2689
      %v2691 = vsel %vm2258, %v2548, 0.0
      %2692 = vadd.xlane.f32.xlu0 %v2691
      %v2693 = vpop.xlane.xlu0 %2692
      %v2694 = vsel %vm2258, %v2550, 0.0
      %2695 = vadd.xlane.f32.xlu0 %v2694
      %v2696 = vpop.xlane.xlu0 %2695
      %v2697 = vsel %vm2258, %v2552, 0.0
      %2698 = vadd.xlane.f32.xlu0 %v2697
      %v2699 = vpop.xlane.xlu0 %2698
      %v2700 = vsel %vm2258, %v2554, 0.0
      %2701 = vadd.xlane.f32.xlu0 %v2700
      %v2702 = vpop.xlane.xlu0 %2701
      %v2703 = vsel %vm2258, %v2556, 0.0
      %2704 = vadd.xlane.f32.xlu0 %v2703
      %v2705 = vpop.xlane.xlu0 %2704
      %v2706 = vsel %vm2258, %v2558, 0.0
      %2707 = vadd.xlane.f32.xlu0 %v2706
      %v2708 = vpop.xlane.xlu0 %2707
      %v2709 = vsel %vm2258, %v2560, 0.0
      %2710 = vadd.xlane.f32.xlu0 %v2709
      %v2711 = vpop.xlane.xlu0 %2710
      %v2712 = vsel %vm2258, %v2562, 0.0
      %2713 = vadd.xlane.f32.xlu0 %v2712
      %v2714 = vpop.xlane.xlu0 %2713
      %v2715 = vsel %vm2258, %v2564, 0.0
      %2716 = vadd.xlane.f32.xlu0 %v2715
      %v2717 = vpop.xlane.xlu0 %2716
      %v2718 = vsel %vm2258, %v2566, 0.0
      %2719 = vadd.xlane.f32.xlu0 %v2718
      %v2720 = vpop.xlane.xlu0 %2719
      %v2721 = vsel %vm2258, %v2568, 0.0
      %2722 = vadd.xlane.f32.xlu0 %v2721
      %v2723 = vpop.xlane.xlu0 %2722
      %v2724 = vsel %vm2258, %v2570, 0.0
      %2725 = vadd.xlane.f32.xlu0 %v2724
      %v2726 = vpop.xlane.xlu0 %2725
      %v2727 = vsel %vm2258, %v2572, 0.0
      %2728 = vadd.xlane.f32.xlu0 %v2727
      %v2729 = vpop.xlane.xlu0 %2728
      %v2730 = vsel %vm2258, %v2574, 0.0
      %2731 = vadd.xlane.f32.xlu0 %v2730
      %v2732 = vpop.xlane.xlu0 %2731
      %v2733 = vsel %vm2258, %v2576, 0.0
      %2734 = vadd.xlane.f32.xlu0 %v2733
      %v2735 = vpop.xlane.xlu0 %2734
      %v2736 = vsel %vm2258, %v2578, 0.0
      %2737 = vadd.xlane.f32.xlu0 %v2736
      %v2738 = vpop.xlane.xlu0 %2737
      %v2739 = vsel %vm2258, %v2580, 0.0
      %2740 = vadd.xlane.f32.xlu0 %v2739
      %v2741 = vpop.xlane.xlu0 %2740
      %v2742 = vsel %vm2258, %v2582, 0.0
      %2743 = vadd.xlane.f32.xlu0 %v2742
      %v2744 = vpop.xlane.xlu0 %2743
      %v2745 = vsel %vm2258, %v2584, 0.0
      %2746 = vadd.xlane.f32.xlu0 %v2745
      %v2747 = vpop.xlane.xlu0 %2746
      %v2748 = vsel %vm2258, %v2586, 0.0
      %2749 = vadd.xlane.f32.xlu0 %v2748
      %v2750 = vpop.xlane.xlu0 %2749
      %v2751 = vsel %vm2258, %v2588, 0.0
      %2752 = vadd.xlane.f32.xlu0 %v2751
      %v2753 = vpop.xlane.xlu0 %2752
      %v2754 = vsel %vm2258, %v2590, 0.0
      %2755 = vadd.xlane.f32.xlu0 %v2754
      %v2756 = vpop.xlane.xlu0 %2755
      %v2757 = vsel %vm2258, %v2592, 0.0
      %2758 = vadd.xlane.f32.xlu0 %v2757
      %v2759 = vpop.xlane.xlu0 %2758
      %v2760 = vsel %vm2258, %v2594, 0.0
      %2761 = vadd.xlane.f32.xlu0 %v2760
      %v2762 = vpop.xlane.xlu0 %2761
      %v2763 = vrcp.pop %v2597
      %v2764 = vrcp.pop %v2600
      %v2765 = vrcp.pop %v2603
      %v2766 = vrcp.pop %v2606
      %v2767 = vrcp.pop %v2609
      %v2768 = vrcp.pop %v2612
      %v2769 = vrcp.pop %v2615
      %v2770 = vrcp.pop %v2618
      %v2771 = vrcp.pop %v2621
      %v2772 = vrcp.pop %v2624
      %v2773 = vrcp.pop %v2627
      %v2774 = vrcp.pop %v2630
      %v2775 = vrcp.pop %v2633
      %v2776 = vrcp.pop %v2636
      %v2777 = vrcp.pop %v2639
      %v2778 = vrcp.pop %v2642
      %v2779 = vrcp.pop %v2645
      %v2780 = vrcp.pop %v2648
      %v2781 = vrcp.pop %v2651
      %v2782 = vrcp.pop %v2654
      %v2783 = vrcp.pop %v2657
      %v2784 = vrcp.pop %v2660
      %v2785 = vrcp.pop %v2663
      %v2786 = vrcp.pop %v2666
      %v2787 = vrcp.pop %v2669
      %v2788 = vrcp.pop %v2672
      %v2789 = vrcp.pop %v2675
      %v2790 = vrcp.pop %v2678
      %v2791 = vrcp.pop %v2681
      %v2792 = vrcp.pop %v2684
      %v2793 = vrcp.pop %v2687
      %v2794 = vrcp.pop %v2690
      %v2795 = vrcp.pop %v2693
      %v2796 = vrcp.pop %v2696
      %v2797 = vrcp.pop %v2699
      %v2798 = vrcp.pop %v2702
      %v2799 = vrcp.pop %v2705
      %v2800 = vrcp.pop %v2708
      %v2801 = vrcp.pop %v2711
      %v2802 = vrcp.pop %v2714
      %v2803 = vrcp.pop %v2717
      %v2804 = vrcp.pop %v2720
      %v2805 = vrcp.pop %v2723
      %v2806 = vrcp.pop %v2726
      %v2807 = vrcp.pop %v2729
      %v2808 = vrcp.pop %v2732
      %v2809 = vrcp.pop %v2735
      %v2810 = vrcp.pop %v2738
      %v2811 = vrcp.pop %v2741
      %v2812 = vrcp.pop %v2744
      %v2813 = vrcp.pop %v2747
      %v2814 = vrcp.pop %v2750
      %v2815 = vrcp.pop %v2753
      %v2816 = vrcp.pop %v2756
      %v2817 = vrcp.pop %v2759
      %v2818 = vrcp.pop %v2762
      %v2819 = vmul.f32 %v2484, %v2763
      %v2820 = vmul.f32 %v2486, %v2764
      %v2821 = vmul.f32 %v2488, %v2765
      %v2822 = vmul.f32 %v2490, %v2766
      %v2823 = vmul.f32 %v2492, %v2767
      %v2824 = vmul.f32 %v2494, %v2768
      %v2825 = vmul.f32 %v2496, %v2769
      %v2826 = vmul.f32 %v2498, %v2770
      %v2827 = vmul.f32 %v2500, %v2771
      %v2828 = vmul.f32 %v2502, %v2772
      %v2829 = vmul.f32 %v2504, %v2773
      %v2830 = vmul.f32 %v2506, %v2774
      %v2831 = vmul.f32 %v2508, %v2775
      %v2832 = vmul.f32 %v2510, %v2776
      %v2833 = vmul.f32 %v2512, %v2777
      %v2834 = vmul.f32 %v2514, %v2778
      %v2835 = vmul.f32 %v2516, %v2779
      %v2836 = vmul.f32 %v2518, %v2780
      %v2837 = vmul.f32 %v2520, %v2781
      %v2838 = vmul.f32 %v2522, %v2782
      %v2839 = vmul.f32 %v2524, %v2783
      %v2840 = vmul.f32 %v2526, %v2784
      %v2841 = vmul.f32 %v2528, %v2785
      %v2842 = vmul.f32 %v2530, %v2786
      %v2843 = vmul.f32 %v2532, %v2787
      %v2844 = vmul.f32 %v2534, %v2788
      %v2845 = vmul.f32 %v2536, %v2789
      %v2846 = vmul.f32 %v2538, %v2790
      %v2847 = vmul.f32 %v2540, %v2791
      %v2848 = vmul.f32 %v2542, %v2792
      %v2849 = vmul.f32 %v2544, %v2793
      %v2850 = vmul.f32 %v2546, %v2794
      %v2851 = vmul.f32 %v2548, %v2795
      %v2852 = vmul.f32 %v2550, %v2796
      %v2853 = vmul.f32 %v2552, %v2797
      %v2854 = vmul.f32 %v2554, %v2798
      %v2855 = vmul.f32 %v2556, %v2799
      %v2856 = vmul.f32 %v2558, %v2800
      %v2857 = vmul.f32 %v2560, %v2801
      %v2858 = vmul.f32 %v2562, %v2802
      %v2859 = vmul.f32 %v2564, %v2803
      %v2860 = vmul.f32 %v2566, %v2804
      %v2861 = vmul.f32 %v2568, %v2805
      %v2862 = vmul.f32 %v2570, %v2806
      %v2863 = vmul.f32 %v2572, %v2807
      %v2864 = vmul.f32 %v2574, %v2808
      %v2865 = vmul.f32 %v2576, %v2809
      %v2866 = vmul.f32 %v2578, %v2810
      %v2867 = vmul.f32 %v2580, %v2811
      %v2868 = vmul.f32 %v2582, %v2812
      %v2869 = vmul.f32 %v2584, %v2813
      %v2870 = vmul.f32 %v2586, %v2814
      %v2871 = vmul.f32 %v2588, %v2815
      %v2872 = vmul.f32 %v2590, %v2816
      %v2873 = vmul.f32 %v2592, %v2817
      %v2874 = vmul.f32 %v2594, %v2818
      %v2876 = vsel %vm2258, %v2819, 0
      %v2879 = vsel %vm2258, %v2820, 0
      %v2882 = vsel %vm2258, %v2821, 0
      %v2885 = vsel %vm2258, %v2822, 0
      %v2888 = vsel %vm2258, %v2823, 0
      %v2891 = vsel %vm2258, %v2824, 0
      %v2894 = vsel %vm2258, %v2825, 0
      %2896 = vmatprep.subr.mxu0 0.0
      %2897 = vmatpush1.msra.mxu0 %v855
      %2898 = vmatprep.subr.mxu0 0.0
      %2899 = vmatpush1.msra.mxu0 %v856
      %2900 = vmatprep.subr.mxu0 0.0
      %2901 = vmatpush1.msra.mxu0 %v857
      %2902 = vmatprep.subr.mxu0 0.0
      %2903 = vmatpush1.msra.mxu0 %v858
      %2904 = vmatprep.subr.mxu0 0.0
      %2905 = vmatpush1.msra.mxu0 %v859
      %2906 = vmatprep.subr.mxu0 0.0
      %2907 = vmatpush1.msra.mxu0 %v860
      %2908 = vmatprep.subr.mxu0 0.0
      %2909 = vmatpush1.msra.mxu0 %v861
      %2910 = vmatprep.subr.mxu0 0.0
      %2911 = vmatpush1.msra.mxu0 0.0
      %2912 = vmatprep.subr.mxu0 0.0
      %2913 = vmatpush1.msra.mxu0 0.0
      %2914 = vmatprep.subr.mxu0 0.0
      %2915 = vmatpush1.msra.mxu0 0.0
      %2916 = vmatprep.subr.mxu0 0.0
      %2917 = vmatpush1.msra.mxu0 0.0
      %2918 = vmatprep.subr.mxu0 0.0
      %2919 = vmatpush1.msra.mxu0 0.0
      %2920 = vmatprep.subr.mxu0 0.0
      %2921 = vmatpush1.msra.mxu0 0.0
      %2922 = vmatprep.subr.mxu0 0.0
      %2923 = vmatpush1.msra.mxu0 0.0
      %2924 = vmatprep.subr.mxu0 0.0
      %2925 = vmatpush1.msra.mxu0 0.0
      %2926 = vmatprep.subr.mxu0 0.0
      %2927 = vmatpush1.msra.mxu0 0.0
      %2928 = vmatprep.subr.mxu0 0.0
      %2929 = vmatpush1.msra.mxu0 0.0
      %2930 = vmatprep.subr.mxu0 0.0
      %2931 = vmatpush1.msra.mxu0 0.0
      %2932 = vmatprep.subr.mxu0 0.0
      %2933 = vmatpush1.msra.mxu0 0.0
      %2934 = vmatprep.subr.mxu0 0.0
      %2935 = vmatpush1.msra.mxu0 0.0
      %2936 = vmatprep.subr.mxu0 0.0
      %2937 = vmatpush1.msra.mxu0 0.0
      %2938 = vmatprep.subr.mxu0 0.0
      %2939 = vmatpush1.msra.mxu0 0.0
      %2940 = vmatprep.subr.mxu0 0.0
      %2941 = vmatpush1.msra.mxu0 0.0
      %2942 = vmatprep.subr.mxu0 0.0
      %2943 = vmatpush1.msra.mxu0 0.0
      %2944 = vmatprep.subr.mxu0 0.0
      %2945 = vmatpush1.msra.mxu0 0.0
      %2946 = vmatprep.subr.mxu0 0.0
      %2947 = vmatpush1.msra.mxu0 0.0
      %2948 = vmatprep.subr.mxu0 0.0
      %2949 = vmatpush1.msra.mxu0 0.0
      %2950 = vmatprep.subr.mxu0 0.0
      %2951 = vmatpush1.msra.mxu0 0.0
      %2952 = vmatprep.subr.mxu0 0.0
      %2953 = vmatpush1.msra.mxu0 0.0
      %2954 = vmatprep.subr.mxu0 0.0
      %2955 = vmatpush1.msra.mxu0 0.0
      %2956 = vmatprep.subr.mxu0 0.0
      %2957 = vmatpush1.msra.mxu0 0.0
      %2958 = vmatprep.subr.mxu0 0.0
      %2959 = vmatpush1.msra.mxu0 0.0
      %2960 = vmatprep.mubr.f32.mxu0 0.0
      %2961 = vmatmul.mubr.f32.gmra.mrb[0].mxu0 %v2876
      %v2962 = vpop.f32.mrb[0].mxu0
      %v2963 = vadd.f32 0.0, %v2962
      %v2964 = vpop.f32.mrb[0].mxu0
      %2965 = vmatprep.mubr.f32.mxu0 0.0
      %2966 = vmatmul.mubr.f32.gmra.mrb[0].mxu0 %v2879
      %v2967 = vpop.f32.mrb[0].mxu0
      %v2968 = vadd.f32 0.0, %v2967
      %v2969 = vpop.f32.mrb[0].mxu0
      %2970 = vmatprep.mubr.f32.mxu0 0.0
      %2971 = vmatmul.mubr.f32.gmra.mrb[0].mxu0 %v2882
      %v2972 = vpop.f32.mrb[0].mxu0
      %v2973 = vadd.f32 0.0, %v2972
      %v2974 = vpop.f32.mrb[0].mxu0
      %2975 = vmatprep.mubr.f32.mxu0 0.0
      %2976 = vmatmul.mubr.f32.gmra.mrb[0].mxu0 %v2885
      %v2977 = vpop.f32.mrb[0].mxu0
      %v2978 = vadd.f32 0.0, %v2977
      %v2979 = vpop.f32.mrb[0].mxu0
      %2980 = vmatprep.mubr.f32.mxu0 0.0
      %2981 = vmatmul.mubr.f32.gmra.mrb[0].mxu0 %v2888
      %v2982 = vpop.f32.mrb[0].mxu0
      %v2983 = vadd.f32 0.0, %v2982
      %v2984 = vpop.f32.mrb[0].mxu0
      %2985 = vmatprep.mubr.f32.mxu0 0.0
      %2986 = vmatmul.mubr.f32.gmra.mrb[0].mxu0 %v2891
      %v2987 = vpop.f32.mrb[0].mxu0
      %v2988 = vadd.f32 0.0, %v2987
      %v2989 = vpop.f32.mrb[0].mxu0
      %2990 = vmatprep.mubr.f32.mxu0 0.0
      %2991 = vmatmul.mubr.f32.gmra.mrb[0].mxu0 %v2894
      %v2992 = vpop.f32.mrb[0].mxu0
      %v2993 = vadd.f32 0.0, %v2992
      %v2994 = vpop.f32.mrb[0].mxu0
      %2995 = vdwg.mxu0
      %v2997 = vsel %vm2258, %v2826, 0
      %v3000 = vsel %vm2258, %v2827, 0
      %v3003 = vsel %vm2258, %v2828, 0
      %v3006 = vsel %vm2258, %v2829, 0
      %v3009 = vsel %vm2258, %v2830, 0
      %v3012 = vsel %vm2258, %v2831, 0
      %v3015 = vsel %vm2258, %v2832, 0
      %3017 = vmatprep.subr.mxu0 0.0
      %3018 = vmatpush1.msra.mxu0 %v862
      %3019 = vmatprep.subr.mxu0 0.0
      %3020 = vmatpush1.msra.mxu0 %v863
      %3021 = vmatprep.subr.mxu0 0.0
      %3022 = vmatpush1.msra.mxu0 %v864
      %3023 = vmatprep.subr.mxu0 0.0
      %3024 = vmatpush1.msra.mxu0 %v865
      %3025 = vmatprep.subr.mxu0 0.0
      %3026 = vmatpush1.msra.mxu0 %v866
      %3027 = vmatprep.subr.mxu0 0.0
      %3028 = vmatpush1.msra.mxu0 %v867
      %3029 = vmatprep.subr.mxu0 0.0
      %3030 = vmatpush1.msra.mxu0 %v868
      %3031 = vmatprep.subr.mxu0 0.0
      %3032 = vmatpush1.msra.mxu0 0.0
      %3033 = vmatprep.subr.mxu0 0.0
      %3034 = vmatpush1.msra.mxu0 0.0
      %3035 = vmatprep.subr.mxu0 0.0
      %3036 = vmatpush1.msra.mxu0 0.0
      %3037 = vmatprep.subr.mxu0 0.0
      %3038 = vmatpush1.msra.mxu0 0.0
      %3039 = vmatprep.subr.mxu0 0.0
      %3040 = vmatpush1.msra.mxu0 0.0
      %3041 = vmatprep.subr.mxu0 0.0
      %3042 = vmatpush1.msra.mxu0 0.0
      %3043 = vmatprep.subr.mxu0 0.0
      %3044 = vmatpush1.msra.mxu0 0.0
      %3045 = vmatprep.subr.mxu0 0.0
      %3046 = vmatpush1.msra.mxu0 0.0
      %3047 = vmatprep.subr.mxu0 0.0
      %3048 = vmatpush1.msra.mxu0 0.0
      %3049 = vmatprep.subr.mxu0 0.0
      %3050 = vmatpush1.msra.mxu0 0.0
      %3051 = vmatprep.subr.mxu0 0.0
      %3052 = vmatpush1.msra.mxu0 0.0
      %3053 = vmatprep.subr.mxu0 0.0
      %3054 = vmatpush1.msra.mxu0 0.0
      %3055 = vmatprep.subr.mxu0 0.0
      %3056 = vmatpush1.msra.mxu0 0.0
      %3057 = vmatprep.subr.mxu0 0.0
      %3058 = vmatpush1.msra.mxu0 0.0
      %3059 = vmatprep.subr.mxu0 0.0
      %3060 = vmatpush1.msra.mxu0 0.0
      %3061 = vmatprep.subr.mxu0 0.0
      %3062 = vmatpush1.msra.mxu0 0.0
      %3063 = vmatprep.subr.mxu0 0.0
      %3064 = vmatpush1.msra.mxu0 0.0
      %3065 = vmatprep.subr.mxu0 0.0
      %3066 = vmatpush1.msra.mxu0 0.0
      %3067 = vmatprep.subr.mxu0 0.0
      %3068 = vmatpush1.msra.mxu0 0.0
      %3069 = vmatprep.subr.mxu0 0.0
      %3070 = vmatpush1.msra.mxu0 0.0
      %3071 = vmatprep.subr.mxu0 0.0
      %3072 = vmatpush1.msra.mxu0 0.0
      %3073 = vmatprep.subr.mxu0 0.0
      %3074 = vmatpush1.msra.mxu0 0.0
      %3075 = vmatprep.subr.mxu0 0.0
      %3076 = vmatpush1.msra.mxu0 0.0
      %3077 = vmatprep.subr.mxu0 0.0
      %3078 = vmatpush1.msra.mxu0 0.0
      %3079 = vmatprep.subr.mxu0 0.0
      %3080 = vmatpush1.msra.mxu0 0.0
      %3081 = vmatprep.mubr.f32.mxu0 0.0
      %3082 = vmatmul.mubr.f32.gmra.mrb[0].mxu0 %v2997
      %v3083 = vpop.f32.mrb[0].mxu0
      %v3084 = vadd.f32 0.0, %v3083
      %v3085 = vpop.f32.mrb[0].mxu0
      %3086 = vmatprep.mubr.f32.mxu0 0.0
      %3087 = vmatmul.mubr.f32.gmra.mrb[0].mxu0 %v3000
      %v3088 = vpop.f32.mrb[0].mxu0
      %v3089 = vadd.f32 0.0, %v3088
      %v3090 = vpop.f32.mrb[0].mxu0
      %3091 = vmatprep.mubr.f32.mxu0 0.0
      %3092 = vmatmul.mubr.f32.gmra.mrb[0].mxu0 %v3003
      %v3093 = vpop.f32.mrb[0].mxu0
      %v3094 = vadd.f32 0.0, %v3093
      %v3095 = vpop.f32.mrb[0].mxu0
      %3096 = vmatprep.mubr.f32.mxu0 0.0
      %3097 = vmatmul.mubr.f32.gmra.mrb[0].mxu0 %v3006
      %v3098 = vpop.f32.mrb[0].mxu0
      %v3099 = vadd.f32 0.0, %v3098
      %v3100 = vpop.f32.mrb[0].mxu0
      %3101 = vmatprep.mubr.f32.mxu0 0.0
      %3102 = vmatmul.mubr.f32.gmra.mrb[0].mxu0 %v3009
      %v3103 = vpop.f32.mrb[0].mxu0
      %v3104 = vadd.f32 0.0, %v3103
      %v3105 = vpop.f32.mrb[0].mxu0
      %3106 = vmatprep.mubr.f32.mxu0 0.0
      %3107 = vmatmul.mubr.f32.gmra.mrb[0].mxu0 %v3012
      %v3108 = vpop.f32.mrb[0].mxu0
      %v3109 = vadd.f32 0.0, %v3108
      %v3110 = vpop.f32.mrb[0].mxu0
      %3111 = vmatprep.mubr.f32.mxu0 0.0
      %3112 = vmatmul.mubr.f32.gmra.mrb[0].mxu0 %v3015
      %v3113 = vpop.f32.mrb[0].mxu0
      %v3114 = vadd.f32 0.0, %v3113
      %v3115 = vpop.f32.mrb[0].mxu0
      %3116 = vdwg.mxu0
      %v3118 = vsel %vm2258, %v2833, 0
      %v3121 = vsel %vm2258, %v2834, 0
      %v3124 = vsel %vm2258, %v2835, 0
      %v3127 = vsel %vm2258, %v2836, 0
      %v3130 = vsel %vm2258, %v2837, 0
      %v3133 = vsel %vm2258, %v2838, 0
      %v3136 = vsel %vm2258, %v2839, 0
      %3138 = vmatprep.subr.mxu0 0.0
      %3139 = vmatpush1.msra.mxu0 %v887
      %3140 = vmatprep.subr.mxu0 0.0
      %3141 = vmatpush1.msra.mxu0 %v888
      %3142 = vmatprep.subr.mxu0 0.0
      %3143 = vmatpush1.msra.mxu0 %v889
      %3144 = vmatprep.subr.mxu0 0.0
      %3145 = vmatpush1.msra.mxu0 %v890
      %3146 = vmatprep.subr.mxu0 0.0
      %3147 = vmatpush1.msra.mxu0 %v891
      %3148 = vmatprep.subr.mxu0 0.0
      %3149 = vmatpush1.msra.mxu0 %v892
      %3150 = vmatprep.subr.mxu0 0.0
      %3151 = vmatpush1.msra.mxu0 %v893
      %3152 = vmatprep.subr.mxu0 0.0
      %3153 = vmatpush1.msra.mxu0 0.0
      %3154 = vmatprep.subr.mxu0 0.0
      %3155 = vmatpush1.msra.mxu0 0.0
      %3156 = vmatprep.subr.mxu0 0.0
      %3157 = vmatpush1.msra.mxu0 0.0
      %3158 = vmatprep.subr.mxu0 0.0
      %3159 = vmatpush1.msra.mxu0 0.0
      %3160 = vmatprep.subr.mxu0 0.0
      %3161 = vmatpush1.msra.mxu0 0.0
      %3162 = vmatprep.subr.mxu0 0.0
      %3163 = vmatpush1.msra.mxu0 0.0
      %3164 = vmatprep.subr.mxu0 0.0
      %3165 = vmatpush1.msra.mxu0 0.0
      %3166 = vmatprep.subr.mxu0 0.0
      %3167 = vmatpush1.msra.mxu0 0.0
      %3168 = vmatprep.subr.mxu0 0.0
      %3169 = vmatpush1.msra.mxu0 0.0
      %3170 = vmatprep.subr.mxu0 0.0
      %3171 = vmatpush1.msra.mxu0 0.0
      %3172 = vmatprep.subr.mxu0 0.0
      %3173 = vmatpush1.msra.mxu0 0.0
      %3174 = vmatprep.subr.mxu0 0.0
      %3175 = vmatpush1.msra.mxu0 0.0
      %3176 = vmatprep.subr.mxu0 0.0
      %3177 = vmatpush1.msra.mxu0 0.0
      %3178 = vmatprep.subr.mxu0 0.0
      %3179 = vmatpush1.msra.mxu0 0.0
      %3180 = vmatprep.subr.mxu0 0.0
      %3181 = vmatpush1.msra.mxu0 0.0
      %3182 = vmatprep.subr.mxu0 0.0
      %3183 = vmatpush1.msra.mxu0 0.0
      %3184 = vmatprep.subr.mxu0 0.0
      %3185 = vmatpush1.msra.mxu0 0.0
      %3186 = vmatprep.subr.mxu0 0.0
      %3187 = vmatpush1.msra.mxu0 0.0
      %3188 = vmatprep.subr.mxu0 0.0
      %3189 = vmatpush1.msra.mxu0 0.0
      %3190 = vmatprep.subr.mxu0 0.0
      %3191 = vmatpush1.msra.mxu0 0.0
      %3192 = vmatprep.subr.mxu0 0.0
      %3193 = vmatpush1.msra.mxu0 0.0
      %3194 = vmatprep.subr.mxu0 0.0
      %3195 = vmatpush1.msra.mxu0 0.0
      %3196 = vmatprep.subr.mxu0 0.0
      %3197 = vmatpush1.msra.mxu0 0.0
      %3198 = vmatprep.subr.mxu0 0.0
      %3199 = vmatpush1.msra.mxu0 0.0
      %3200 = vmatprep.subr.mxu0 0.0
      %3201 = vmatpush1.msra.mxu0 0.0
      %3202 = vmatprep.mubr.f32.mxu0 0.0
      %3203 = vmatmul.mubr.f32.gmra.mrb[0].mxu0 %v3118
      %v3204 = vpop.f32.mrb[0].mxu0
      %v3205 = vadd.f32 0.0, %v3204
      %v3206 = vpop.f32.mrb[0].mxu0
      %3207 = vmatprep.mubr.f32.mxu0 0.0
      %3208 = vmatmul.mubr.f32.gmra.mrb[0].mxu0 %v3121
      %v3209 = vpop.f32.mrb[0].mxu0
      %v3210 = vadd.f32 0.0, %v3209
      %v3211 = vpop.f32.mrb[0].mxu0
      %3212 = vmatprep.mubr.f32.mxu0 0.0
      %3213 = vmatmul.mubr.f32.gmra.mrb[0].mxu0 %v3124
      %v3214 = vpop.f32.mrb[0].mxu0
      %v3215 = vadd.f32 0.0, %v3214
      %v3216 = vpop.f32.mrb[0].mxu0
      %3217 = vmatprep.mubr.f32.mxu0 0.0
      %3218 = vmatmul.mubr.f32.gmra.mrb[0].mxu0 %v3127
      %v3219 = vpop.f32.mrb[0].mxu0
      %v3220 = vadd.f32 0.0, %v3219
      %v3221 = vpop.f32.mrb[0].mxu0
      %3222 = vmatprep.mubr.f32.mxu0 0.0
      %3223 = vmatmul.mubr.f32.gmra.mrb[0].mxu0 %v3130
      %v3224 = vpop.f32.mrb[0].mxu0
      %v3225 = vadd.f32 0.0, %v3224
      %v3226 = vpop.f32.mrb[0].mxu0
      %3227 = vmatprep.mubr.f32.mxu0 0.0
      %3228 = vmatmul.mubr.f32.gmra.mrb[0].mxu0 %v3133
      %v3229 = vpop.f32.mrb[0].mxu0
      %v3230 = vadd.f32 0.0, %v3229
      %v3231 = vpop.f32.mrb[0].mxu0
      %3232 = vmatprep.mubr.f32.mxu0 0.0
      %3233 = vmatmul.mubr.f32.gmra.mrb[0].mxu0 %v3136
      %v3234 = vpop.f32.mrb[0].mxu0
      %v3235 = vadd.f32 0.0, %v3234
      %v3236 = vpop.f32.mrb[0].mxu0
      %3237 = vdwg.mxu0
      %v3239 = vsel %vm2258, %v2840, 0
      %v3242 = vsel %vm2258, %v2841, 0
      %v3245 = vsel %vm2258, %v2842, 0
      %v3248 = vsel %vm2258, %v2843, 0
      %v3251 = vsel %vm2258, %v2844, 0
      %v3254 = vsel %vm2258, %v2845, 0
      %v3257 = vsel %vm2258, %v2846, 0
      %3259 = vmatprep.subr.mxu0 0.0
      %3260 = vmatpush1.msra.mxu0 %v894
      %3261 = vmatprep.subr.mxu0 0.0
      %3262 = vmatpush1.msra.mxu0 %v895
      %3263 = vmatprep.subr.mxu0 0.0
      %3264 = vmatpush1.msra.mxu0 %v896
      %3265 = vmatprep.subr.mxu0 0.0
      %3266 = vmatpush1.msra.mxu0 %v897
      %3267 = vmatprep.subr.mxu0 0.0
      %3268 = vmatpush1.msra.mxu0 %v898
      %3269 = vmatprep.subr.mxu0 0.0
      %3270 = vmatpush1.msra.mxu0 %v899
      %3271 = vmatprep.subr.mxu0 0.0
      %3272 = vmatpush1.msra.mxu0 %v900
      %3273 = vmatprep.subr.mxu0 0.0
      %3274 = vmatpush1.msra.mxu0 0.0
      %3275 = vmatprep.subr.mxu0 0.0
      %3276 = vmatpush1.msra.mxu0 0.0
      %3277 = vmatprep.subr.mxu0 0.0
      %3278 = vmatpush1.msra.mxu0 0.0
      %3279 = vmatprep.subr.mxu0 0.0
      %3280 = vmatpush1.msra.mxu0 0.0
      %3281 = vmatprep.subr.mxu0 0.0
      %3282 = vmatpush1.msra.mxu0 0.0
      %3283 = vmatprep.subr.mxu0 0.0
      %3284 = vmatpush1.msra.mxu0 0.0
      %3285 = vmatprep.subr.mxu0 0.0
      %3286 = vmatpush1.msra.mxu0 0.0
      %3287 = vmatprep.subr.mxu0 0.0
      %3288 = vmatpush1.msra.mxu0 0.0
      %3289 = vmatprep.subr.mxu0 0.0
      %3290 = vmatpush1.msra.mxu0 0.0
      %3291 = vmatprep.subr.mxu0 0.0
      %3292 = vmatpush1.msra.mxu0 0.0
      %3293 = vmatprep.subr.mxu0 0.0
      %3294 = vmatpush1.msra.mxu0 0.0
      %3295 = vmatprep.subr.mxu0 0.0
      %3296 = vmatpush1.msra.mxu0 0.0
      %3297 = vmatprep.subr.mxu0 0.0
      %3298 = vmatpush1.msra.mxu0 0.0
      %3299 = vmatprep.subr.mxu0 0.0
      %3300 = vmatpush1.msra.mxu0 0.0
      %3301 = vmatprep.subr.mxu0 0.0
      %3302 = vmatpush1.msra.mxu0 0.0
      %3303 = vmatprep.subr.mxu0 0.0
      %3304 = vmatpush1.msra.mxu0 0.0
      %3305 = vmatprep.subr.mxu0 0.0
      %3306 = vmatpush1.msra.mxu0 0.0
      %3307 = vmatprep.subr.mxu0 0.0
      %3308 = vmatpush1.msra.mxu0 0.0
      %3309 = vmatprep.subr.mxu0 0.0
      %3310 = vmatpush1.msra.mxu0 0.0
      %3311 = vmatprep.subr.mxu0 0.0
      %3312 = vmatpush1.msra.mxu0 0.0
      %3313 = vmatprep.subr.mxu0 0.0
      %3314 = vmatpush1.msra.mxu0 0.0
      %3315 = vmatprep.subr.mxu0 0.0
      %3316 = vmatpush1.msra.mxu0 0.0
      %3317 = vmatprep.subr.mxu0 0.0
      %3318 = vmatpush1.msra.mxu0 0.0
      %3319 = vmatprep.subr.mxu0 0.0
      %3320 = vmatpush1.msra.mxu0 0.0
      %3321 = vmatprep.subr.mxu0 0.0
      %3322 = vmatpush1.msra.mxu0 0.0
      %3323 = vmatprep.mubr.f32.mxu0 0.0
      %3324 = vmatmul.mubr.f32.gmra.mrb[0].mxu0 %v3239
      %v3325 = vpop.f32.mrb[0].mxu0
      %v3326 = vadd.f32 0.0, %v3325
      %v3327 = vpop.f32.mrb[0].mxu0
      %3328 = vmatprep.mubr.f32.mxu0 0.0
      %3329 = vmatmul.mubr.f32.gmra.mrb[0].mxu0 %v3242
      %v3330 = vpop.f32.mrb[0].mxu0
      %v3331 = vadd.f32 0.0, %v3330
      %v3332 = vpop.f32.mrb[0].mxu0
      %3333 = vmatprep.mubr.f32.mxu0 0.0
      %3334 = vmatmul.mubr.f32.gmra.mrb[0].mxu0 %v3245
      %v3335 = vpop.f32.mrb[0].mxu0
      %v3336 = vadd.f32 0.0, %v3335
      %v3337 = vpop.f32.mrb[0].mxu0
      %3338 = vmatprep.mubr.f32.mxu0 0.0
      %3339 = vmatmul.mubr.f32.gmra.mrb[0].mxu0 %v3248
      %v3340 = vpop.f32.mrb[0].mxu0
      %v3341 = vadd.f32 0.0, %v3340
      %v3342 = vpop.f32.mrb[0].mxu0
      %3343 = vmatprep.mubr.f32.mxu0 0.0
      %3344 = vmatmul.mubr.f32.gmra.mrb[0].mxu0 %v3251
      %v3345 = vpop.f32.mrb[0].mxu0
      %v3346 = vadd.f32 0.0, %v3345
      %v3347 = vpop.f32.mrb[0].mxu0
      %3348 = vmatprep.mubr.f32.mxu0 0.0
      %3349 = vmatmul.mubr.f32.gmra.mrb[0].mxu0 %v3254
      %v3350 = vpop.f32.mrb[0].mxu0
      %v3351 = vadd.f32 0.0, %v3350
      %v3352 = vpop.f32.mrb[0].mxu0
      %3353 = vmatprep.mubr.f32.mxu0 0.0
      %3354 = vmatmul.mubr.f32.gmra.mrb[0].mxu0 %v3257
      %v3355 = vpop.f32.mrb[0].mxu0
      %v3356 = vadd.f32 0.0, %v3355
      %v3357 = vpop.f32.mrb[0].mxu0
      %3358 = vdwg.mxu0
      %v3360 = vsel %vm2258, %v2847, 0
      %v3363 = vsel %vm2258, %v2848, 0
      %v3366 = vsel %vm2258, %v2849, 0
      %v3369 = vsel %vm2258, %v2850, 0
      %v3372 = vsel %vm2258, %v2851, 0
      %v3375 = vsel %vm2258, %v2852, 0
      %v3378 = vsel %vm2258, %v2853, 0
      %3380 = vmatprep.subr.mxu0 0.0
      %3381 = vmatpush1.msra.mxu0 %v919
      %3382 = vmatprep.subr.mxu0 0.0
      %3383 = vmatpush1.msra.mxu0 %v920
      %3384 = vmatprep.subr.mxu0 0.0
      %3385 = vmatpush1.msra.mxu0 %v921
      %3386 = vmatprep.subr.mxu0 0.0
      %3387 = vmatpush1.msra.mxu0 %v922
      %3388 = vmatprep.subr.mxu0 0.0
      %3389 = vmatpush1.msra.mxu0 %v923
      %3390 = vmatprep.subr.mxu0 0.0
      %3391 = vmatpush1.msra.mxu0 %v924
      %3392 = vmatprep.subr.mxu0 0.0
      %3393 = vmatpush1.msra.mxu0 %v925
      %3394 = vmatprep.subr.mxu0 0.0
      %3395 = vmatpush1.msra.mxu0 0.0
      %3396 = vmatprep.subr.mxu0 0.0
      %3397 = vmatpush1.msra.mxu0 0.0
      %3398 = vmatprep.subr.mxu0 0.0
      %3399 = vmatpush1.msra.mxu0 0.0
      %3400 = vmatprep.subr.mxu0 0.0
      %3401 = vmatpush1.msra.mxu0 0.0
      %3402 = vmatprep.subr.mxu0 0.0
      %3403 = vmatpush1.msra.mxu0 0.0
      %3404 = vmatprep.subr.mxu0 0.0
      %3405 = vmatpush1.msra.mxu0 0.0
      %3406 = vmatprep.subr.mxu0 0.0
      %3407 = vmatpush1.msra.mxu0 0.0
      %3408 = vmatprep.subr.mxu0 0.0
      %3409 = vmatpush1.msra.mxu0 0.0
      %3410 = vmatprep.subr.mxu0 0.0
      %3411 = vmatpush1.msra.mxu0 0.0
      %3412 = vmatprep.subr.mxu0 0.0
      %3413 = vmatpush1.msra.mxu0 0.0
      %3414 = vmatprep.subr.mxu0 0.0
      %3415 = vmatpush1.msra.mxu0 0.0
      %3416 = vmatprep.subr.mxu0 0.0
      %3417 = vmatpush1.msra.mxu0 0.0
      %3418 = vmatprep.subr.mxu0 0.0
      %3419 = vmatpush1.msra.mxu0 0.0
      %3420 = vmatprep.subr.mxu0 0.0
      %3421 = vmatpush1.msra.mxu0 0.0
      %3422 = vmatprep.subr.mxu0 0.0
      %3423 = vmatpush1.msra.mxu0 0.0
      %3424 = vmatprep.subr.mxu0 0.0
      %3425 = vmatpush1.msra.mxu0 0.0
      %3426 = vmatprep.subr.mxu0 0.0
      %3427 = vmatpush1.msra.mxu0 0.0
      %3428 = vmatprep.subr.mxu0 0.0
      %3429 = vmatpush1.msra.mxu0 0.0
      %3430 = vmatprep.subr.mxu0 0.0
      %3431 = vmatpush1.msra.mxu0 0.0
      %3432 = vmatprep.subr.mxu0 0.0
      %3433 = vmatpush1.msra.mxu0 0.0
      %3434 = vmatprep.subr.mxu0 0.0
      %3435 = vmatpush1.msra.mxu0 0.0
      %3436 = vmatprep.subr.mxu0 0.0
      %3437 = vmatpush1.msra.mxu0 0.0
      %3438 = vmatprep.subr.mxu0 0.0
      %3439 = vmatpush1.msra.mxu0 0.0
      %3440 = vmatprep.subr.mxu0 0.0
      %3441 = vmatpush1.msra.mxu0 0.0
      %3442 = vmatprep.subr.mxu0 0.0
      %3443 = vmatpush1.msra.mxu0 0.0
      %3444 = vmatprep.mubr.f32.mxu0 0.0
      %3445 = vmatmul.mubr.f32.gmra.mrb[0].mxu0 %v3360
      %v3446 = vpop.f32.mrb[0].mxu0
      %v3447 = vadd.f32 0.0, %v3446
      %v3448 = vpop.f32.mrb[0].mxu0
      %3449 = vmatprep.mubr.f32.mxu0 0.0
      %3450 = vmatmul.mubr.f32.gmra.mrb[0].mxu0 %v3363
      %v3451 = vpop.f32.mrb[0].mxu0
      %v3452 = vadd.f32 0.0, %v3451
      %v3453 = vpop.f32.mrb[0].mxu0
      %3454 = vmatprep.mubr.f32.mxu0 0.0
      %3455 = vmatmul.mubr.f32.gmra.mrb[0].mxu0 %v3366
      %v3456 = vpop.f32.mrb[0].mxu0
      %v3457 = vadd.f32 0.0, %v3456
      %v3458 = vpop.f32.mrb[0].mxu0
      %3459 = vmatprep.mubr.f32.mxu0 0.0
      %3460 = vmatmul.mubr.f32.gmra.mrb[0].mxu0 %v3369
      %v3461 = vpop.f32.mrb[0].mxu0
      %v3462 = vadd.f32 0.0, %v3461
      %v3463 = vpop.f32.mrb[0].mxu0
      %3464 = vmatprep.mubr.f32.mxu0 0.0
      %3465 = vmatmul.mubr.f32.gmra.mrb[0].mxu0 %v3372
      %v3466 = vpop.f32.mrb[0].mxu0
      %v3467 = vadd.f32 0.0, %v3466
      %v3468 = vpop.f32.mrb[0].mxu0
      %3469 = vmatprep.mubr.f32.mxu0 0.0
      %3470 = vmatmul.mubr.f32.gmra.mrb[0].mxu0 %v3375
      %v3471 = vpop.f32.mrb[0].mxu0
      %v3472 = vadd.f32 0.0, %v3471
      %v3473 = vpop.f32.mrb[0].mxu0
      %3474 = vmatprep.mubr.f32.mxu0 0.0
      %3475 = vmatmul.mubr.f32.gmra.mrb[0].mxu0 %v3378
      %v3476 = vpop.f32.mrb[0].mxu0
      %v3477 = vadd.f32 0.0, %v3476
      %v3478 = vpop.f32.mrb[0].mxu0
      %3479 = vdwg.mxu0
      %v3481 = vsel %vm2258, %v2854, 0
      %v3484 = vsel %vm2258, %v2855, 0
      %v3487 = vsel %vm2258, %v2856, 0
      %v3490 = vsel %vm2258, %v2857, 0
      %v3493 = vsel %vm2258, %v2858, 0
      %v3496 = vsel %vm2258, %v2859, 0
      %v3499 = vsel %vm2258, %v2860, 0
      %3501 = vmatprep.subr.mxu0 0.0
      %3502 = vmatpush1.msra.mxu0 %v926
      %3503 = vmatprep.subr.mxu0 0.0
      %3504 = vmatpush1.msra.mxu0 %v927
      %3505 = vmatprep.subr.mxu0 0.0
      %3506 = vmatpush1.msra.mxu0 %v928
      %3507 = vmatprep.subr.mxu0 0.0
      %3508 = vmatpush1.msra.mxu0 %v929
      %3509 = vmatprep.subr.mxu0 0.0
      %3510 = vmatpush1.msra.mxu0 %v930
      %3511 = vmatprep.subr.mxu0 0.0
      %3512 = vmatpush1.msra.mxu0 %v931
      %3513 = vmatprep.subr.mxu0 0.0
      %3514 = vmatpush1.msra.mxu0 %v932
      %3515 = vmatprep.subr.mxu0 0.0
      %3516 = vmatpush1.msra.mxu0 0.0
      %3517 = vmatprep.subr.mxu0 0.0
      %3518 = vmatpush1.msra.mxu0 0.0
      %3519 = vmatprep.subr.mxu0 0.0
      %3520 = vmatpush1.msra.mxu0 0.0
      %3521 = vmatprep.subr.mxu0 0.0
      %3522 = vmatpush1.msra.mxu0 0.0
      %3523 = vmatprep.subr.mxu0 0.0
      %3524 = vmatpush1.msra.mxu0 0.0
      %3525 = vmatprep.subr.mxu0 0.0
      %3526 = vmatpush1.msra.mxu0 0.0
      %3527 = vmatprep.subr.mxu0 0.0
      %3528 = vmatpush1.msra.mxu0 0.0
      %3529 = vmatprep.subr.mxu0 0.0
      %3530 = vmatpush1.msra.mxu0 0.0
      %3531 = vmatprep.subr.mxu0 0.0
      %3532 = vmatpush1.msra.mxu0 0.0
      %3533 = vmatprep.subr.mxu0 0.0
      %3534 = vmatpush1.msra.mxu0 0.0
      %3535 = vmatprep.subr.mxu0 0.0
      %3536 = vmatpush1.msra.mxu0 0.0
      %3537 = vmatprep.subr.mxu0 0.0
      %3538 = vmatpush1.msra.mxu0 0.0
      %3539 = vmatprep.subr.mxu0 0.0
      %3540 = vmatpush1.msra.mxu0 0.0
      %3541 = vmatprep.subr.mxu0 0.0
      %3542 = vmatpush1.msra.mxu0 0.0
      %3543 = vmatprep.subr.mxu0 0.0
      %3544 = vmatpush1.msra.mxu0 0.0
      %3545 = vmatprep.subr.mxu0 0.0
      %3546 = vmatpush1.msra.mxu0 0.0
      %3547 = vmatprep.subr.mxu0 0.0
      %3548 = vmatpush1.msra.mxu0 0.0
      %3549 = vmatprep.subr.mxu0 0.0
      %3550 = vmatpush1.msra.mxu0 0.0
      %3551 = vmatprep.subr.mxu0 0.0
      %3552 = vmatpush1.msra.mxu0 0.0
      %3553 = vmatprep.subr.mxu0 0.0
      %3554 = vmatpush1.msra.mxu0 0.0
      %3555 = vmatprep.subr.mxu0 0.0
      %3556 = vmatpush1.msra.mxu0 0.0
      %3557 = vmatprep.subr.mxu0 0.0
      %3558 = vmatpush1.msra.mxu0 0.0
      %3559 = vmatprep.subr.mxu0 0.0
      %3560 = vmatpush1.msra.mxu0 0.0
      %3561 = vmatprep.subr.mxu0 0.0
      %3562 = vmatpush1.msra.mxu0 0.0
      %3563 = vmatprep.subr.mxu0 0.0
      %3564 = vmatpush1.msra.mxu0 0.0
      %3565 = vmatprep.mubr.f32.mxu0 0.0
      %3566 = vmatmul.mubr.f32.gmra.mrb[0].mxu0 %v3481
      %v3567 = vpop.f32.mrb[0].mxu0
      %v3568 = vadd.f32 0.0, %v3567
      %v3569 = vpop.f32.mrb[0].mxu0
      %3570 = vmatprep.mubr.f32.mxu0 0.0
      %3571 = vmatmul.mubr.f32.gmra.mrb[0].mxu0 %v3484
      %v3572 = vpop.f32.mrb[0].mxu0
      %v3573 = vadd.f32 0.0, %v3572
      %v3574 = vpop.f32.mrb[0].mxu0
      %3575 = vmatprep.mubr.f32.mxu0 0.0
      %3576 = vmatmul.mubr.f32.gmra.mrb[0].mxu0 %v3487
      %v3577 = vpop.f32.mrb[0].mxu0
      %v3578 = vadd.f32 0.0, %v3577
      %v3579 = vpop.f32.mrb[0].mxu0
      %3580 = vmatprep.mubr.f32.mxu0 0.0
      %3581 = vmatmul.mubr.f32.gmra.mrb[0].mxu0 %v3490
      %v3582 = vpop.f32.mrb[0].mxu0
      %v3583 = vadd.f32 0.0, %v3582
      %v3584 = vpop.f32.mrb[0].mxu0
      %3585 = vmatprep.mubr.f32.mxu0 0.0
      %3586 = vmatmul.mubr.f32.gmra.mrb[0].mxu0 %v3493
      %v3587 = vpop.f32.mrb[0].mxu0
      %v3588 = vadd.f32 0.0, %v3587
      %v3589 = vpop.f32.mrb[0].mxu0
      %3590 = vmatprep.mubr.f32.mxu0 0.0
      %3591 = vmatmul.mubr.f32.gmra.mrb[0].mxu0 %v3496
      %v3592 = vpop.f32.mrb[0].mxu0
      %v3593 = vadd.f32 0.0, %v3592
      %v3594 = vpop.f32.mrb[0].mxu0
      %3595 = vmatprep.mubr.f32.mxu0 0.0
      %3596 = vmatmul.mubr.f32.gmra.mrb[0].mxu0 %v3499
      %v3597 = vpop.f32.mrb[0].mxu0
      %v3598 = vadd.f32 0.0, %v3597
      %v3599 = vpop.f32.mrb[0].mxu0
      %3600 = vdwg.mxu0
      %v3602 = vsel %vm2258, %v2861, 0
      %v3605 = vsel %vm2258, %v2862, 0
      %v3608 = vsel %vm2258, %v2863, 0
      %v3611 = vsel %vm2258, %v2864, 0
      %v3614 = vsel %vm2258, %v2865, 0
      %v3617 = vsel %vm2258, %v2866, 0
      %v3620 = vsel %vm2258, %v2867, 0
      %3622 = vmatprep.subr.mxu0 0.0
      %3623 = vmatpush1.msra.mxu0 %v951
      %3624 = vmatprep.subr.mxu0 0.0
      %3625 = vmatpush1.msra.mxu0 %v952
      %3626 = vmatprep.subr.mxu0 0.0
      %3627 = vmatpush1.msra.mxu0 %v953
      %3628 = vmatprep.subr.mxu0 0.0
      %3629 = vmatpush1.msra.mxu0 %v954
      %3630 = vmatprep.subr.mxu0 0.0
      %3631 = vmatpush1.msra.mxu0 %v955
      %3632 = vmatprep.subr.mxu0 0.0
      %3633 = vmatpush1.msra.mxu0 %v956
      %3634 = vmatprep.subr.mxu0 0.0
      %3635 = vmatpush1.msra.mxu0 %v957
      %3636 = vmatprep.subr.mxu0 0.0
      %3637 = vmatpush1.msra.mxu0 0.0
      %3638 = vmatprep.subr.mxu0 0.0
      %3639 = vmatpush1.msra.mxu0 0.0
      %3640 = vmatprep.subr.mxu0 0.0
      %3641 = vmatpush1.msra.mxu0 0.0
      %3642 = vmatprep.subr.mxu0 0.0
      %3643 = vmatpush1.msra.mxu0 0.0
      %3644 = vmatprep.subr.mxu0 0.0
      %3645 = vmatpush1.msra.mxu0 0.0
      %3646 = vmatprep.subr.mxu0 0.0
      %3647 = vmatpush1.msra.mxu0 0.0
      %3648 = vmatprep.subr.mxu0 0.0
      %3649 = vmatpush1.msra.mxu0 0.0
      %3650 = vmatprep.subr.mxu0 0.0
      %3651 = vmatpush1.msra.mxu0 0.0
      %3652 = vmatprep.subr.mxu0 0.0
      %3653 = vmatpush1.msra.mxu0 0.0
      %3654 = vmatprep.subr.mxu0 0.0
      %3655 = vmatpush1.msra.mxu0 0.0
      %3656 = vmatprep.subr.mxu0 0.0
      %3657 = vmatpush1.msra.mxu0 0.0
      %3658 = vmatprep.subr.mxu0 0.0
      %3659 = vmatpush1.msra.mxu0 0.0
      %3660 = vmatprep.subr.mxu0 0.0
      %3661 = vmatpush1.msra.mxu0 0.0
      %3662 = vmatprep.subr.mxu0 0.0
      %3663 = vmatpush1.msra.mxu0 0.0
      %3664 = vmatprep.subr.mxu0 0.0
      %3665 = vmatpush1.msra.mxu0 0.0
      %3666 = vmatprep.subr.mxu0 0.0
      %3667 = vmatpush1.msra.mxu0 0.0
      %3668 = vmatprep.subr.mxu0 0.0
      %3669 = vmatpush1.msra.mxu0 0.0
      %3670 = vmatprep.subr.mxu0 0.0
      %3671 = vmatpush1.msra.mxu0 0.0
      %3672 = vmatprep.subr.mxu0 0.0
      %3673 = vmatpush1.msra.mxu0 0.0
      %3674 = vmatprep.subr.mxu0 0.0
      %3675 = vmatpush1.msra.mxu0 0.0
      %3676 = vmatprep.subr.mxu0 0.0
      %3677 = vmatpush1.msra.mxu0 0.0
      %3678 = vmatprep.subr.mxu0 0.0
      %3679 = vmatpush1.msra.mxu0 0.0
      %3680 = vmatprep.subr.mxu0 0.0
      %3681 = vmatpush1.msra.mxu0 0.0
      %3682 = vmatprep.subr.mxu0 0.0
      %3683 = vmatpush1.msra.mxu0 0.0
      %3684 = vmatprep.subr.mxu0 0.0
      %3685 = vmatpush1.msra.mxu0 0.0
      %3686 = vmatprep.mubr.f32.mxu0 0.0
      %3687 = vmatmul.mubr.f32.gmra.mrb[0].mxu0 %v3602
      %v3688 = vpop.f32.mrb[0].mxu0
      %v3689 = vadd.f32 0.0, %v3688
      %v3690 = vpop.f32.mrb[0].mxu0
      %3691 = vmatprep.mubr.f32.mxu0 0.0
      %3692 = vmatmul.mubr.f32.gmra.mrb[0].mxu0 %v3605
      %v3693 = vpop.f32.mrb[0].mxu0
      %v3694 = vadd.f32 0.0, %v3693
      %v3695 = vpop.f32.mrb[0].mxu0
      %3696 = vmatprep.mubr.f32.mxu0 0.0
      %3697 = vmatmul.mubr.f32.gmra.mrb[0].mxu0 %v3608
      %v3698 = vpop.f32.mrb[0].mxu0
      %v3699 = vadd.f32 0.0, %v3698
      %v3700 = vpop.f32.mrb[0].mxu0
      %3701 = vmatprep.mubr.f32.mxu0 0.0
      %3702 = vmatmul.mubr.f32.gmra.mrb[0].mxu0 %v3611
      %v3703 = vpop.f32.mrb[0].mxu0
      %v3704 = vadd.f32 0.0, %v3703
      %v3705 = vpop.f32.mrb[0].mxu0
      %3706 = vmatprep.mubr.f32.mxu0 0.0
      %3707 = vmatmul.mubr.f32.gmra.mrb[0].mxu0 %v3614
      %v3708 = vpop.f32.mrb[0].mxu0
      %v3709 = vadd.f32 0.0, %v3708
      %v3710 = vpop.f32.mrb[0].mxu0
      %3711 = vmatprep.mubr.f32.mxu0 0.0
      %3712 = vmatmul.mubr.f32.gmra.mrb[0].mxu0 %v3617
      %v3713 = vpop.f32.mrb[0].mxu0
      %v3714 = vadd.f32 0.0, %v3713
      %v3715 = vpop.f32.mrb[0].mxu0
      %3716 = vmatprep.mubr.f32.mxu0 0.0
      %3717 = vmatmul.mubr.f32.gmra.mrb[0].mxu0 %v3620
      %v3718 = vpop.f32.mrb[0].mxu0
      %v3719 = vadd.f32 0.0, %v3718
      %v3720 = vpop.f32.mrb[0].mxu0
      %3721 = vdwg.mxu0
      %v3723 = vsel %vm2258, %v2868, 0
      %v3726 = vsel %vm2258, %v2869, 0
      %v3729 = vsel %vm2258, %v2870, 0
      %v3732 = vsel %vm2258, %v2871, 0
      %v3735 = vsel %vm2258, %v2872, 0
      %v3738 = vsel %vm2258, %v2873, 0
      %v3741 = vsel %vm2258, %v2874, 0
      %3743 = vmatprep.subr.mxu0 0.0
      %3744 = vmatpush1.msra.mxu0 %v958
      %3745 = vmatprep.subr.mxu0 0.0
      %3746 = vmatpush1.msra.mxu0 %v959
      %3747 = vmatprep.subr.mxu0 0.0
      %3748 = vmatpush1.msra.mxu0 %v960
      %3749 = vmatprep.subr.mxu0 0.0
      %3750 = vmatpush1.msra.mxu0 %v961
      %3751 = vmatprep.subr.mxu0 0.0
      %3752 = vmatpush1.msra.mxu0 %v962
      %3753 = vmatprep.subr.mxu0 0.0
      %3754 = vmatpush1.msra.mxu0 %v963
      %3755 = vmatprep.subr.mxu0 0.0
      %3756 = vmatpush1.msra.mxu0 %v964
      %3757 = vmatprep.subr.mxu0 0.0
      %3758 = vmatpush1.msra.mxu0 0.0
      %3759 = vmatprep.subr.mxu0 0.0
      %3760 = vmatpush1.msra.mxu0 0.0
      %3761 = vmatprep.subr.mxu0 0.0
      %3762 = vmatpush1.msra.mxu0 0.0
      %3763 = vmatprep.subr.mxu0 0.0
      %3764 = vmatpush1.msra.mxu0 0.0
      %3765 = vmatprep.subr.mxu0 0.0
      %3766 = vmatpush1.msra.mxu0 0.0
      %3767 = vmatprep.subr.mxu0 0.0
      %3768 = vmatpush1.msra.mxu0 0.0
      %3769 = vmatprep.subr.mxu0 0.0
      %3770 = vmatpush1.msra.mxu0 0.0
      %3771 = vmatprep.subr.mxu0 0.0
      %3772 = vmatpush1.msra.mxu0 0.0
      %3773 = vmatprep.subr.mxu0 0.0
      %3774 = vmatpush1.msra.mxu0 0.0
      %3775 = vmatprep.subr.mxu0 0.0
      %3776 = vmatpush1.msra.mxu0 0.0
      %3777 = vmatprep.subr.mxu0 0.0
      %3778 = vmatpush1.msra.mxu0 0.0
      %3779 = vmatprep.subr.mxu0 0.0
      %3780 = vmatpush1.msra.mxu0 0.0
      %3781 = vmatprep.subr.mxu0 0.0
      %3782 = vmatpush1.msra.mxu0 0.0
      %3783 = vmatprep.subr.mxu0 0.0
      %3784 = vmatpush1.msra.mxu0 0.0
      %3785 = vmatprep.subr.mxu0 0.0
      %3786 = vmatpush1.msra.mxu0 0.0
      %3787 = vmatprep.subr.mxu0 0.0
      %3788 = vmatpush1.msra.mxu0 0.0
      %3789 = vmatprep.subr.mxu0 0.0
      %3790 = vmatpush1.msra.mxu0 0.0
      %3791 = vmatprep.subr.mxu0 0.0
      %3792 = vmatpush1.msra.mxu0 0.0
      %3793 = vmatprep.subr.mxu0 0.0
      %3794 = vmatpush1.msra.mxu0 0.0
      %3795 = vmatprep.subr.mxu0 0.0
      %3796 = vmatpush1.msra.mxu0 0.0
      %3797 = vmatprep.subr.mxu0 0.0
      %3798 = vmatpush1.msra.mxu0 0.0
      %3799 = vmatprep.subr.mxu0 0.0
      %3800 = vmatpush1.msra.mxu0 0.0
      %3801 = vmatprep.subr.mxu0 0.0
      %3802 = vmatpush1.msra.mxu0 0.0
      %3803 = vmatprep.subr.mxu0 0.0
      %3804 = vmatpush1.msra.mxu0 0.0
      %3805 = vmatprep.subr.mxu0 0.0
      %3806 = vmatpush1.msra.mxu0 0.0
      %3807 = vmatprep.mubr.f32.mxu0 0.0
      %3808 = vmatmul.mubr.f32.gmra.mrb[0].mxu0 %v3723
      %v3809 = vpop.f32.mrb[0].mxu0
      %v3810 = vadd.f32 0.0, %v3809
      %v3811 = vpop.f32.mrb[0].mxu0
      %3812 = vmatprep.mubr.f32.mxu0 0.0
      %3813 = vmatmul.mubr.f32.gmra.mrb[0].mxu0 %v3726
      %v3814 = vpop.f32.mrb[0].mxu0
      %v3815 = vadd.f32 0.0, %v3814
      %v3816 = vpop.f32.mrb[0].mxu0
      %3817 = vmatprep.mubr.f32.mxu0 0.0
      %3818 = vmatmul.mubr.f32.gmra.mrb[0].mxu0 %v3729
      %v3819 = vpop.f32.mrb[0].mxu0
      %v3820 = vadd.f32 0.0, %v3819
      %v3821 = vpop.f32.mrb[0].mxu0
      %3822 = vmatprep.mubr.f32.mxu0 0.0
      %3823 = vmatmul.mubr.f32.gmra.mrb[0].mxu0 %v3732
      %v3824 = vpop.f32.mrb[0].mxu0
      %v3825 = vadd.f32 0.0, %v3824
      %v3826 = vpop.f32.mrb[0].mxu0
      %3827 = vmatprep.mubr.f32.mxu0 0.0
      %3828 = vmatmul.mubr.f32.gmra.mrb[0].mxu0 %v3735
      %v3829 = vpop.f32.mrb[0].mxu0
      %v3830 = vadd.f32 0.0, %v3829
      %v3831 = vpop.f32.mrb[0].mxu0
      %3832 = vmatprep.mubr.f32.mxu0 0.0
      %3833 = vmatmul.mubr.f32.gmra.mrb[0].mxu0 %v3738
      %v3834 = vpop.f32.mrb[0].mxu0
      %v3835 = vadd.f32 0.0, %v3834
      %v3836 = vpop.f32.mrb[0].mxu0
      %3837 = vmatprep.mubr.f32.mxu0 0.0
      %3838 = vmatmul.mubr.f32.gmra.mrb[0].mxu0 %v3741
      %v3839 = vpop.f32.mrb[0].mxu0
      %v3840 = vadd.f32 0.0, %v3839
      %v3841 = vpop.f32.mrb[0].mxu0
      %3842 = vdwg.mxu0
      %v3843 = vld [vmem:[%s5] sm:$0xff]
      %v3844 = vld [vmem:[%s5 + $0x8] sm:$0xff]
      %v3845 = vld [vmem:[%s5 + $0x10] sm:$0xff]
      %v3846 = vld [vmem:[%s5 + $0x18] sm:$0xff]
      %v3848 = vsel %vm967, %v2963, 0
      %v3851 = vsel %vm967, %v2968, 0
      %v3854 = vsel %vm967, %v2973, 0
      %v3857 = vsel %vm967, %v2978, 0
      %v3860 = vsel %vm967, %v2983, 0
      %v3863 = vsel %vm967, %v2988, 0
      %v3866 = vsel %vm967, %v2993, 0
      %v3869 = vsel %vm967, %v3084, 0
      %v3872 = vsel %vm967, %v3089, 0
      %v3875 = vsel %vm967, %v3094, 0
      %v3878 = vsel %vm967, %v3099, 0
      %v3881 = vsel %vm967, %v3104, 0
      %v3884 = vsel %vm967, %v3109, 0
      %v3887 = vsel %vm967, %v3114, 0
      %3889 = vmatprep.subr.mxu0 0.0
      %3890 = vmatpush1.msra.mxu0 %v3843
      %3891 = vmatprep.subr.mxu0 0.0
      %3892 = vmatpush1.msra.mxu0 0.0
      %3893 = vmatprep.subr.mxu0 0.0
      %3894 = vmatpush1.msra.mxu0 0.0
      %3895 = vmatprep.subr.mxu0 0.0
      %3896 = vmatpush1.msra.mxu0 0.0
      %3897 = vmatprep.subr.mxu0 0.0
      %3898 = vmatpush1.msra.mxu0 0.0
      %3899 = vmatprep.subr.mxu0 0.0
      %3900 = vmatpush1.msra.mxu0 0.0
      %3901 = vmatprep.subr.mxu0 0.0
      %3902 = vmatpush1.msra.mxu0 0.0
      %3903 = vmatprep.subr.mxu0 0.0
      %3904 = vmatpush1.msra.mxu0 0.0
      %3905 = vmatprep.subr.mxu0 0.0
      %3906 = vmatpush1.msra.mxu0 0.0
      %3907 = vmatprep.subr.mxu0 0.0
      %3908 = vmatpush1.msra.mxu0 0.0
      %3909 = vmatprep.subr.mxu0 0.0
      %3910 = vmatpush1.msra.mxu0 0.0
      %3911 = vmatprep.subr.mxu0 0.0
      %3912 = vmatpush1.msra.mxu0 0.0
      %3913 = vmatprep.subr.mxu0 0.0
      %3914 = vmatpush1.msra.mxu0 0.0
      %3915 = vmatprep.subr.mxu0 0.0
      %3916 = vmatpush1.msra.mxu0 0.0
      %3917 = vmatprep.subr.mxu0 0.0
      %3918 = vmatpush1.msra.mxu0 0.0
      %3919 = vmatprep.subr.mxu0 0.0
      %3920 = vmatpush1.msra.mxu0 0.0
      %3921 = vmatprep.subr.mxu0 0.0
      %3922 = vmatpush1.msra.mxu0 0.0
      %3923 = vmatprep.subr.mxu0 0.0
      %3924 = vmatpush1.msra.mxu0 0.0
      %3925 = vmatprep.subr.mxu0 0.0
      %3926 = vmatpush1.msra.mxu0 0.0
      %3927 = vmatprep.subr.mxu0 0.0
      %3928 = vmatpush1.msra.mxu0 0.0
      %3929 = vmatprep.subr.mxu0 0.0
      %3930 = vmatpush1.msra.mxu0 0.0
      %3931 = vmatprep.subr.mxu0 0.0
      %3932 = vmatpush1.msra.mxu0 0.0
      %3933 = vmatprep.subr.mxu0 0.0
      %3934 = vmatpush1.msra.mxu0 0.0
      %3935 = vmatprep.subr.mxu0 0.0
      %3936 = vmatpush1.msra.mxu0 0.0
      %3937 = vmatprep.subr.mxu0 0.0
      %3938 = vmatpush1.msra.mxu0 0.0
      %3939 = vmatprep.subr.mxu0 0.0
      %3940 = vmatpush1.msra.mxu0 0.0
      %3941 = vmatprep.subr.mxu0 0.0
      %3942 = vmatpush1.msra.mxu0 0.0
      %3943 = vmatprep.subr.mxu0 0.0
      %3944 = vmatpush1.msra.mxu0 0.0
      %3945 = vmatprep.subr.mxu0 0.0
      %3946 = vmatpush1.msra.mxu0 0.0
      %3947 = vmatprep.subr.mxu0 0.0
      %3948 = vmatpush1.msra.mxu0 0.0
      %3949 = vmatprep.subr.mxu0 0.0
      %3950 = vmatpush1.msra.mxu0 0.0
      %3951 = vmatprep.subr.mxu0 0.0
      %3952 = vmatpush1.msra.mxu0 0.0
      %3953 = vmatprep.mubr.f32.mxu0 0.0
      %3954 = vmatmul.mubr.f32.gmra.mrb[0].mxu0 %v3848
      %v3955 = vpop.f32.mrb[0].mxu0
      %v3956 = vadd.f32 0.0, %v3955
      %v3957 = vpop.f32.mrb[0].mxu0
      %3958 = vmatprep.mubr.f32.mxu0 0.0
      %3959 = vmatmul.mubr.f32.gmra.mrb[0].mxu0 %v3851
      %v3960 = vpop.f32.mrb[0].mxu0
      %v3961 = vadd.f32 0.0, %v3960
      %v3962 = vpop.f32.mrb[0].mxu0
      %3963 = vmatprep.mubr.f32.mxu0 0.0
      %3964 = vmatmul.mubr.f32.gmra.mrb[0].mxu0 %v3854
      %v3965 = vpop.f32.mrb[0].mxu0
      %v3966 = vadd.f32 0.0, %v3965
      %v3967 = vpop.f32.mrb[0].mxu0
      %3968 = vmatprep.mubr.f32.mxu0 0.0
      %3969 = vmatmul.mubr.f32.gmra.mrb[0].mxu0 %v3857
      %v3970 = vpop.f32.mrb[0].mxu0
      %v3971 = vadd.f32 0.0, %v3970
      %v3972 = vpop.f32.mrb[0].mxu0
      %3973 = vmatprep.mubr.f32.mxu0 0.0
      %3974 = vmatmul.mubr.f32.gmra.mrb[0].mxu0 %v3860
      %v3975 = vpop.f32.mrb[0].mxu0
      %v3976 = vadd.f32 0.0, %v3975
      %v3977 = vpop.f32.mrb[0].mxu0
      %3978 = vmatprep.mubr.f32.mxu0 0.0
      %3979 = vmatmul.mubr.f32.gmra.mrb[0].mxu0 %v3863
      %v3980 = vpop.f32.mrb[0].mxu0
      %v3981 = vadd.f32 0.0, %v3980
      %v3982 = vpop.f32.mrb[0].mxu0
      %3983 = vmatprep.mubr.f32.mxu0 0.0
      %3984 = vmatmul.mubr.f32.gmra.mrb[0].mxu0 %v3866
      %v3985 = vpop.f32.mrb[0].mxu0
      %v3986 = vadd.f32 0.0, %v3985
      %v3987 = vpop.f32.mrb[0].mxu0
      %3988 = vmatprep.mubr.f32.mxu0 0.0
      %3989 = vmatmul.mubr.f32.gmra.mrb[0].mxu0 %v3869
      %v3990 = vpop.f32.mrb[0].mxu0
      %v3991 = vadd.f32 0.0, %v3990
      %v3992 = vpop.f32.mrb[0].mxu0
      %3993 = vmatprep.mubr.f32.mxu0 0.0
      %3994 = vmatmul.mubr.f32.gmra.mrb[0].mxu0 %v3872
      %v3995 = vpop.f32.mrb[0].mxu0
      %v3996 = vadd.f32 0.0, %v3995
      %v3997 = vpop.f32.mrb[0].mxu0
      %3998 = vmatprep.mubr.f32.mxu0 0.0
      %3999 = vmatmul.mubr.f32.gmra.mrb[0].mxu0 %v3875
      %v4000 = vpop.f32.mrb[0].mxu0
      %v4001 = vadd.f32 0.0, %v4000
      %v4002 = vpop.f32.mrb[0].mxu0
      %4003 = vmatprep.mubr.f32.mxu0 0.0
      %4004 = vmatmul.mubr.f32.gmra.mrb[0].mxu0 %v3878
      %v4005 = vpop.f32.mrb[0].mxu0
      %v4006 = vadd.f32 0.0, %v4005
      %v4007 = vpop.f32.mrb[0].mxu0
      %4008 = vmatprep.mubr.f32.mxu0 0.0
      %4009 = vmatmul.mubr.f32.gmra.mrb[0].mxu0 %v3881
      %v4010 = vpop.f32.mrb[0].mxu0
      %v4011 = vadd.f32 0.0, %v4010
      %v4012 = vpop.f32.mrb[0].mxu0
      %4013 = vmatprep.mubr.f32.mxu0 0.0
      %4014 = vmatmul.mubr.f32.gmra.mrb[0].mxu0 %v3884
      %v4015 = vpop.f32.mrb[0].mxu0
      %v4016 = vadd.f32 0.0, %v4015
      %v4017 = vpop.f32.mrb[0].mxu0
      %4018 = vmatprep.mubr.f32.mxu0 0.0
      %4019 = vmatmul.mubr.f32.gmra.mrb[0].mxu0 %v3887
      %v4020 = vpop.f32.mrb[0].mxu0
      %v4021 = vadd.f32 0.0, %v4020
      %v4022 = vpop.f32.mrb[0].mxu0
      %4023 = vdwg.mxu0
      %v4025 = vsel %vm967, %v3205, 0
      %v4028 = vsel %vm967, %v3210, 0
      %v4031 = vsel %vm967, %v3215, 0
      %v4034 = vsel %vm967, %v3220, 0
      %v4037 = vsel %vm967, %v3225, 0
      %v4040 = vsel %vm967, %v3230, 0
      %v4043 = vsel %vm967, %v3235, 0
      %v4046 = vsel %vm967, %v3326, 0
      %v4049 = vsel %vm967, %v3331, 0
      %v4052 = vsel %vm967, %v3336, 0
      %v4055 = vsel %vm967, %v3341, 0
      %v4058 = vsel %vm967, %v3346, 0
      %v4061 = vsel %vm967, %v3351, 0
      %v4064 = vsel %vm967, %v3356, 0
      %4066 = vmatprep.subr.mxu0 0.0
      %4067 = vmatpush1.msra.mxu0 %v3844
      %4068 = vmatprep.subr.mxu0 0.0
      %4069 = vmatpush1.msra.mxu0 0.0
      %4070 = vmatprep.subr.mxu0 0.0
      %4071 = vmatpush1.msra.mxu0 0.0
      %4072 = vmatprep.subr.mxu0 0.0
      %4073 = vmatpush1.msra.mxu0 0.0
      %4074 = vmatprep.subr.mxu0 0.0
      %4075 = vmatpush1.msra.mxu0 0.0
      %4076 = vmatprep.subr.mxu0 0.0
      %4077 = vmatpush1.msra.mxu0 0.0
      %4078 = vmatprep.subr.mxu0 0.0
      %4079 = vmatpush1.msra.mxu0 0.0
      %4080 = vmatprep.subr.mxu0 0.0
      %4081 = vmatpush1.msra.mxu0 0.0
      %4082 = vmatprep.subr.mxu0 0.0
      %4083 = vmatpush1.msra.mxu0 0.0
      %4084 = vmatprep.subr.mxu0 0.0
      %4085 = vmatpush1.msra.mxu0 0.0
      %4086 = vmatprep.subr.mxu0 0.0
      %4087 = vmatpush1.msra.mxu0 0.0
      %4088 = vmatprep.subr.mxu0 0.0
      %4089 = vmatpush1.msra.mxu0 0.0
      %4090 = vmatprep.subr.mxu0 0.0
      %4091 = vmatpush1.msra.mxu0 0.0
      %4092 = vmatprep.subr.mxu0 0.0
      %4093 = vmatpush1.msra.mxu0 0.0
      %4094 = vmatprep.subr.mxu0 0.0
      %4095 = vmatpush1.msra.mxu0 0.0
      %4096 = vmatprep.subr.mxu0 0.0
      %4097 = vmatpush1.msra.mxu0 0.0
      %4098 = vmatprep.subr.mxu0 0.0
      %4099 = vmatpush1.msra.mxu0 0.0
      %4100 = vmatprep.subr.mxu0 0.0
      %4101 = vmatpush1.msra.mxu0 0.0
      %4102 = vmatprep.subr.mxu0 0.0
      %4103 = vmatpush1.msra.mxu0 0.0
      %4104 = vmatprep.subr.mxu0 0.0
      %4105 = vmatpush1.msra.mxu0 0.0
      %4106 = vmatprep.subr.mxu0 0.0
      %4107 = vmatpush1.msra.mxu0 0.0
      %4108 = vmatprep.subr.mxu0 0.0
      %4109 = vmatpush1.msra.mxu0 0.0
      %4110 = vmatprep.subr.mxu0 0.0
      %4111 = vmatpush1.msra.mxu0 0.0
      %4112 = vmatprep.subr.mxu0 0.0
      %4113 = vmatpush1.msra.mxu0 0.0
      %4114 = vmatprep.subr.mxu0 0.0
      %4115 = vmatpush1.msra.mxu0 0.0
      %4116 = vmatprep.subr.mxu0 0.0
      %4117 = vmatpush1.msra.mxu0 0.0
      %4118 = vmatprep.subr.mxu0 0.0
      %4119 = vmatpush1.msra.mxu0 0.0
      %4120 = vmatprep.subr.mxu0 0.0
      %4121 = vmatpush1.msra.mxu0 0.0
      %4122 = vmatprep.subr.mxu0 0.0
      %4123 = vmatpush1.msra.mxu0 0.0
      %4124 = vmatprep.subr.mxu0 0.0
      %4125 = vmatpush1.msra.mxu0 0.0
      %4126 = vmatprep.subr.mxu0 0.0
      %4127 = vmatpush1.msra.mxu0 0.0
      %4128 = vmatprep.subr.mxu0 0.0
      %4129 = vmatpush1.msra.mxu0 0.0
      %4130 = vmatprep.mubr.f32.mxu0 0.0
      %4131 = vmatmul.mubr.f32.gmra.mrb[0].mxu0 %v4025
      %v4132 = vpop.f32.mrb[0].mxu0
      %v4133 = vadd.f32 0.0, %v4132
      %v4134 = vpop.f32.mrb[0].mxu0
      %4135 = vmatprep.mubr.f32.mxu0 0.0
      %4136 = vmatmul.mubr.f32.gmra.mrb[0].mxu0 %v4028
      %v4137 = vpop.f32.mrb[0].mxu0
      %v4138 = vadd.f32 0.0, %v4137
      %v4139 = vpop.f32.mrb[0].mxu0
      %4140 = vmatprep.mubr.f32.mxu0 0.0
      %4141 = vmatmul.mubr.f32.gmra.mrb[0].mxu0 %v4031
      %v4142 = vpop.f32.mrb[0].mxu0
      %v4143 = vadd.f32 0.0, %v4142
      %v4144 = vpop.f32.mrb[0].mxu0
      %4145 = vmatprep.mubr.f32.mxu0 0.0
      %4146 = vmatmul.mubr.f32.gmra.mrb[0].mxu0 %v4034
      %v4147 = vpop.f32.mrb[0].mxu0
      %v4148 = vadd.f32 0.0, %v4147
      %v4149 = vpop.f32.mrb[0].mxu0
      %4150 = vmatprep.mubr.f32.mxu0 0.0
      %4151 = vmatmul.mubr.f32.gmra.mrb[0].mxu0 %v4037
      %v4152 = vpop.f32.mrb[0].mxu0
      %v4153 = vadd.f32 0.0, %v4152
      %v4154 = vpop.f32.mrb[0].mxu0
      %4155 = vmatprep.mubr.f32.mxu0 0.0
      %4156 = vmatmul.mubr.f32.gmra.mrb[0].mxu0 %v4040
      %v4157 = vpop.f32.mrb[0].mxu0
      %v4158 = vadd.f32 0.0, %v4157
      %v4159 = vpop.f32.mrb[0].mxu0
      %4160 = vmatprep.mubr.f32.mxu0 0.0
      %4161 = vmatmul.mubr.f32.gmra.mrb[0].mxu0 %v4043
      %v4162 = vpop.f32.mrb[0].mxu0
      %v4163 = vadd.f32 0.0, %v4162
      %v4164 = vpop.f32.mrb[0].mxu0
      %4165 = vmatprep.mubr.f32.mxu0 0.0
      %4166 = vmatmul.mubr.f32.gmra.mrb[0].mxu0 %v4046
      %v4167 = vpop.f32.mrb[0].mxu0
      %v4168 = vadd.f32 0.0, %v4167
      %v4169 = vpop.f32.mrb[0].mxu0
      %4170 = vmatprep.mubr.f32.mxu0 0.0
      %4171 = vmatmul.mubr.f32.gmra.mrb[0].mxu0 %v4049
      %v4172 = vpop.f32.mrb[0].mxu0
      %v4173 = vadd.f32 0.0, %v4172
      %v4174 = vpop.f32.mrb[0].mxu0
      %4175 = vmatprep.mubr.f32.mxu0 0.0
      %4176 = vmatmul.mubr.f32.gmra.mrb[0].mxu0 %v4052
      %v4177 = vpop.f32.mrb[0].mxu0
      %v4178 = vadd.f32 0.0, %v4177
      %v4179 = vpop.f32.mrb[0].mxu0
      %4180 = vmatprep.mubr.f32.mxu0 0.0
      %4181 = vmatmul.mubr.f32.gmra.mrb[0].mxu0 %v4055
      %v4182 = vpop.f32.mrb[0].mxu0
      %v4183 = vadd.f32 0.0, %v4182
      %v4184 = vpop.f32.mrb[0].mxu0
      %4185 = vmatprep.mubr.f32.mxu0 0.0
      %4186 = vmatmul.mubr.f32.gmra.mrb[0].mxu0 %v4058
      %v4187 = vpop.f32.mrb[0].mxu0
      %v4188 = vadd.f32 0.0, %v4187
      %v4189 = vpop.f32.mrb[0].mxu0
      %4190 = vmatprep.mubr.f32.mxu0 0.0
      %4191 = vmatmul.mubr.f32.gmra.mrb[0].mxu0 %v4061
      %v4192 = vpop.f32.mrb[0].mxu0
      %v4193 = vadd.f32 0.0, %v4192
      %v4194 = vpop.f32.mrb[0].mxu0
      %4195 = vmatprep.mubr.f32.mxu0 0.0
      %4196 = vmatmul.mubr.f32.gmra.mrb[0].mxu0 %v4064
      %v4197 = vpop.f32.mrb[0].mxu0
      %v4198 = vadd.f32 0.0, %v4197
      %v4199 = vpop.f32.mrb[0].mxu0
      %4200 = vdwg.mxu0
      %v4202 = vsel %vm967, %v3447, 0
      %v4205 = vsel %vm967, %v3452, 0
      %v4208 = vsel %vm967, %v3457, 0
      %v4211 = vsel %vm967, %v3462, 0
      %v4214 = vsel %vm967, %v3467, 0
      %v4217 = vsel %vm967, %v3472, 0
      %v4220 = vsel %vm967, %v3477, 0
      %v4223 = vsel %vm967, %v3568, 0
      %v4226 = vsel %vm967, %v3573, 0
      %v4229 = vsel %vm967, %v3578, 0
      %v4232 = vsel %vm967, %v3583, 0
      %v4235 = vsel %vm967, %v3588, 0
      %v4238 = vsel %vm967, %v3593, 0
      %v4241 = vsel %vm967, %v3598, 0
      %4243 = vmatprep.subr.mxu0 0.0
      %4244 = vmatpush1.msra.mxu0 %v3845
      %4245 = vmatprep.subr.mxu0 0.0
      %4246 = vmatpush1.msra.mxu0 0.0
      %4247 = vmatprep.subr.mxu0 0.0
      %4248 = vmatpush1.msra.mxu0 0.0
      %4249 = vmatprep.subr.mxu0 0.0
      %4250 = vmatpush1.msra.mxu0 0.0
      %4251 = vmatprep.subr.mxu0 0.0
      %4252 = vmatpush1.msra.mxu0 0.0
      %4253 = vmatprep.subr.mxu0 0.0
      %4254 = vmatpush1.msra.mxu0 0.0
      %4255 = vmatprep.subr.mxu0 0.0
      %4256 = vmatpush1.msra.mxu0 0.0
      %4257 = vmatprep.subr.mxu0 0.0
      %4258 = vmatpush1.msra.mxu0 0.0
      %4259 = vmatprep.subr.mxu0 0.0
      %4260 = vmatpush1.msra.mxu0 0.0
      %4261 = vmatprep.subr.mxu0 0.0
      %4262 = vmatpush1.msra.mxu0 0.0
      %4263 = vmatprep.subr.mxu0 0.0
      %4264 = vmatpush1.msra.mxu0 0.0
      %4265 = vmatprep.subr.mxu0 0.0
      %4266 = vmatpush1.msra.mxu0 0.0
      %4267 = vmatprep.subr.mxu0 0.0
      %4268 = vmatpush1.msra.mxu0 0.0
      %4269 = vmatprep.subr.mxu0 0.0
      %4270 = vmatpush1.msra.mxu0 0.0
      %4271 = vmatprep.subr.mxu0 0.0
      %4272 = vmatpush1.msra.mxu0 0.0
      %4273 = vmatprep.subr.mxu0 0.0
      %4274 = vmatpush1.msra.mxu0 0.0
      %4275 = vmatprep.subr.mxu0 0.0
      %4276 = vmatpush1.msra.mxu0 0.0
      %4277 = vmatprep.subr.mxu0 0.0
      %4278 = vmatpush1.msra.mxu0 0.0
      %4279 = vmatprep.subr.mxu0 0.0
      %4280 = vmatpush1.msra.mxu0 0.0
      %4281 = vmatprep.subr.mxu0 0.0
      %4282 = vmatpush1.msra.mxu0 0.0
      %4283 = vmatprep.subr.mxu0 0.0
      %4284 = vmatpush1.msra.mxu0 0.0
      %4285 = vmatprep.subr.mxu0 0.0
      %4286 = vmatpush1.msra.mxu0 0.0
      %4287 = vmatprep.subr.mxu0 0.0
      %4288 = vmatpush1.msra.mxu0 0.0
      %4289 = vmatprep.subr.mxu0 0.0
      %4290 = vmatpush1.msra.mxu0 0.0
      %4291 = vmatprep.subr.mxu0 0.0
      %4292 = vmatpush1.msra.mxu0 0.0
      %4293 = vmatprep.subr.mxu0 0.0
      %4294 = vmatpush1.msra.mxu0 0.0
      %4295 = vmatprep.subr.mxu0 0.0
      %4296 = vmatpush1.msra.mxu0 0.0
      %4297 = vmatprep.subr.mxu0 0.0
      %4298 = vmatpush1.msra.mxu0 0.0
      %4299 = vmatprep.subr.mxu0 0.0
      %4300 = vmatpush1.msra.mxu0 0.0
      %4301 = vmatprep.subr.mxu0 0.0
      %4302 = vmatpush1.msra.mxu0 0.0
      %4303 = vmatprep.subr.mxu0 0.0
      %4304 = vmatpush1.msra.mxu0 0.0
      %4305 = vmatprep.subr.mxu0 0.0
      %4306 = vmatpush1.msra.mxu0 0.0
      %4307 = vmatprep.mubr.f32.mxu0 0.0
      %4308 = vmatmul.mubr.f32.gmra.mrb[0].mxu0 %v4202
      %v4309 = vpop.f32.mrb[0].mxu0
      %v4310 = vadd.f32 0.0, %v4309
      %v4311 = vpop.f32.mrb[0].mxu0
      %4312 = vmatprep.mubr.f32.mxu0 0.0
      %4313 = vmatmul.mubr.f32.gmra.mrb[0].mxu0 %v4205
      %v4314 = vpop.f32.mrb[0].mxu0
      %v4315 = vadd.f32 0.0, %v4314
      %v4316 = vpop.f32.mrb[0].mxu0
      %4317 = vmatprep.mubr.f32.mxu0 0.0
      %4318 = vmatmul.mubr.f32.gmra.mrb[0].mxu0 %v4208
      %v4319 = vpop.f32.mrb[0].mxu0
      %v4320 = vadd.f32 0.0, %v4319
      %v4321 = vpop.f32.mrb[0].mxu0
      %4322 = vmatprep.mubr.f32.mxu0 0.0
      %4323 = vmatmul.mubr.f32.gmra.mrb[0].mxu0 %v4211
      %v4324 = vpop.f32.mrb[0].mxu0
      %v4325 = vadd.f32 0.0, %v4324
      %v4326 = vpop.f32.mrb[0].mxu0
      %4327 = vmatprep.mubr.f32.mxu0 0.0
      %4328 = vmatmul.mubr.f32.gmra.mrb[0].mxu0 %v4214
      %v4329 = vpop.f32.mrb[0].mxu0
      %v4330 = vadd.f32 0.0, %v4329
      %v4331 = vpop.f32.mrb[0].mxu0
      %4332 = vmatprep.mubr.f32.mxu0 0.0
      %4333 = vmatmul.mubr.f32.gmra.mrb[0].mxu0 %v4217
      %v4334 = vpop.f32.mrb[0].mxu0
      %v4335 = vadd.f32 0.0, %v4334
      %v4336 = vpop.f32.mrb[0].mxu0
      %4337 = vmatprep.mubr.f32.mxu0 0.0
      %4338 = vmatmul.mubr.f32.gmra.mrb[0].mxu0 %v4220
      %v4339 = vpop.f32.mrb[0].mxu0
      %v4340 = vadd.f32 0.0, %v4339
      %v4341 = vpop.f32.mrb[0].mxu0
      %4342 = vmatprep.mubr.f32.mxu0 0.0
      %4343 = vmatmul.mubr.f32.gmra.mrb[0].mxu0 %v4223
      %v4344 = vpop.f32.mrb[0].mxu0
      %v4345 = vadd.f32 0.0, %v4344
      %v4346 = vpop.f32.mrb[0].mxu0
      %4347 = vmatprep.mubr.f32.mxu0 0.0
      %4348 = vmatmul.mubr.f32.gmra.mrb[0].mxu0 %v4226
      %v4349 = vpop.f32.mrb[0].mxu0
      %v4350 = vadd.f32 0.0, %v4349
      %v4351 = vpop.f32.mrb[0].mxu0
      %4352 = vmatprep.mubr.f32.mxu0 0.0
      %4353 = vmatmul.mubr.f32.gmra.mrb[0].mxu0 %v4229
      %v4354 = vpop.f32.mrb[0].mxu0
      %v4355 = vadd.f32 0.0, %v4354
      %v4356 = vpop.f32.mrb[0].mxu0
      %4357 = vmatprep.mubr.f32.mxu0 0.0
      %4358 = vmatmul.mubr.f32.gmra.mrb[0].mxu0 %v4232
      %v4359 = vpop.f32.mrb[0].mxu0
      %v4360 = vadd.f32 0.0, %v4359
      %v4361 = vpop.f32.mrb[0].mxu0
      %4362 = vmatprep.mubr.f32.mxu0 0.0
      %4363 = vmatmul.mubr.f32.gmra.mrb[0].mxu0 %v4235
      %v4364 = vpop.f32.mrb[0].mxu0
      %v4365 = vadd.f32 0.0, %v4364
      %v4366 = vpop.f32.mrb[0].mxu0
      %4367 = vmatprep.mubr.f32.mxu0 0.0
      %4368 = vmatmul.mubr.f32.gmra.mrb[0].mxu0 %v4238
      %v4369 = vpop.f32.mrb[0].mxu0
      %v4370 = vadd.f32 0.0, %v4369
      %v4371 = vpop.f32.mrb[0].mxu0
      %4372 = vmatprep.mubr.f32.mxu0 0.0
      %4373 = vmatmul.mubr.f32.gmra.mrb[0].mxu0 %v4241
      %v4374 = vpop.f32.mrb[0].mxu0
      %v4375 = vadd.f32 0.0, %v4374
      %v4376 = vpop.f32.mrb[0].mxu0
      %4377 = vdwg.mxu0
      %v4379 = vsel %vm967, %v3689, 0
      %v4382 = vsel %vm967, %v3694, 0
      %v4385 = vsel %vm967, %v3699, 0
      %v4388 = vsel %vm967, %v3704, 0
      %v4391 = vsel %vm967, %v3709, 0
      %v4394 = vsel %vm967, %v3714, 0
      %v4397 = vsel %vm967, %v3719, 0
      %v4400 = vsel %vm967, %v3810, 0
      %v4403 = vsel %vm967, %v3815, 0
      %v4406 = vsel %vm967, %v3820, 0
      %v4409 = vsel %vm967, %v3825, 0
      %v4412 = vsel %vm967, %v3830, 0
      %v4415 = vsel %vm967, %v3835, 0
      %v4418 = vsel %vm967, %v3840, 0
      %4420 = vmatprep.subr.mxu0 0.0
      %4421 = vmatpush1.msra.mxu0 %v3846
      %4422 = vmatprep.subr.mxu0 0.0
      %4423 = vmatpush1.msra.mxu0 0.0
      %4424 = vmatprep.subr.mxu0 0.0
      %4425 = vmatpush1.msra.mxu0 0.0
      %4426 = vmatprep.subr.mxu0 0.0
      %4427 = vmatpush1.msra.mxu0 0.0
      %4428 = vmatprep.subr.mxu0 0.0
      %4429 = vmatpush1.msra.mxu0 0.0
      %4430 = vmatprep.subr.mxu0 0.0
      %4431 = vmatpush1.msra.mxu0 0.0
      %4432 = vmatprep.subr.mxu0 0.0
      %4433 = vmatpush1.msra.mxu0 0.0
      %4434 = vmatprep.subr.mxu0 0.0
      %4435 = vmatpush1.msra.mxu0 0.0
      %4436 = vmatprep.subr.mxu0 0.0
      %4437 = vmatpush1.msra.mxu0 0.0
      %4438 = vmatprep.subr.mxu0 0.0
      %4439 = vmatpush1.msra.mxu0 0.0
      %4440 = vmatprep.subr.mxu0 0.0
      %4441 = vmatpush1.msra.mxu0 0.0
      %4442 = vmatprep.subr.mxu0 0.0
      %4443 = vmatpush1.msra.mxu0 0.0
      %4444 = vmatprep.subr.mxu0 0.0
      %4445 = vmatpush1.msra.mxu0 0.0
      %4446 = vmatprep.subr.mxu0 0.0
      %4447 = vmatpush1.msra.mxu0 0.0
      %4448 = vmatprep.subr.mxu0 0.0
      %4449 = vmatpush1.msra.mxu0 0.0
      %4450 = vmatprep.subr.mxu0 0.0
      %4451 = vmatpush1.msra.mxu0 0.0
      %4452 = vmatprep.subr.mxu0 0.0
      %4453 = vmatpush1.msra.mxu0 0.0
      %4454 = vmatprep.subr.mxu0 0.0
      %4455 = vmatpush1.msra.mxu0 0.0
      %4456 = vmatprep.subr.mxu0 0.0
      %4457 = vmatpush1.msra.mxu0 0.0
      %4458 = vmatprep.subr.mxu0 0.0
      %4459 = vmatpush1.msra.mxu0 0.0
      %4460 = vmatprep.subr.mxu0 0.0
      %4461 = vmatpush1.msra.mxu0 0.0
      %4462 = vmatprep.subr.mxu0 0.0
      %4463 = vmatpush1.msra.mxu0 0.0
      %4464 = vmatprep.subr.mxu0 0.0
      %4465 = vmatpush1.msra.mxu0 0.0
      %4466 = vmatprep.subr.mxu0 0.0
      %4467 = vmatpush1.msra.mxu0 0.0
      %4468 = vmatprep.subr.mxu0 0.0
      %4469 = vmatpush1.msra.mxu0 0.0
      %4470 = vmatprep.subr.mxu0 0.0
      %4471 = vmatpush1.msra.mxu0 0.0
      %4472 = vmatprep.subr.mxu0 0.0
      %4473 = vmatpush1.msra.mxu0 0.0
      %4474 = vmatprep.subr.mxu0 0.0
      %4475 = vmatpush1.msra.mxu0 0.0
      %4476 = vmatprep.subr.mxu0 0.0
      %4477 = vmatpush1.msra.mxu0 0.0
      %4478 = vmatprep.subr.mxu0 0.0
      %4479 = vmatpush1.msra.mxu0 0.0
      %4480 = vmatprep.subr.mxu0 0.0
      %4481 = vmatpush1.msra.mxu0 0.0
      %4482 = vmatprep.subr.mxu0 0.0
      %4483 = vmatpush1.msra.mxu0 0.0
      %4484 = vmatprep.mubr.f32.mxu0 0.0
      %4485 = vmatmul.mubr.f32.gmra.mrb[0].mxu0 %v4379
      %v4486 = vpop.f32.mrb[0].mxu0
      %v4487 = vadd.f32 0.0, %v4486
      %v4488 = vpop.f32.mrb[0].mxu0
      %4489 = vmatprep.mubr.f32.mxu0 0.0
      %4490 = vmatmul.mubr.f32.gmra.mrb[0].mxu0 %v4382
      %v4491 = vpop.f32.mrb[0].mxu0
      %v4492 = vadd.f32 0.0, %v4491
      %v4493 = vpop.f32.mrb[0].mxu0
      %4494 = vmatprep.mubr.f32.mxu0 0.0
      %4495 = vmatmul.mubr.f32.gmra.mrb[0].mxu0 %v4385
      %v4496 = vpop.f32.mrb[0].mxu0
      %v4497 = vadd.f32 0.0, %v4496
      %v4498 = vpop.f32.mrb[0].mxu0
      %4499 = vmatprep.mubr.f32.mxu0 0.0
      %4500 = vmatmul.mubr.f32.gmra.mrb[0].mxu0 %v4388
      %v4501 = vpop.f32.mrb[0].mxu0
      %v4502 = vadd.f32 0.0, %v4501
      %v4503 = vpop.f32.mrb[0].mxu0
      %4504 = vmatprep.mubr.f32.mxu0 0.0
      %4505 = vmatmul.mubr.f32.gmra.mrb[0].mxu0 %v4391
      %v4506 = vpop.f32.mrb[0].mxu0
      %v4507 = vadd.f32 0.0, %v4506
      %v4508 = vpop.f32.mrb[0].mxu0
      %4509 = vmatprep.mubr.f32.mxu0 0.0
      %4510 = vmatmul.mubr.f32.gmra.mrb[0].mxu0 %v4394
      %v4511 = vpop.f32.mrb[0].mxu0
      %v4512 = vadd.f32 0.0, %v4511
      %v4513 = vpop.f32.mrb[0].mxu0
      %4514 = vmatprep.mubr.f32.mxu0 0.0
      %4515 = vmatmul.mubr.f32.gmra.mrb[0].mxu0 %v4397
      %v4516 = vpop.f32.mrb[0].mxu0
      %v4517 = vadd.f32 0.0, %v4516
      %v4518 = vpop.f32.mrb[0].mxu0
      %4519 = vmatprep.mubr.f32.mxu0 0.0
      %4520 = vmatmul.mubr.f32.gmra.mrb[0].mxu0 %v4400
      %v4521 = vpop.f32.mrb[0].mxu0
      %v4522 = vadd.f32 0.0, %v4521
      %v4523 = vpop.f32.mrb[0].mxu0
      %4524 = vmatprep.mubr.f32.mxu0 0.0
      %4525 = vmatmul.mubr.f32.gmra.mrb[0].mxu0 %v4403
      %v4526 = vpop.f32.mrb[0].mxu0
      %v4527 = vadd.f32 0.0, %v4526
      %v4528 = vpop.f32.mrb[0].mxu0
      %4529 = vmatprep.mubr.f32.mxu0 0.0
      %4530 = vmatmul.mubr.f32.gmra.mrb[0].mxu0 %v4406
      %v4531 = vpop.f32.mrb[0].mxu0
      %v4532 = vadd.f32 0.0, %v4531
      %v4533 = vpop.f32.mrb[0].mxu0
      %4534 = vmatprep.mubr.f32.mxu0 0.0
      %4535 = vmatmul.mubr.f32.gmra.mrb[0].mxu0 %v4409
      %v4536 = vpop.f32.mrb[0].mxu0
      %v4537 = vadd.f32 0.0, %v4536
      %v4538 = vpop.f32.mrb[0].mxu0
      %4539 = vmatprep.mubr.f32.mxu0 0.0
      %4540 = vmatmul.mubr.f32.gmra.mrb[0].mxu0 %v4412
      %v4541 = vpop.f32.mrb[0].mxu0
      %v4542 = vadd.f32 0.0, %v4541
      %v4543 = vpop.f32.mrb[0].mxu0
      %4544 = vmatprep.mubr.f32.mxu0 0.0
      %4545 = vmatmul.mubr.f32.gmra.mrb[0].mxu0 %v4415
      %v4546 = vpop.f32.mrb[0].mxu0
      %v4547 = vadd.f32 0.0, %v4546
      %v4548 = vpop.f32.mrb[0].mxu0
      %4549 = vmatprep.mubr.f32.mxu0 0.0
      %4550 = vmatmul.mubr.f32.gmra.mrb[0].mxu0 %v4418
      %v4551 = vpop.f32.mrb[0].mxu0
      %v4552 = vadd.f32 0.0, %v4551
      %v4553 = vpop.f32.mrb[0].mxu0
      %4554 = vdwg.mxu0
      %v4555 = vsel %vm373, %v3956, 0.0
      %v4556 = vsel %vm373, %v4133, 0.0
      %v4557 = vadd.f32 %v4555, %v4556
      %v4558 = vsel %vm373, %v4310, 0.0
      %v4559 = vadd.f32 %v4557, %v4558
      %v4560 = vsel %vm373, %v4487, 0.0
      %v4561 = vadd.f32 %v4559, %v4560
      %v4562 = vsel %vm373, %v3961, 0.0
      %v4563 = vsel %vm373, %v4138, 0.0
      %v4564 = vadd.f32 %v4562, %v4563
      %v4565 = vsel %vm373, %v4315, 0.0
      %v4566 = vadd.f32 %v4564, %v4565
      %v4567 = vsel %vm373, %v4492, 0.0
      %v4568 = vadd.f32 %v4566, %v4567
      %v4569 = vsel %vm373, %v3966, 0.0
      %v4570 = vsel %vm373, %v4143, 0.0
      %v4571 = vadd.f32 %v4569, %v4570
      %v4572 = vsel %vm373, %v4320, 0.0
      %v4573 = vadd.f32 %v4571, %v4572
      %v4574 = vsel %vm373, %v4497, 0.0
      %v4575 = vadd.f32 %v4573, %v4574
      %v4576 = vsel %vm373, %v3971, 0.0
      %v4577 = vsel %vm373, %v4148, 0.0
      %v4578 = vadd.f32 %v4576, %v4577
      %v4579 = vsel %vm373, %v4325, 0.0
      %v4580 = vadd.f32 %v4578, %v4579
      %v4581 = vsel %vm373, %v4502, 0.0
      %v4582 = vadd.f32 %v4580, %v4581
      %v4583 = vsel %vm373, %v3976, 0.0
      %v4584 = vsel %vm373, %v4153, 0.0
      %v4585 = vadd.f32 %v4583, %v4584
      %v4586 = vsel %vm373, %v4330, 0.0
      %v4587 = vadd.f32 %v4585, %v4586
      %v4588 = vsel %vm373, %v4507, 0.0
      %v4589 = vadd.f32 %v4587, %v4588
      %v4590 = vsel %vm373, %v3981, 0.0
      %v4591 = vsel %vm373, %v4158, 0.0
      %v4592 = vadd.f32 %v4590, %v4591
      %v4593 = vsel %vm373, %v4335, 0.0
      %v4594 = vadd.f32 %v4592, %v4593
      %v4595 = vsel %vm373, %v4512, 0.0
      %v4596 = vadd.f32 %v4594, %v4595
      %v4597 = vsel %vm373, %v3986, 0.0
      %v4598 = vsel %vm373, %v4163, 0.0
      %v4599 = vadd.f32 %v4597, %v4598
      %v4600 = vsel %vm373, %v4340, 0.0
      %v4601 = vadd.f32 %v4599, %v4600
      %v4602 = vsel %vm373, %v4517, 0.0
      %v4603 = vadd.f32 %v4601, %v4602
      %v4604 = vsel %vm373, %v3991, 0.0
      %v4605 = vsel %vm373, %v4168, 0.0
      %v4606 = vadd.f32 %v4604, %v4605
      %v4607 = vsel %vm373, %v4345, 0.0
      %v4608 = vadd.f32 %v4606, %v4607
      %v4609 = vsel %vm373, %v4522, 0.0
      %v4610 = vadd.f32 %v4608, %v4609
      %v4611 = vsel %vm373, %v3996, 0.0
      %v4612 = vsel %vm373, %v4173, 0.0
      %v4613 = vadd.f32 %v4611, %v4612
      %v4614 = vsel %vm373, %v4350, 0.0
      %v4615 = vadd.f32 %v4613, %v4614
      %v4616 = vsel %vm373, %v4527, 0.0
      %v4617 = vadd.f32 %v4615, %v4616
      %v4618 = vsel %vm373, %v4001, 0.0
      %v4619 = vsel %vm373, %v4178, 0.0
      %v4620 = vadd.f32 %v4618, %v4619
      %v4621 = vsel %vm373, %v4355, 0.0
      %v4622 = vadd.f32 %v4620, %v4621
      %v4623 = vsel %vm373, %v4532, 0.0
      %v4624 = vadd.f32 %v4622, %v4623
      %v4625 = vsel %vm373, %v4006, 0.0
      %v4626 = vsel %vm373, %v4183, 0.0
      %v4627 = vadd.f32 %v4625, %v4626
      %v4628 = vsel %vm373, %v4360, 0.0
      %v4629 = vadd.f32 %v4627, %v4628
      %v4630 = vsel %vm373, %v4537, 0.0
      %v4631 = vadd.f32 %v4629, %v4630
      %v4632 = vsel %vm373, %v4011, 0.0
      %v4633 = vsel %vm373, %v4188, 0.0
      %v4634 = vadd.f32 %v4632, %v4633
      %v4635 = vsel %vm373, %v4365, 0.0
      %v4636 = vadd.f32 %v4634, %v4635
      %v4637 = vsel %vm373, %v4542, 0.0
      %v4638 = vadd.f32 %v4636, %v4637
      %v4639 = vsel %vm373, %v4016, 0.0
      %v4640 = vsel %vm373, %v4193, 0.0
      %v4641 = vadd.f32 %v4639, %v4640
      %v4642 = vsel %vm373, %v4370, 0.0
      %v4643 = vadd.f32 %v4641, %v4642
      %v4644 = vsel %vm373, %v4547, 0.0
      %v4645 = vadd.f32 %v4643, %v4644
      %v4646 = vsel %vm373, %v4021, 0.0
      %v4647 = vsel %vm373, %v4198, 0.0
      %v4648 = vadd.f32 %v4646, %v4647
      %v4649 = vsel %vm373, %v4375, 0.0
      %v4650 = vadd.f32 %v4648, %v4649
      %v4651 = vsel %vm373, %v4552, 0.0
      %v4652 = vadd.f32 %v4650, %v4651
      %v4653 = vld [vmem:[%s6] sm:$0x1]
      %v4655 = vlaneseq
      %v4656 = vshrl.u32 %v4655, 7
      %v4657 = vsub.s32 0, %v4656
      %v4658 = vrot.slane %v4653, %v4657
      %v4660 = vadd.f32 %v4561, %v4658
      %v4661 = vadd.f32 %v4568, %v4658
      %v4662 = vadd.f32 %v4575, %v4658
      %v4663 = vadd.f32 %v4582, %v4658
      %v4664 = vadd.f32 %v4589, %v4658
      %v4665 = vadd.f32 %v4596, %v4658
      %v4666 = vadd.f32 %v4603, %v4658
      %v4667 = vadd.f32 %v4610, %v4658
      %v4668 = vadd.f32 %v4617, %v4658
      %v4669 = vadd.f32 %v4624, %v4658
      %v4670 = vadd.f32 %v4631, %v4658
      %v4671 = vadd.f32 %v4638, %v4658
      %v4672 = vadd.f32 %v4645, %v4658
      %v4673 = vadd.f32 %v4652, %v4658
      %4674 = vst.msk [vmem:[%s346] sm:$0xff] %vm373, %v4660
      %4675 = vst.msk [vmem:[%s346 + $0x8] sm:$0xff] %vm373, %v4661
      %4676 = vst.msk [vmem:[%s346 + $0x10] sm:$0xff] %vm373, %v4662
      %4677 = vst.msk [vmem:[%s346 + $0x18] sm:$0xff] %vm373, %v4663
      %4678 = vst.msk [vmem:[%s346 + $0x20] sm:$0xff] %vm373, %v4664
      %4679 = vst.msk [vmem:[%s346 + $0x28] sm:$0xff] %vm373, %v4665
      %4680 = vst.msk [vmem:[%s346 + $0x30] sm:$0xff] %vm373, %v4666
      %4681 = vst.msk [vmem:[%s346 + $0x38] sm:$0xff] %vm373, %v4667
      %4682 = vst.msk [vmem:[%s346 + $0x40] sm:$0xff] %vm373, %v4668
      %4683 = vst.msk [vmem:[%s346 + $0x48] sm:$0xff] %vm373, %v4669
      %4684 = vst.msk [vmem:[%s346 + $0x50] sm:$0xff] %vm373, %v4670
      %4685 = vst.msk [vmem:[%s346 + $0x58] sm:$0xff] %vm373, %v4671
      %4686 = vst.msk [vmem:[%s346 + $0x60] sm:$0xff] %vm373, %v4672
      %4687 = vst.msk [vmem:[%s346 + $0x68] sm:$0xff] %vm373, %v4673
      %s4688 = smul.u32 2, %s23
      %p4689 = scmp.lt.s32.totalorder %s22, 1
      %s4690 = scalar_select %p4689, %s22, 1
      %p4691 = scmp.lt.s32.totalorder %s4688, 3
      %s4692 = scalar_select %p4691, %s4688, 3
      %s4693 = smul.addr %s4692, 7
      %s4694 = smul.addr %s4690, 28
      %s4695 = sadd.s32 %s4693, %s4694
      %s4696 = smul.addr %s4695, 8
      %s4697 = scalar_lea.vmem %s7, %s4696
      // Predicated region
      $region49: #{tpu_custom_call.1} parent=47 // pred_check
        %p4698 = pneg %p209
      $region50: #{tpu_custom_call.1} parent=47 // pred_check_branch
        %4700 = sbr.rel (%p4698) target = $region52
      $region51: #{tpu_custom_call.1} parent=47 // pred_region
        %s4701 = smul.u32 2, %s23
      $region52: #{tpu_custom_call.1} parent=47 // pred_fallthru
        _
    $region48: #{tpu_custom_call.1} parent=5 // pred_fallthru
      _
    %p4702 = scmp.le.s32.totalorder 2, %s13
    // Predicated region
    $region53: #{tpu_custom_call.1} parent=5 // pred_check
      %p4703 = pneg %p4702
    $region54: #{tpu_custom_call.1} parent=5 // pred_check_branch
      %4705 = sbr.rel (%p4703) target = $region56
    $region55: #{tpu_custom_call.1} parent=5 // pred_region
      %s4706 = ssub.s32 %s13, 2
      // Predicated region
      $region57: #{tpu_custom_call.1} parent=55 // pred_check
        %p4707 = pneg %p215
      $region58: #{tpu_custom_call.1} parent=55 // pred_check_branch
        %4709 = sbr.rel (%p4707) target = $region60
      $region59: #{tpu_custom_call.1} parent=55 // pred_region
        %s4710 = smul.u32 2, %s25
        %p4711 = scmp.lt.s32.totalorder %s24, 1
        %s4712 = scalar_select %p4711, %s24, 1
        %p4713 = scmp.lt.s32.totalorder %s4710, 3
        %s4714 = scalar_select %p4713, %s4710, 3
        %s4715 = smul.addr %s4714, 7
        %s4716 = smul.addr %s4712, 28
        %s4717 = sadd.s32 %s4715, %s4716
        %s4718 = smul.addr %s4717, 8
        %s4719 = scalar_lea.vmem %s7, %s4718
      $region60: #{tpu_custom_call.1} parent=55 // pred_fallthru
        _
    $region56: #{tpu_custom_call.1} parent=5 // pred_fallthru
      _
  $region6: #{tpu_custom_call.1} parent=0 // loop_footer
    %s17 = sadd.s32 1, %s13
  $region7: #{tpu_custom_call.1} parent=0 // loop_footer_branch
    %12 = sbr.rel target = $region3
  $region8: #{tpu_custom_call.1} parent=0 // loop_exit
    _

</llo_original>
